<compile_context>
chip_gen: v7x
topology: tpu7x:2x2x1
jax: 0.10.0
libtpu: 0.0.40
codegen_flags: <defaults>
</compile_context>

<pallas_src>
import functools
import math

import jax
import jax.numpy as jnp
from jax.experimental import pallas as pl
from jax.experimental.pallas import tpu as pltpu

LN_EPS = 1e-7  # matches nn.LayerNorm(d_model, eps=1e-07)


def _layer_norm(x, gamma, beta):
    mean = jnp.mean(x, axis=-1, keepdims=True)
    var = jnp.mean(jnp.square(x - mean), axis=-1, keepdims=True)
    return (x - mean) * jax.lax.rsqrt(var + LN_EPS) * gamma + beta


def _transformer_kernel(x_ref,
                        ln1_w_ref, ln1_b_ref, w_qkv_ref, b_qkv_ref,
                        w_o_ref, b_o_ref, ln2_w_ref, ln2_b_ref,
                        w_fc_ref, b_fc_ref, w_proj_ref, b_proj_ref,
                        o_ref, x_acc,
                        *, n_head, mlp_chunk, weights_resident):
    layer = pl.program_id(1)
    n_layers = pl.num_programs(1)
    # Layer-stacked weights are either fully VMEM-resident (index by `layer`)
    # or streamed one layer per grid step (leading block dim of 1 -> index 0).
    li = layer if weights_resident else 0

    # Running activation lives in VMEM scratch across the layer grid axis.
    @pl.when(layer == 0)
    def _():
        x_acc[...] = x_ref[...].astype(jnp.float32)

    x = x_acc[...]                                   # (B, L, E) f32
    B, L, E = x.shape
    d_head = E // n_head
    scale = 1.0 / math.sqrt(d_head)

    # --- attention branch: x + W_o(softmax(Q K^T / sqrt(d)) V) ---
    ln1 = _layer_norm(x, ln1_w_ref[li], ln1_b_ref[li])
    # Fused QKV projection: (B*L, E) x (E, 3E), bf16 operands, f32 accumulate.
    qkv = jnp.dot(ln1.reshape(B * L, E).astype(jnp.bfloat16), w_qkv_ref[li],
                  preferred_element_type=jnp.float32) + b_qkv_ref[li]
    # Single bf16 cast of the whole (B, L, 3E) slab before any head slicing.
    qkv = qkv.reshape(B, L, 3 * E).astype(jnp.bfloat16)

    # Per-head attention core; the output projection is folded per head into a
    # lane-dense (B*L, E) f32 accumulator (no ctx scratch, no narrow stores).
    attn = None
    for h in range(n_head):
        lo = h * d_head
        qh = qkv[:, :, lo:lo + d_head]                       # (B, L, Dh) bf16
        kh = qkv[:, :, E + lo:E + lo + d_head]
        vh = qkv[:, :, 2 * E + lo:2 * E + lo + d_head]
        s = jnp.einsum('bld,bmd->blm', qh, kh,
                       preferred_element_type=jnp.float32) * scale
        s = s - jnp.max(s, axis=-1, keepdims=True)
        p = jnp.exp(s)
        p = p * pl.reciprocal(jnp.sum(p, axis=-1, keepdims=True), approx=True)
        ctx_h = jnp.einsum('blm,bmd->bld', p.astype(jnp.bfloat16), vh,
                           preferred_element_type=jnp.float32)
        part = jnp.dot(ctx_h.reshape(B * L, d_head).astype(jnp.bfloat16),
                       w_o_ref[li, h], preferred_element_type=jnp.float32)
        attn = part if attn is None else attn + part
    attn = attn + b_o_ref[li]
    x = x + attn.reshape(B, L, E)

    # --- MLP branch: x + c_proj(QuickGELU(c_fc(LN2(x)))) ---
    ln2 = _layer_norm(x, ln2_w_ref[li], ln2_b_ref[li])
    y2d = ln2.reshape(B * L, E).astype(jnp.bfloat16)
    hidden = w_fc_ref.shape[-1]                      # 4E (static)
    mlp = None
    for c0 in range(0, hidden, mlp_chunk):           # chunk the 4E hidden dim
        c1 = min(c0 + mlp_chunk, hidden)
        hfc = jnp.dot(y2d, w_fc_ref[li, :, c0:c1],
                      preferred_element_type=jnp.float32) + b_fc_ref[li, :, c0:c1]
        hact = hfc * jax.nn.sigmoid(1.702 * hfc)     # QuickGELU, f32 elementwise
        part = jnp.dot(hact.astype(jnp.bfloat16), w_proj_ref[li, c0:c1, :],
                       preferred_element_type=jnp.float32)
        mlp = part if mlp is None else mlp + part
    mlp = mlp + b_proj_ref[li]
    x = x + mlp.reshape(B, L, E)

    x_acc[...] = x

    @pl.when(layer == n_layers - 1)
    def _():
        o_ref[...] = x.astype(o_ref.dtype)


PARAM_ORDER = ('ln1_w', 'ln1_b', 'w_qkv', 'b_qkv', 'w_o', 'b_o',
               'ln2_w', 'ln2_b', 'w_fc', 'b_fc', 'w_proj', 'b_proj')


def _pick_b_tile(n_batch, seq_len):
    """Batch tile so M = b_tile*L is MXU-friendly (~512 rows target), with
    >=2 batch tiles when batch allows (v7x megacore shards the parallel axis)."""
    target_rows = 512
    b = max(1, min(n_batch, target_rows // max(seq_len, 1)))
    while n_batch % b:
        b -= 1
    if n_batch // b < 2 and n_batch >= 2:
        b = max(1, n_batch // 2)
        while n_batch % b:
            b -= 1
    return b


def transformer_forward(x_lne, params, n_head, *, b_tile=None,
                        weights_resident=None):
    """x_lne: (seq_len, batch, width), like the PyTorch module.

    params: dict of layer-stacked arrays (leading dim = n_layers), see
    init_params. All residual blocks run inside a single pallas_call with
    grid = (batch_tiles, layers).
    """
    L, N, E = x_lne.shape
    n_layers = params['w_qkv'].shape[0]
    assert E % n_head == 0, "width must be divisible by heads"
    d_head = E // n_head

    if b_tile is None:
        b_tile = _pick_b_tile(N, L)
    assert N % b_tile == 0, "batch must be divisible by b_tile"

    # Kernel-layout params: W_o pre-split per head -> (layers, H, Dh, E) so the
    # per-head output projection is a lane-dense (Dh, E) matmul block.
    prepped = dict(params)
    prepped['w_o'] = params['w_o'].reshape(n_layers, n_head, d_head, E)
    flat = [prepped[k] for k in PARAM_ORDER]

    per_layer_w_bytes = sum(math.prod(a.shape[1:]) * a.dtype.itemsize
                            for a in flat)
    total_w_bytes = per_layer_w_bytes * n_layers
    if weights_resident is None:
        # Keep ALL layers' weights VMEM-resident when small (removes
        # layers x batch_tiles redundant weight DMA); otherwise stream by layer.
        weights_resident = 2 * total_w_bytes <= (16 << 20)

    def wspec(a):
        nd = a.ndim
        if weights_resident:
            # Constant block index -> fetched once, never re-DMA'd.
            return pl.BlockSpec(a.shape, lambda b, l, _nd=nd: (0,) * _nd)
        # One layer slab per grid step (double-buffered prefetch overlaps the
        # previous layer's compute).
        return pl.BlockSpec((1,) + a.shape[1:],
                            lambda b, l, _nd=nd: (l,) + (0,) * (_nd - 1))

    mlp_chunk = min(4 * E, 512)

    # Explicit VMEM budget (scoped defaults of 16/32 MiB are far below need for
    # realistic widths); capped at ~7/8 of physical (v7x-safe fallback 64 MiB).
    act_tile = b_tile * L * E * 4
    w_vmem = 2 * (total_w_bytes if weights_resident else per_layer_w_bytes)
    live = b_tile * L * (3 * E + mlp_chunk + 3 * E) * 4
    est = 4 * act_tile + act_tile + w_vmem + live
    try:
        phys = pltpu.get_tpu_info().vmem_capacity_bytes
    except Exception:
        phys = 64 << 20
    cap = max((phys * 7) // 8, 16 << 20)
    vmem_limit = int(min(max(int(est * 1.5) + (8 << 20), 32 << 20), cap))

    # TODO(synk): keep batch as the 2nd-minor dim to avoid these HBM transposes
    # (needs batch-nonleading batched matmuls in the kernel).
    x = jnp.transpose(x_lne, (1, 0, 2)).astype(jnp.float32)   # (N, L, E)

    out = pl.pallas_call(
        functools.partial(_transformer_kernel, n_head=n_head,
                          mlp_chunk=mlp_chunk,
                          weights_resident=weights_resident),
        out_shape=jax.ShapeDtypeStruct((N, L, E), jnp.float32),
        grid_spec=pltpu.PrefetchScalarGridSpec(
            num_scalar_prefetch=0,
            grid=(N // b_tile, n_layers),
            in_specs=[pl.BlockSpec((b_tile, L, E), lambda b, l: (b, 0, 0))]
                     + [wspec(a) for a in flat],
            out_specs=pl.BlockSpec((b_tile, L, E), lambda b, l: (b, 0, 0)),
            scratch_shapes=[pltpu.VMEM((b_tile, L, E), jnp.float32)],  # residual
        ),
        compiler_params=pltpu.CompilerParams(
            dimension_semantics=("parallel", "arbitrary"),
            vmem_limit_bytes=vmem_limit),
    )(x, *flat)
    return jnp.transpose(out, (1, 0, 2))


def init_params(key, width, layers, heads):
    """Deterministic synthetic weights, layer-stacked, fused QKV, bf16 matmul
    weights (halves HBM->VMEM DMA), f32 biases / LN params."""
    E = width
    assert E % heads == 0
    keys = jax.random.split(key, 8)
    nrm = lambda k, shp, s=0.05: s * jax.random.normal(k, shp, jnp.float32)
    return dict(
        ln1_w=jnp.ones((layers, 1, E), jnp.float32),
        ln1_b=jnp.zeros((layers, 1, E), jnp.float32),
        w_qkv=nrm(keys[0], (layers, E, 3 * E)).astype(jnp.bfloat16),
        b_qkv=nrm(keys[1], (layers, 1, 3 * E), 0.01),
        w_o=nrm(keys[2], (layers, E, E)).astype(jnp.bfloat16),
        b_o=nrm(keys[3], (layers, 1, E), 0.01),
        ln2_w=jnp.ones((layers, 1, E), jnp.float32),
        ln2_b=jnp.zeros((layers, 1, E), jnp.float32),
        w_fc=nrm(keys[4], (layers, E, 4 * E)).astype(jnp.bfloat16),
        b_fc=nrm(keys[5], (layers, 1, 4 * E), 0.01),
        w_proj=nrm(keys[6], (layers, 4 * E, E)).astype(jnp.bfloat16),
        b_proj=nrm(keys[7], (layers, 1, E), 0.01),
    )


def ref_forward(x_lne, params, n_head):
    """Pure-JAX f32 reference with the PyTorch module's semantics."""
    x = jnp.transpose(x_lne, (1, 0, 2)).astype(jnp.float32)
    n_layers, E, _ = params['w_qkv'].shape
    d_head = E // n_head
    scale = 1.0 / math.sqrt(d_head)
    N, L, _ = x.shape
    for l in range(n_layers):
        ln1 = _layer_norm(x, params['ln1_w'][l], params['ln1_b'][l])
        qkv = jnp.einsum('nle,ef->nlf', ln1,
                         params['w_qkv'][l].astype(jnp.float32)) + params['b_qkv'][l]
        q = qkv[..., 0 * E:1 * E].reshape(N, L, n_head, d_head)
        k = qkv[..., 1 * E:2 * E].reshape(N, L, n_head, d_head)
        v = qkv[..., 2 * E:3 * E].reshape(N, L, n_head, d_head)
        s = jnp.einsum('nlhd,nmhd->nhlm', q, k) * scale
        a = jax.nn.softmax(s, axis=-1)
        ctx = jnp.einsum('nhlm,nmhd->nlhd', a, v).reshape(N, L, E)
        x = x + jnp.einsum('nle,ef->nlf', ctx,
                           params['w_o'][l].astype(jnp.float32)) + params['b_o'][l]
        ln2 = _layer_norm(x, params['ln2_w'][l], params['ln2_b'][l])
        hfc = jnp.einsum('nle,ef->nlf', ln2,
                         params['w_fc'][l].astype(jnp.float32)) + params['b_fc'][l]
        hact = hfc * jax.nn.sigmoid(1.702 * hfc)
        x = x + jnp.einsum('nlf,fe->nle', hact,
                           params['w_proj'][l].astype(jnp.float32)) + params['b_proj'][l]
    return jnp.transpose(x, (1, 0, 2))


if __name__ == "__main__":
    # Small shapes, but lane-dense: width is a multiple of 128.
    width, layers, heads = 128, 2, 4
    seq_len, batch = 8, 4

    key = jax.random.PRNGKey(0)
    pkey, xkey = jax.random.split(key)
    params = init_params(pkey, width, layers, heads)
    x = jax.random.normal(xkey, (seq_len, batch, width), jnp.float32)

    out = transformer_forward(x, params, heads)       # b_tile auto-picked (=2)
    out = jax.block_until_ready(out)

    ref = ref_forward(x, params, heads)
    assert out.shape == (seq_len, batch, width)
    # bf16 MXU operands (f32 accumulation) vs f32 reference -> loose-ish tol.
    ok = bool(jnp.allclose(out, ref, rtol=2e-2, atol=2e-2))
    if ok:
        print("KERNEL_OK")
    else:
        print(f"MAX_ABS_ERR={float(jnp.max(jnp.abs(out - ref)))}")
</pallas_src>

<mosaic_0001>
module attributes {stable_mosaic.version = 11 : i64} {
  func.func @_transformer_kernel(%arg0: i32, %arg1: i32, %arg2: memref<2x8x128xf32, #tpu.memory_space<vmem>>, %arg3: memref<2x1x128xf32, #tpu.memory_space<vmem>>, %arg4: memref<2x1x128xf32, #tpu.memory_space<vmem>>, %arg5: memref<2x128x384xbf16, #tpu.memory_space<vmem>>, %arg6: memref<2x1x384xf32, #tpu.memory_space<vmem>>, %arg7: memref<2x4x32x128xbf16, #tpu.memory_space<vmem>>, %arg8: memref<2x1x128xf32, #tpu.memory_space<vmem>>, %arg9: memref<2x1x128xf32, #tpu.memory_space<vmem>>, %arg10: memref<2x1x128xf32, #tpu.memory_space<vmem>>, %arg11: memref<2x128x512xbf16, #tpu.memory_space<vmem>>, %arg12: memref<2x1x512xf32, #tpu.memory_space<vmem>>, %arg13: memref<2x512x128xbf16, #tpu.memory_space<vmem>>, %arg14: memref<2x1x128xf32, #tpu.memory_space<vmem>>, %arg15: memref<2x8x128xf32, #tpu.memory_space<vmem>>, %arg16: memref<2x8x128xf32, #tpu.memory_space<vmem>>) attributes {dimension_semantics = [#tpu.dimension_semantics<parallel>, #tpu.dimension_semantics<arbitrary>], iteration_bounds = array<i64: 2, 2>, scalar_prefetch = 0 : i64, scratch_operands = 1 : i64, tpu.core_type = #tpu.core_type<tc>, window_params = [{transform_indices = @transform_0, window_bounds = array<i64: 2, 8, 128>}, {pipeline_mode = #tpu.pipeline_mode<synchronous>, transform_indices = @transform_1, window_bounds = array<i64: 2, 1, 128>}, {pipeline_mode = #tpu.pipeline_mode<synchronous>, transform_indices = @transform_2, window_bounds = array<i64: 2, 1, 128>}, {pipeline_mode = #tpu.pipeline_mode<synchronous>, transform_indices = @transform_3, window_bounds = array<i64: 2, 128, 384>}, {pipeline_mode = #tpu.pipeline_mode<synchronous>, transform_indices = @transform_4, window_bounds = array<i64: 2, 1, 384>}, {pipeline_mode = #tpu.pipeline_mode<synchronous>, transform_indices = @transform_5, window_bounds = array<i64: 2, 4, 32, 128>}, {pipeline_mode = #tpu.pipeline_mode<synchronous>, transform_indices = @transform_6, window_bounds = array<i64: 2, 1, 128>}, {pipeline_mode = #tpu.pipeline_mode<synchronous>, transform_indices = @transform_7, window_bounds = array<i64: 2, 1, 128>}, {pipeline_mode = #tpu.pipeline_mode<synchronous>, transform_indices = @transform_8, window_bounds = array<i64: 2, 1, 128>}, {pipeline_mode = #tpu.pipeline_mode<synchronous>, transform_indices = @transform_9, window_bounds = array<i64: 2, 128, 512>}, {pipeline_mode = #tpu.pipeline_mode<synchronous>, transform_indices = @transform_10, window_bounds = array<i64: 2, 1, 512>}, {pipeline_mode = #tpu.pipeline_mode<synchronous>, transform_indices = @transform_11, window_bounds = array<i64: 2, 512, 128>}, {pipeline_mode = #tpu.pipeline_mode<synchronous>, transform_indices = @transform_12, window_bounds = array<i64: 2, 1, 128>}, {transform_indices = @transform_13, window_bounds = array<i64: 2, 8, 128>}]} {
    %c0_i32 = arith.constant 0 : i32
    %0 = arith.cmpi eq, %arg1, %c0_i32 : i32
    %1 = arith.extui %0 : i1 to i32
    %c0_i32_0 = arith.constant 0 : i32
    %2 = arith.cmpi ne, %1, %c0_i32_0 : i32
    scf.if %2 {
      %c0_76 = arith.constant 0 : index
      %c0_77 = arith.constant 0 : index
      %c0_78 = arith.constant 0 : index
      %218 = vector.load %arg2[%c0_76, %c0_77, %c0_78] : memref<2x8x128xf32, #tpu.memory_space<vmem>>, vector<2x8x128xf32>
      %c0_79 = arith.constant 0 : index
      %c0_80 = arith.constant 0 : index
      %c0_81 = arith.constant 0 : index
      %219 = vector.load %arg16[%c0_79, %c0_80, %c0_81] : memref<2x8x128xf32, #tpu.memory_space<vmem>>, vector<2x8x128xf32>
      tpu.vector_store %arg16[%c0_79, %c0_80, %c0_81], %218 {strides = array<i32>} : memref<2x8x128xf32, #tpu.memory_space<vmem>>, vector<2x8x128xf32>,
    } else {
    }
    %c0 = arith.constant 0 : index
    %c0_1 = arith.constant 0 : index
    %c0_2 = arith.constant 0 : index
    %3 = vector.load %arg16[%c0, %c0_1, %c0_2] : memref<2x8x128xf32, #tpu.memory_space<vmem>>, vector<2x8x128xf32>
    %4 = arith.index_cast %arg1 : i32 to index
    %c0_3 = arith.constant 0 : index
    %c0_4 = arith.constant 0 : index
    %5 = vector.load %arg3[%4, %c0_3, %c0_4] : memref<2x1x128xf32, #tpu.memory_space<vmem>>, vector<1x1x128xf32>
    %6 = vector.shape_cast %5 : vector<1x1x128xf32> to vector<1x128xf32>
    %7 = arith.index_cast %arg1 : i32 to index
    %c0_5 = arith.constant 0 : index
    %c0_6 = arith.constant 0 : index
    %8 = vector.load %arg4[%7, %c0_5, %c0_6] : memref<2x1x128xf32, #tpu.memory_space<vmem>>, vector<1x1x128xf32>
    %9 = vector.shape_cast %8 : vector<1x1x128xf32> to vector<1x128xf32>
    %cst = arith.constant dense<0.000000e+00> : vector<2x8xf32>
    %10 = vector.multi_reduction <add>, %3, %cst [2] : vector<2x8x128xf32> to vector<2x8xf32>
    %11 = vector.shape_cast %10 : vector<2x8xf32> to vector<2x8x1xf32>
    %cst_7 = arith.constant 1.280000e+02 : f32
    %12 = vector.broadcast %cst_7 : f32 to vector<2x8x1xf32>
    %13 = arith.divf %11, %12 : vector<2x8x1xf32>
    %14 = vector.broadcast %13 : vector<2x8x1xf32> to vector<2x8x128xf32>
    %15 = arith.subf %3, %14 : vector<2x8x128xf32>
    %16 = arith.mulf %15, %15 : vector<2x8x128xf32>
    %cst_8 = arith.constant dense<0.000000e+00> : vector<2x8xf32>
    %17 = vector.multi_reduction <add>, %16, %cst_8 [2] : vector<2x8x128xf32> to vector<2x8xf32>
    %18 = vector.shape_cast %17 : vector<2x8xf32> to vector<2x8x1xf32>
    %cst_9 = arith.constant 1.280000e+02 : f32
    %19 = vector.broadcast %cst_9 : f32 to vector<2x8x1xf32>
    %20 = arith.divf %18, %19 : vector<2x8x1xf32>
    %21 = vector.broadcast %13 : vector<2x8x1xf32> to vector<2x8x128xf32>
    %22 = arith.subf %3, %21 : vector<2x8x128xf32>
    %cst_10 = arith.constant 1.000000e-07 : f32
    %23 = vector.broadcast %cst_10 : f32 to vector<2x8x1xf32>
    %24 = arith.addf %20, %23 : vector<2x8x1xf32>
    %25 = math.rsqrt %24 : vector<2x8x1xf32>
    %26 = vector.broadcast %25 : vector<2x8x1xf32> to vector<2x8x128xf32>
    %27 = arith.mulf %22, %26 : vector<2x8x128xf32>
    %28 = vector.shape_cast %6 : vector<1x128xf32> to vector<1x1x128xf32>
    %29 = vector.broadcast %28 : vector<1x1x128xf32> to vector<2x8x128xf32>
    %30 = arith.mulf %27, %29 : vector<2x8x128xf32>
    %31 = vector.shape_cast %9 : vector<1x128xf32> to vector<1x1x128xf32>
    %32 = vector.broadcast %31 : vector<1x1x128xf32> to vector<2x8x128xf32>
    %33 = arith.addf %30, %32 : vector<2x8x128xf32>
    %34 = vector.shape_cast %33 : vector<2x8x128xf32> to vector<16x128xf32>
    %35 = arith.truncf %34 : vector<16x128xf32> to vector<16x128xbf16>
    %36 = arith.index_cast %arg1 : i32 to index
    %c0_11 = arith.constant 0 : index
    %c0_12 = arith.constant 0 : index
    %37 = vector.load %arg5[%36, %c0_11, %c0_12] : memref<2x128x384xbf16, #tpu.memory_space<vmem>>, vector<1x128x384xbf16>
    %38 = vector.shape_cast %37 : vector<1x128x384xbf16> to vector<128x384xbf16>
    %cst_13 = arith.constant dense<0.000000e+00> : vector<16x384xf32>
    %39 = tpu.matmul %35, %38, %cst_13 {dimension_numbers = #tpu.dot_dimension_numbers<[1], [0], [0], [1], [0, 0, 1, 1], [], []>} : vector<16x128xbf16>, vector<128x384xbf16>, vector<16x384xf32> -> vector<16x384xf32>
    %40 = arith.index_cast %arg1 : i32 to index
    %c0_14 = arith.constant 0 : index
    %c0_15 = arith.constant 0 : index
    %41 = vector.load %arg6[%40, %c0_14, %c0_15] : memref<2x1x384xf32, #tpu.memory_space<vmem>>, vector<1x1x384xf32>
    %42 = vector.shape_cast %41 : vector<1x1x384xf32> to vector<1x384xf32>
    %43 = vector.broadcast %42 : vector<1x384xf32> to vector<16x384xf32>
    %44 = arith.addf %39, %43 : vector<16x384xf32>
    %45 = vector.shape_cast %44 : vector<16x384xf32> to vector<2x8x384xf32>
    %46 = arith.truncf %45 : vector<2x8x384xf32> to vector<2x8x384xbf16>
    %47 = vector.extract_strided_slice %46 {offsets = [0, 0, 0], sizes = [2, 8, 32], strides = [1, 1, 1]} : vector<2x8x384xbf16> to vector<2x8x32xbf16>
    %48 = vector.extract_strided_slice %46 {offsets = [0, 0, 128], sizes = [2, 8, 32], strides = [1, 1, 1]} : vector<2x8x384xbf16> to vector<2x8x32xbf16>
    %49 = vector.extract_strided_slice %46 {offsets = [0, 0, 256], sizes = [2, 8, 32], strides = [1, 1, 1]} : vector<2x8x384xbf16> to vector<2x8x32xbf16>
    "tpu.trace_start"() <{level = 10 : i32, message = "bld,bmd->blm"}> : () -> ()
    %cst_16 = arith.constant dense<0.000000e+00> : vector<2x8x8xf32>
    %50 = tpu.matmul %47, %48, %cst_16 {dimension_numbers = #tpu.dot_dimension_numbers<[2], [2], [1], [1], [0, 0, 0, 1, 1, 1], [0], [0]>} : vector<2x8x32xbf16>, vector<2x8x32xbf16>, vector<2x8x8xf32> -> vector<2x8x8xf32>
    "tpu.trace_stop"() : () -> ()
    %cst_17 = arith.constant 0.176776692 : f32
    %51 = vector.broadcast %cst_17 : f32 to vector<2x8x8xf32>
    %52 = arith.mulf %50, %51 : vector<2x8x8xf32>
    %cst_18 = arith.constant dense<0xFF800000> : vector<2x8xf32>
    %53 = vector.multi_reduction <maximumf>, %52, %cst_18 [2] : vector<2x8x8xf32> to vector<2x8xf32>
    %54 = vector.shape_cast %53 : vector<2x8xf32> to vector<2x8x1xf32>
    %55 = vector.broadcast %54 : vector<2x8x1xf32> to vector<2x8x8xf32>
    %56 = arith.subf %52, %55 : vector<2x8x8xf32>
    %57 = math.exp %56 : vector<2x8x8xf32>
    %cst_19 = arith.constant dense<0.000000e+00> : vector<2x8xf32>
    %58 = vector.multi_reduction <add>, %57, %cst_19 [2] : vector<2x8x8xf32> to vector<2x8xf32>
    %59 = vector.shape_cast %58 : vector<2x8xf32> to vector<2x8x1xf32>
    %60 = tpu.reciprocal %59 {approx = true} : vector<2x8x1xf32> -> vector<2x8x1xf32>
    %61 = vector.broadcast %60 : vector<2x8x1xf32> to vector<2x8x8xf32>
    %62 = arith.mulf %57, %61 : vector<2x8x8xf32>
    %63 = arith.truncf %62 : vector<2x8x8xf32> to vector<2x8x8xbf16>
    "tpu.trace_start"() <{level = 10 : i32, message = "blm,bmd->bld"}> : () -> ()
    %cst_20 = arith.constant dense<0.000000e+00> : vector<2x8x32xf32>
    %64 = tpu.matmul %63, %49, %cst_20 {dimension_numbers = #tpu.dot_dimension_numbers<[2], [1], [1], [2], [0, 0, 0, 1, 1, 2], [0], [0]>} : vector<2x8x8xbf16>, vector<2x8x32xbf16>, vector<2x8x32xf32> -> vector<2x8x32xf32>
    "tpu.trace_stop"() : () -> ()
    %65 = vector.shape_cast %64 : vector<2x8x32xf32> to vector<16x32xf32>
    %66 = arith.truncf %65 : vector<16x32xf32> to vector<16x32xbf16>
    %67 = arith.index_cast %arg1 : i32 to index
    %c0_21 = arith.constant 0 : index
    %c0_22 = arith.constant 0 : index
    %c0_23 = arith.constant 0 : index
    %68 = vector.load %arg7[%67, %c0_21, %c0_22, %c0_23] : memref<2x4x32x128xbf16, #tpu.memory_space<vmem>>, vector<1x1x32x128xbf16>
    %69 = vector.shape_cast %68 : vector<1x1x32x128xbf16> to vector<32x128xbf16>
    %cst_24 = arith.constant dense<0.000000e+00> : vector<16x128xf32>
    %70 = tpu.matmul %66, %69, %cst_24 {dimension_numbers = #tpu.dot_dimension_numbers<[1], [0], [0], [1], [0, 0, 1, 1], [], []>} : vector<16x32xbf16>, vector<32x128xbf16>, vector<16x128xf32> -> vector<16x128xf32>
    %71 = vector.extract_strided_slice %46 {offsets = [0, 0, 32], sizes = [2, 8, 32], strides = [1, 1, 1]} : vector<2x8x384xbf16> to vector<2x8x32xbf16>
    %72 = vector.extract_strided_slice %46 {offsets = [0, 0, 160], sizes = [2, 8, 32], strides = [1, 1, 1]} : vector<2x8x384xbf16> to vector<2x8x32xbf16>
    %73 = vector.extract_strided_slice %46 {offsets = [0, 0, 288], sizes = [2, 8, 32], strides = [1, 1, 1]} : vector<2x8x384xbf16> to vector<2x8x32xbf16>
    "tpu.trace_start"() <{level = 10 : i32, message = "bld,bmd->blm"}> : () -> ()
    %cst_25 = arith.constant dense<0.000000e+00> : vector<2x8x8xf32>
    %74 = tpu.matmul %71, %72, %cst_25 {dimension_numbers = #tpu.dot_dimension_numbers<[2], [2], [1], [1], [0, 0, 0, 1, 1, 1], [0], [0]>} : vector<2x8x32xbf16>, vector<2x8x32xbf16>, vector<2x8x8xf32> -> vector<2x8x8xf32>
    "tpu.trace_stop"() : () -> ()
    %cst_26 = arith.constant 0.176776692 : f32
    %75 = vector.broadcast %cst_26 : f32 to vector<2x8x8xf32>
    %76 = arith.mulf %74, %75 : vector<2x8x8xf32>
    %cst_27 = arith.constant dense<0xFF800000> : vector<2x8xf32>
    %77 = vector.multi_reduction <maximumf>, %76, %cst_27 [2] : vector<2x8x8xf32> to vector<2x8xf32>
    %78 = vector.shape_cast %77 : vector<2x8xf32> to vector<2x8x1xf32>
    %79 = vector.broadcast %78 : vector<2x8x1xf32> to vector<2x8x8xf32>
    %80 = arith.subf %76, %79 : vector<2x8x8xf32>
    %81 = math.exp %80 : vector<2x8x8xf32>
    %cst_28 = arith.constant dense<0.000000e+00> : vector<2x8xf32>
    %82 = vector.multi_reduction <add>, %81, %cst_28 [2] : vector<2x8x8xf32> to vector<2x8xf32>
    %83 = vector.shape_cast %82 : vector<2x8xf32> to vector<2x8x1xf32>
    %84 = tpu.reciprocal %83 {approx = true} : vector<2x8x1xf32> -> vector<2x8x1xf32>
    %85 = vector.broadcast %84 : vector<2x8x1xf32> to vector<2x8x8xf32>
    %86 = arith.mulf %81, %85 : vector<2x8x8xf32>
    %87 = arith.truncf %86 : vector<2x8x8xf32> to vector<2x8x8xbf16>
    "tpu.trace_start"() <{level = 10 : i32, message = "blm,bmd->bld"}> : () -> ()
    %cst_29 = arith.constant dense<0.000000e+00> : vector<2x8x32xf32>
    %88 = tpu.matmul %87, %73, %cst_29 {dimension_numbers = #tpu.dot_dimension_numbers<[2], [1], [1], [2], [0, 0, 0, 1, 1, 2], [0], [0]>} : vector<2x8x8xbf16>, vector<2x8x32xbf16>, vector<2x8x32xf32> -> vector<2x8x32xf32>
    "tpu.trace_stop"() : () -> ()
    %89 = vector.shape_cast %88 : vector<2x8x32xf32> to vector<16x32xf32>
    %90 = arith.truncf %89 : vector<16x32xf32> to vector<16x32xbf16>
    %91 = arith.index_cast %arg1 : i32 to index
    %c1 = arith.constant 1 : index
    %c0_30 = arith.constant 0 : index
    %c0_31 = arith.constant 0 : index
    %92 = vector.load %arg7[%91, %c1, %c0_30, %c0_31] : memref<2x4x32x128xbf16, #tpu.memory_space<vmem>>, vector<1x1x32x128xbf16>
    %93 = vector.shape_cast %92 : vector<1x1x32x128xbf16> to vector<32x128xbf16>
    %cst_32 = arith.constant dense<0.000000e+00> : vector<16x128xf32>
    %94 = tpu.matmul %90, %93, %cst_32 {dimension_numbers = #tpu.dot_dimension_numbers<[1], [0], [0], [1], [0, 0, 1, 1], [], []>} : vector<16x32xbf16>, vector<32x128xbf16>, vector<16x128xf32> -> vector<16x128xf32>
    %95 = arith.addf %70, %94 : vector<16x128xf32>
    %96 = vector.extract_strided_slice %46 {offsets = [0, 0, 64], sizes = [2, 8, 32], strides = [1, 1, 1]} : vector<2x8x384xbf16> to vector<2x8x32xbf16>
    %97 = vector.extract_strided_slice %46 {offsets = [0, 0, 192], sizes = [2, 8, 32], strides = [1, 1, 1]} : vector<2x8x384xbf16> to vector<2x8x32xbf16>
    %98 = vector.extract_strided_slice %46 {offsets = [0, 0, 320], sizes = [2, 8, 32], strides = [1, 1, 1]} : vector<2x8x384xbf16> to vector<2x8x32xbf16>
    "tpu.trace_start"() <{level = 10 : i32, message = "bld,bmd->blm"}> : () -> ()
    %cst_33 = arith.constant dense<0.000000e+00> : vector<2x8x8xf32>
    %99 = tpu.matmul %96, %97, %cst_33 {dimension_numbers = #tpu.dot_dimension_numbers<[2], [2], [1], [1], [0, 0, 0, 1, 1, 1], [0], [0]>} : vector<2x8x32xbf16>, vector<2x8x32xbf16>, vector<2x8x8xf32> -> vector<2x8x8xf32>
    "tpu.trace_stop"() : () -> ()
    %cst_34 = arith.constant 0.176776692 : f32
    %100 = vector.broadcast %cst_34 : f32 to vector<2x8x8xf32>
    %101 = arith.mulf %99, %100 : vector<2x8x8xf32>
    %cst_35 = arith.constant dense<0xFF800000> : vector<2x8xf32>
    %102 = vector.multi_reduction <maximumf>, %101, %cst_35 [2] : vector<2x8x8xf32> to vector<2x8xf32>
    %103 = vector.shape_cast %102 : vector<2x8xf32> to vector<2x8x1xf32>
    %104 = vector.broadcast %103 : vector<2x8x1xf32> to vector<2x8x8xf32>
    %105 = arith.subf %101, %104 : vector<2x8x8xf32>
    %106 = math.exp %105 : vector<2x8x8xf32>
    %cst_36 = arith.constant dense<0.000000e+00> : vector<2x8xf32>
    %107 = vector.multi_reduction <add>, %106, %cst_36 [2] : vector<2x8x8xf32> to vector<2x8xf32>
    %108 = vector.shape_cast %107 : vector<2x8xf32> to vector<2x8x1xf32>
    %109 = tpu.reciprocal %108 {approx = true} : vector<2x8x1xf32> -> vector<2x8x1xf32>
    %110 = vector.broadcast %109 : vector<2x8x1xf32> to vector<2x8x8xf32>
    %111 = arith.mulf %106, %110 : vector<2x8x8xf32>
    %112 = arith.truncf %111 : vector<2x8x8xf32> to vector<2x8x8xbf16>
    "tpu.trace_start"() <{level = 10 : i32, message = "blm,bmd->bld"}> : () -> ()
    %cst_37 = arith.constant dense<0.000000e+00> : vector<2x8x32xf32>
    %113 = tpu.matmul %112, %98, %cst_37 {dimension_numbers = #tpu.dot_dimension_numbers<[2], [1], [1], [2], [0, 0, 0, 1, 1, 2], [0], [0]>} : vector<2x8x8xbf16>, vector<2x8x32xbf16>, vector<2x8x32xf32> -> vector<2x8x32xf32>
    "tpu.trace_stop"() : () -> ()
    %114 = vector.shape_cast %113 : vector<2x8x32xf32> to vector<16x32xf32>
    %115 = arith.truncf %114 : vector<16x32xf32> to vector<16x32xbf16>
    %116 = arith.index_cast %arg1 : i32 to index
    %c2 = arith.constant 2 : index
    %c0_38 = arith.constant 0 : index
    %c0_39 = arith.constant 0 : index
    %117 = vector.load %arg7[%116, %c2, %c0_38, %c0_39] : memref<2x4x32x128xbf16, #tpu.memory_space<vmem>>, vector<1x1x32x128xbf16>
    %118 = vector.shape_cast %117 : vector<1x1x32x128xbf16> to vector<32x128xbf16>
    %cst_40 = arith.constant dense<0.000000e+00> : vector<16x128xf32>
    %119 = tpu.matmul %115, %118, %cst_40 {dimension_numbers = #tpu.dot_dimension_numbers<[1], [0], [0], [1], [0, 0, 1, 1], [], []>} : vector<16x32xbf16>, vector<32x128xbf16>, vector<16x128xf32> -> vector<16x128xf32>
    %120 = arith.addf %95, %119 : vector<16x128xf32>
    %121 = vector.extract_strided_slice %46 {offsets = [0, 0, 96], sizes = [2, 8, 32], strides = [1, 1, 1]} : vector<2x8x384xbf16> to vector<2x8x32xbf16>
    %122 = vector.extract_strided_slice %46 {offsets = [0, 0, 224], sizes = [2, 8, 32], strides = [1, 1, 1]} : vector<2x8x384xbf16> to vector<2x8x32xbf16>
    %123 = vector.extract_strided_slice %46 {offsets = [0, 0, 352], sizes = [2, 8, 32], strides = [1, 1, 1]} : vector<2x8x384xbf16> to vector<2x8x32xbf16>
    "tpu.trace_start"() <{level = 10 : i32, message = "bld,bmd->blm"}> : () -> ()
    %cst_41 = arith.constant dense<0.000000e+00> : vector<2x8x8xf32>
    %124 = tpu.matmul %121, %122, %cst_41 {dimension_numbers = #tpu.dot_dimension_numbers<[2], [2], [1], [1], [0, 0, 0, 1, 1, 1], [0], [0]>} : vector<2x8x32xbf16>, vector<2x8x32xbf16>, vector<2x8x8xf32> -> vector<2x8x8xf32>
    "tpu.trace_stop"() : () -> ()
    %cst_42 = arith.constant 0.176776692 : f32
    %125 = vector.broadcast %cst_42 : f32 to vector<2x8x8xf32>
    %126 = arith.mulf %124, %125 : vector<2x8x8xf32>
    %cst_43 = arith.constant dense<0xFF800000> : vector<2x8xf32>
    %127 = vector.multi_reduction <maximumf>, %126, %cst_43 [2] : vector<2x8x8xf32> to vector<2x8xf32>
    %128 = vector.shape_cast %127 : vector<2x8xf32> to vector<2x8x1xf32>
    %129 = vector.broadcast %128 : vector<2x8x1xf32> to vector<2x8x8xf32>
    %130 = arith.subf %126, %129 : vector<2x8x8xf32>
    %131 = math.exp %130 : vector<2x8x8xf32>
    %cst_44 = arith.constant dense<0.000000e+00> : vector<2x8xf32>
    %132 = vector.multi_reduction <add>, %131, %cst_44 [2] : vector<2x8x8xf32> to vector<2x8xf32>
    %133 = vector.shape_cast %132 : vector<2x8xf32> to vector<2x8x1xf32>
    %134 = tpu.reciprocal %133 {approx = true} : vector<2x8x1xf32> -> vector<2x8x1xf32>
    %135 = vector.broadcast %134 : vector<2x8x1xf32> to vector<2x8x8xf32>
    %136 = arith.mulf %131, %135 : vector<2x8x8xf32>
    %137 = arith.truncf %136 : vector<2x8x8xf32> to vector<2x8x8xbf16>
    "tpu.trace_start"() <{level = 10 : i32, message = "blm,bmd->bld"}> : () -> ()
    %cst_45 = arith.constant dense<0.000000e+00> : vector<2x8x32xf32>
    %138 = tpu.matmul %137, %123, %cst_45 {dimension_numbers = #tpu.dot_dimension_numbers<[2], [1], [1], [2], [0, 0, 0, 1, 1, 2], [0], [0]>} : vector<2x8x8xbf16>, vector<2x8x32xbf16>, vector<2x8x32xf32> -> vector<2x8x32xf32>
    "tpu.trace_stop"() : () -> ()
    %139 = vector.shape_cast %138 : vector<2x8x32xf32> to vector<16x32xf32>
    %140 = arith.truncf %139 : vector<16x32xf32> to vector<16x32xbf16>
    %141 = arith.index_cast %arg1 : i32 to index
    %c3 = arith.constant 3 : index
    %c0_46 = arith.constant 0 : index
    %c0_47 = arith.constant 0 : index
    %142 = vector.load %arg7[%141, %c3, %c0_46, %c0_47] : memref<2x4x32x128xbf16, #tpu.memory_space<vmem>>, vector<1x1x32x128xbf16>
    %143 = vector.shape_cast %142 : vector<1x1x32x128xbf16> to vector<32x128xbf16>
    %cst_48 = arith.constant dense<0.000000e+00> : vector<16x128xf32>
    %144 = tpu.matmul %140, %143, %cst_48 {dimension_numbers = #tpu.dot_dimension_numbers<[1], [0], [0], [1], [0, 0, 1, 1], [], []>} : vector<16x32xbf16>, vector<32x128xbf16>, vector<16x128xf32> -> vector<16x128xf32>
    %145 = arith.addf %120, %144 : vector<16x128xf32>
    %146 = arith.index_cast %arg1 : i32 to index
    %c0_49 = arith.constant 0 : index
    %c0_50 = arith.constant 0 : index
    %147 = vector.load %arg8[%146, %c0_49, %c0_50] : memref<2x1x128xf32, #tpu.memory_space<vmem>>, vector<1x1x128xf32>
    %148 = vector.shape_cast %147 : vector<1x1x128xf32> to vector<1x128xf32>
    %149 = vector.broadcast %148 : vector<1x128xf32> to vector<16x128xf32>
    %150 = arith.addf %145, %149 : vector<16x128xf32>
    %151 = vector.shape_cast %150 : vector<16x128xf32> to vector<2x8x128xf32>
    %152 = arith.addf %3, %151 : vector<2x8x128xf32>
    %153 = arith.index_cast %arg1 : i32 to index
    %c0_51 = arith.constant 0 : index
    %c0_52 = arith.constant 0 : index
    %154 = vector.load %arg9[%153, %c0_51, %c0_52] : memref<2x1x128xf32, #tpu.memory_space<vmem>>, vector<1x1x128xf32>
    %155 = vector.shape_cast %154 : vector<1x1x128xf32> to vector<1x128xf32>
    %156 = arith.index_cast %arg1 : i32 to index
    %c0_53 = arith.constant 0 : index
    %c0_54 = arith.constant 0 : index
    %157 = vector.load %arg10[%156, %c0_53, %c0_54] : memref<2x1x128xf32, #tpu.memory_space<vmem>>, vector<1x1x128xf32>
    %158 = vector.shape_cast %157 : vector<1x1x128xf32> to vector<1x128xf32>
    %cst_55 = arith.constant dense<0.000000e+00> : vector<2x8xf32>
    %159 = vector.multi_reduction <add>, %152, %cst_55 [2] : vector<2x8x128xf32> to vector<2x8xf32>
    %160 = vector.shape_cast %159 : vector<2x8xf32> to vector<2x8x1xf32>
    %cst_56 = arith.constant 1.280000e+02 : f32
    %161 = vector.broadcast %cst_56 : f32 to vector<2x8x1xf32>
    %162 = arith.divf %160, %161 : vector<2x8x1xf32>
    %163 = vector.broadcast %162 : vector<2x8x1xf32> to vector<2x8x128xf32>
    %164 = arith.subf %152, %163 : vector<2x8x128xf32>
    %165 = arith.mulf %164, %164 : vector<2x8x128xf32>
    %cst_57 = arith.constant dense<0.000000e+00> : vector<2x8xf32>
    %166 = vector.multi_reduction <add>, %165, %cst_57 [2] : vector<2x8x128xf32> to vector<2x8xf32>
    %167 = vector.shape_cast %166 : vector<2x8xf32> to vector<2x8x1xf32>
    %cst_58 = arith.constant 1.280000e+02 : f32
    %168 = vector.broadcast %cst_58 : f32 to vector<2x8x1xf32>
    %169 = arith.divf %167, %168 : vector<2x8x1xf32>
    %170 = vector.broadcast %162 : vector<2x8x1xf32> to vector<2x8x128xf32>
    %171 = arith.subf %152, %170 : vector<2x8x128xf32>
    %cst_59 = arith.constant 1.000000e-07 : f32
    %172 = vector.broadcast %cst_59 : f32 to vector<2x8x1xf32>
    %173 = arith.addf %169, %172 : vector<2x8x1xf32>
    %174 = math.rsqrt %173 : vector<2x8x1xf32>
    %175 = vector.broadcast %174 : vector<2x8x1xf32> to vector<2x8x128xf32>
    %176 = arith.mulf %171, %175 : vector<2x8x128xf32>
    %177 = vector.shape_cast %155 : vector<1x128xf32> to vector<1x1x128xf32>
    %178 = vector.broadcast %177 : vector<1x1x128xf32> to vector<2x8x128xf32>
    %179 = arith.mulf %176, %178 : vector<2x8x128xf32>
    %180 = vector.shape_cast %158 : vector<1x128xf32> to vector<1x1x128xf32>
    %181 = vector.broadcast %180 : vector<1x1x128xf32> to vector<2x8x128xf32>
    %182 = arith.addf %179, %181 : vector<2x8x128xf32>
    %183 = vector.shape_cast %182 : vector<2x8x128xf32> to vector<16x128xf32>
    %184 = arith.truncf %183 : vector<16x128xf32> to vector<16x128xbf16>
    %185 = arith.index_cast %arg1 : i32 to index
    %c0_60 = arith.constant 0 : index
    %c0_61 = arith.constant 0 : index
    %186 = vector.load %arg11[%185, %c0_60, %c0_61] : memref<2x128x512xbf16, #tpu.memory_space<vmem>>, vector<1x128x512xbf16>
    %187 = vector.shape_cast %186 : vector<1x128x512xbf16> to vector<128x512xbf16>
    %cst_62 = arith.constant dense<0.000000e+00> : vector<16x512xf32>
    %188 = tpu.matmul %184, %187, %cst_62 {dimension_numbers = #tpu.dot_dimension_numbers<[1], [0], [0], [1], [0, 0, 1, 1], [], []>} : vector<16x128xbf16>, vector<128x512xbf16>, vector<16x512xf32> -> vector<16x512xf32>
    %189 = arith.index_cast %arg1 : i32 to index
    %c0_63 = arith.constant 0 : index
    %c0_64 = arith.constant 0 : index
    %190 = vector.load %arg12[%189, %c0_63, %c0_64] : memref<2x1x512xf32, #tpu.memory_space<vmem>>, vector<1x1x512xf32>
    %191 = vector.shape_cast %190 : vector<1x1x512xf32> to vector<1x512xf32>
    %192 = vector.broadcast %191 : vector<1x512xf32> to vector<16x512xf32>
    %193 = arith.addf %188, %192 : vector<16x512xf32>
    %cst_65 = arith.constant 1.702000e+00 : f32
    %194 = vector.broadcast %cst_65 : f32 to vector<16x512xf32>
    %195 = arith.mulf %194, %193 : vector<16x512xf32>
    %196 = arith.negf %195 : vector<16x512xf32>
    %197 = math.exp %196 : vector<16x512xf32>
    %cst_66 = arith.constant 1.000000e+00 : f32
    %198 = vector.broadcast %cst_66 : f32 to vector<16x512xf32>
    %199 = arith.addf %198, %197 : vector<16x512xf32>
    %200 = arith.divf %198, %199 : vector<16x512xf32>
    %201 = arith.mulf %193, %200 : vector<16x512xf32>
    %202 = arith.truncf %201 : vector<16x512xf32> to vector<16x512xbf16>
    %203 = arith.index_cast %arg1 : i32 to index
    %c0_67 = arith.constant 0 : index
    %c0_68 = arith.constant 0 : index
    %204 = vector.load %arg13[%203, %c0_67, %c0_68] : memref<2x512x128xbf16, #tpu.memory_space<vmem>>, vector<1x512x128xbf16>
    %205 = vector.shape_cast %204 : vector<1x512x128xbf16> to vector<512x128xbf16>
    %cst_69 = arith.constant dense<0.000000e+00> : vector<16x128xf32>
    %206 = tpu.matmul %202, %205, %cst_69 {dimension_numbers = #tpu.dot_dimension_numbers<[1], [0], [0], [1], [0, 0, 1, 1], [], []>} : vector<16x512xbf16>, vector<512x128xbf16>, vector<16x128xf32> -> vector<16x128xf32>
    %207 = arith.index_cast %arg1 : i32 to index
    %c0_70 = arith.constant 0 : index
    %c0_71 = arith.constant 0 : index
    %208 = vector.load %arg14[%207, %c0_70, %c0_71] : memref<2x1x128xf32, #tpu.memory_space<vmem>>, vector<1x1x128xf32>
    %209 = vector.shape_cast %208 : vector<1x1x128xf32> to vector<1x128xf32>
    %210 = vector.broadcast %209 : vector<1x128xf32> to vector<16x128xf32>
    %211 = arith.addf %206, %210 : vector<16x128xf32>
    %212 = vector.shape_cast %211 : vector<16x128xf32> to vector<2x8x128xf32>
    %213 = arith.addf %152, %212 : vector<2x8x128xf32>
    %c0_72 = arith.constant 0 : index
    %c0_73 = arith.constant 0 : index
    %c0_74 = arith.constant 0 : index
    %214 = vector.load %arg16[%c0_72, %c0_73, %c0_74] : memref<2x8x128xf32, #tpu.memory_space<vmem>>, vector<2x8x128xf32>
    tpu.vector_store %arg16[%c0_72, %c0_73, %c0_74], %213 {strides = array<i32>} : memref<2x8x128xf32, #tpu.memory_space<vmem>>, vector<2x8x128xf32>,
    %c1_i32 = arith.constant 1 : i32
    %215 = arith.cmpi eq, %arg1, %c1_i32 : i32
    %216 = arith.extui %215 : i1 to i32
    %c0_i32_75 = arith.constant 0 : i32
    %217 = arith.cmpi ne, %216, %c0_i32_75 : i32
    scf.if %217 {
      %c0_76 = arith.constant 0 : index
      %c0_77 = arith.constant 0 : index
      %c0_78 = arith.constant 0 : index
      %218 = vector.load %arg15[%c0_76, %c0_77, %c0_78] : memref<2x8x128xf32, #tpu.memory_space<vmem>>, vector<2x8x128xf32>
      tpu.vector_store %arg15[%c0_76, %c0_77, %c0_78], %213 {strides = array<i32>} : memref<2x8x128xf32, #tpu.memory_space<vmem>>, vector<2x8x128xf32>,
    } else {
    }
    return
  }
  func.func @transform_0(%arg0: i32, %arg1: i32) -> (i32, i32, i32) {
    %c0_i32 = arith.constant 0 : i32
    %c0_i32_0 = arith.constant 0 : i32
    %c0_i32_1 = arith.constant 0 : i32
    return %arg0, %c0_i32, %c0_i32_0 : i32, i32, i32
  }
  func.func @transform_1(%arg0: i32, %arg1: i32) -> (i32, i32, i32) {
    %c0_i32 = arith.constant 0 : i32
    %c0_i32_0 = arith.constant 0 : i32
    %c0_i32_1 = arith.constant 0 : i32
    %c0_i32_2 = arith.constant 0 : i32
    return %c0_i32, %c0_i32_0, %c0_i32_1 : i32, i32, i32
  }
  func.func @transform_2(%arg0: i32, %arg1: i32) -> (i32, i32, i32) {
    %c0_i32 = arith.constant 0 : i32
    %c0_i32_0 = arith.constant 0 : i32
    %c0_i32_1 = arith.constant 0 : i32
    %c0_i32_2 = arith.constant 0 : i32
    return %c0_i32, %c0_i32_0, %c0_i32_1 : i32, i32, i32
  }
  func.func @transform_3(%arg0: i32, %arg1: i32) -> (i32, i32, i32) {
    %c0_i32 = arith.constant 0 : i32
    %c0_i32_0 = arith.constant 0 : i32
    %c0_i32_1 = arith.constant 0 : i32
    %c0_i32_2 = arith.constant 0 : i32
    return %c0_i32, %c0_i32_0, %c0_i32_1 : i32, i32, i32
  }
  func.func @transform_4(%arg0: i32, %arg1: i32) -> (i32, i32, i32) {
    %c0_i32 = arith.constant 0 : i32
    %c0_i32_0 = arith.constant 0 : i32
    %c0_i32_1 = arith.constant 0 : i32
    %c0_i32_2 = arith.constant 0 : i32
    return %c0_i32, %c0_i32_0, %c0_i32_1 : i32, i32, i32
  }
  func.func @transform_5(%arg0: i32, %arg1: i32) -> (i32, i32, i32, i32) {
    %c0_i32 = arith.constant 0 : i32
    %c0_i32_0 = arith.constant 0 : i32
    %c0_i32_1 = arith.constant 0 : i32
    %c0_i32_2 = arith.constant 0 : i32
    %c0_i32_3 = arith.constant 0 : i32
    return %c0_i32, %c0_i32_0, %c0_i32_1, %c0_i32_2 : i32, i32, i32, i32
  }
  func.func @transform_6(%arg0: i32, %arg1: i32) -> (i32, i32, i32) {
    %c0_i32 = arith.constant 0 : i32
    %c0_i32_0 = arith.constant 0 : i32
    %c0_i32_1 = arith.constant 0 : i32
    %c0_i32_2 = arith.constant 0 : i32
    return %c0_i32, %c0_i32_0, %c0_i32_1 : i32, i32, i32
  }
  func.func @transform_7(%arg0: i32, %arg1: i32) -> (i32, i32, i32) {
    %c0_i32 = arith.constant 0 : i32
    %c0_i32_0 = arith.constant 0 : i32
    %c0_i32_1 = arith.constant 0 : i32
    %c0_i32_2 = arith.constant 0 : i32
    return %c0_i32, %c0_i32_0, %c0_i32_1 : i32, i32, i32
  }
  func.func @transform_8(%arg0: i32, %arg1: i32) -> (i32, i32, i32) {
    %c0_i32 = arith.constant 0 : i32
    %c0_i32_0 = arith.constant 0 : i32
    %c0_i32_1 = arith.constant 0 : i32
    %c0_i32_2 = arith.constant 0 : i32
    return %c0_i32, %c0_i32_0, %c0_i32_1 : i32, i32, i32
  }
  func.func @transform_9(%arg0: i32, %arg1: i32) -> (i32, i32, i32) {
    %c0_i32 = arith.constant 0 : i32
    %c0_i32_0 = arith.constant 0 : i32
    %c0_i32_1 = arith.constant 0 : i32
    %c0_i32_2 = arith.constant 0 : i32
    return %c0_i32, %c0_i32_0, %c0_i32_1 : i32, i32, i32
  }
  func.func @transform_10(%arg0: i32, %arg1: i32) -> (i32, i32, i32) {
    %c0_i32 = arith.constant 0 : i32
    %c0_i32_0 = arith.constant 0 : i32
    %c0_i32_1 = arith.constant 0 : i32
    %c0_i32_2 = arith.constant 0 : i32
    return %c0_i32, %c0_i32_0, %c0_i32_1 : i32, i32, i32
  }
  func.func @transform_11(%arg0: i32, %arg1: i32) -> (i32, i32, i32) {
    %c0_i32 = arith.constant 0 : i32
    %c0_i32_0 = arith.constant 0 : i32
    %c0_i32_1 = arith.constant 0 : i32
    %c0_i32_2 = arith.constant 0 : i32
    return %c0_i32, %c0_i32_0, %c0_i32_1 : i32, i32, i32
  }
  func.func @transform_12(%arg0: i32, %arg1: i32) -> (i32, i32, i32) {
    %c0_i32 = arith.constant 0 : i32
    %c0_i32_0 = arith.constant 0 : i32
    %c0_i32_1 = arith.constant 0 : i32
    %c0_i32_2 = arith.constant 0 : i32
    return %c0_i32, %c0_i32_0, %c0_i32_1 : i32, i32, i32
  }
  func.func @transform_13(%arg0: i32, %arg1: i32) -> (i32, i32, i32) {
    %c0_i32 = arith.constant 0 : i32
    %c0_i32_0 = arith.constant 0 : i32
    %c0_i32_1 = arith.constant 0 : i32
    return %arg0, %c0_i32, %c0_i32_0 : i32, i32, i32
  }
}

</mosaic_0001>

<llo_original>
// kernel: tpu_custom_call.1
$region0: #{tpu_custom_call.1}
  #allocation0 [shape = 'u32[]', space=smem, size = 0x4, offset = 0x4, fixed_abs, tag = 'smem constant byte address 0x4 - core index']
  #allocation1 [shape = 'u32[144,128]{1,0:T(1,128)}', space=vmem, size = 0x12000, scoped, tag = 'internal scratch']
  #allocation2 [shape = 'f32[2,8,128]{2,1,0:T(8,128)}', space=vmem, size = 0x2000, scoped, tag = 'scratch operand']
  %s0 = inlined_call_operand.hbm [shape: f32[4,8,128], index: 0, kind: input, shape index: {}]
  %s1 = inlined_call_operand.hbm [shape: f32[2,1,128], index: 1, kind: input, shape index: {}]
  %s2 = inlined_call_operand.hbm [shape: f32[2,1,128], index: 2, kind: input, shape index: {}]
  %s3 = inlined_call_operand.hbm [shape: bf16[2,128,384], index: 3, kind: input, shape index: {}]
  %s4 = inlined_call_operand.vmem [shape: f32[2,1,384], index: 4, kind: input, shape index: {}]
  %s5 = inlined_call_operand.hbm [shape: bf16[2,4,32,128], index: 5, kind: input, shape index: {}]
  %s6 = inlined_call_operand.vmem [shape: f32[2,1,128], index: 6, kind: input, shape index: {}]
  %s7 = inlined_call_operand.vmem [shape: f32[2,1,128], index: 7, kind: input, shape index: {}]
  %s8 = inlined_call_operand.vmem [shape: f32[2,1,128], index: 8, kind: input, shape index: {}]
  %s9 = inlined_call_operand.hbm [shape: bf16[2,128,512], index: 9, kind: input, shape index: {}]
  %s10 = inlined_call_operand.vmem [shape: f32[2,1,512], index: 10, kind: input, shape index: {}]
  %s11 = inlined_call_operand.hbm [shape: bf16[2,512,128], index: 11, kind: input, shape index: {}]
  %s12 = inlined_call_operand.vmem [shape: f32[2,1,128], index: 12, kind: input, shape index: {}]
  %s13 = inlined_call_operand.hbm [shape: f32[4,8,128], index: 13, kind: output, shape index: {}]
  %s14 = sld [smem:[#allocation0]]
  $region121: #{tpu_custom_call.1} parent=0
    _
  %s16 = ssub.s32 1, %s14
  %s17 = scalar_select 0, %s16, %s14
  $region1: #{tpu_custom_call.1} parent=0
    #allocation3 [shape = 'u8[16384]{0}', space=vmem, size = 0x4000, scoped, tag = 'input window, operand 0']
    #allocation4 [shape = 's32[2]{0}', space=sflag, size = 0x8, scoped, tag = 'scoped memory for tpu_custom_call.1']
    #allocation5 [shape = 's32[2]{0}', space=sflag, size = 0x8, scoped, tag = 'scoped memory for tpu_custom_call.1']
    #allocation6 [shape = 'u8[1024]{0}', space=vmem, size = 0x400, scoped, tag = 'input window, operand 1, single buffered']
    #allocation7 [shape = 's32[1]{0}', space=sflag, size = 0x4, scoped, tag = 'scoped memory for tpu_custom_call.1']
    #allocation8 [shape = 'u8[1024]{0}', space=vmem, size = 0x400, scoped, tag = 'input window, operand 2, single buffered']
    #allocation9 [shape = 'u8[196608]{0}', space=vmem, size = 0x30000, scoped, tag = 'input window, operand 3, single buffered']
    #allocation10 [shape = 's32[1]{0}', space=sflag, size = 0x4, scoped, tag = 'scoped memory for tpu_custom_call.1']
    #allocation11 [shape = 'u8[65536]{0}', space=vmem, size = 0x10000, scoped, tag = 'input window, operand 5, single buffered']
    #allocation12 [shape = 'u8[262144]{0}', space=vmem, size = 0x40000, scoped, tag = 'input window, operand 9, single buffered']
    #allocation13 [shape = 's32[1]{0}', space=sflag, size = 0x4, scoped, tag = 'scoped memory for tpu_custom_call.1']
    #allocation14 [shape = 'u8[262144]{0}', space=vmem, size = 0x40000, scoped, tag = 'input window, operand 11, single buffered']
    #allocation15 [shape = 'u8[16384]{0}', space=vmem, size = 0x4000, scoped, tag = 'output window, operand 0']
    %18 = vsyncpa [#allocation4], 0
    %s19 = scalar_lea.sflag [#allocation4], 1
    %20 = vsyncpa %s19, 0
    %21 = vsyncpa [#allocation7], 0
    %22 = vsyncpa [#allocation10], 0
    %23 = vsyncpa [#allocation13], 0
    %24 = vsyncpa [#allocation5], 0
    %s25 = scalar_lea.sflag [#allocation5], 1
    %26 = vsyncpa %s25, 0
    loop: start=0, step=1, limit=6
    $region2: #{tpu_custom_call.1} parent=1 // loop_pre_header
      _
    $region3: #{tpu_custom_call.1} parent=1 // loop_header
      %s28 = sphi 0, %s32
      %p29 = scmp.ge.s32.totalorder %s28, 6
      %s35 = sphi 0, %s47
      %s36 = sphi 0, %s43
      %s37 = sphi 0, %s35
      %s38 = sphi 0, %s36
      %s39 = sphi 0, %s37
      %s40 = sphi 0, %s38
      %s50 = sphi 0, %s52
      %s53 = sphi 0, %s50
      %s54 = sphi 0, %s53
      %s70 = sphi 0, %s54
      %s74 = sphi 0, %s74
      %s76 = sphi 0, %s74
      %s77 = sphi 0, %s76
      %s91 = sphi 0, %s77
      %s95 = sphi 0, %s95
      %s97 = sphi 0, %s95
      %s98 = sphi 0, %s97
      %s112 = sphi 0, %s98
      %s116 = sphi 0, %s116
      %s118 = sphi 0, %s116
      %s119 = sphi 0, %s118
      %s133 = sphi 0, %s119
      %s137 = sphi 0, %s137
      %s139 = sphi 0, %s137
      %s140 = sphi 0, %s139
      %s154 = sphi 0, %s140
      %s158 = sphi 0, %s158
      %s160 = sphi 0, %s158
      %s161 = sphi 0, %s160
      %s175 = sphi 0, %s161
      %s179 = sphi 0, %s179
      %s181 = sphi 0, %s179
      %s182 = sphi 0, %s181
      %s196 = sphi 0, %s182
      %s200 = sphi 0, %s200
      %s202 = sphi 0, %s200
      %s203 = sphi 0, %s202
      %s217 = sphi 0, %s203
      %s221 = sphi 0, %s221
      %s223 = sphi 0, %s221
      %s224 = sphi 0, %s223
      %s238 = sphi 0, %s224
      %s242 = sphi 0, %s242
      %s244 = sphi 0, %s242
      %s245 = sphi 0, %s244
      %s259 = sphi 0, %s245
      %s263 = sphi 0, %s263
      %s265 = sphi 0, %s263
      %s266 = sphi 0, %s265
      %s280 = sphi 0, %s266
      %s284 = sphi 0, %s284
      %s286 = sphi 0, %s284
      %s287 = sphi 0, %s286
      %s301 = sphi 0, %s287
      %s305 = sphi 0, %s305
      %s307 = sphi 0, %s305
      %s308 = sphi 0, %s307
      %s322 = sphi 0, %s308
      %s328 = sphi 0, %s330
      %s331 = sphi 0, %s328
      %s332 = sphi 0, %s331
      %s348 = sphi 0, %s332
    $region4: #{tpu_custom_call.1} parent=1 // loop_header_branch
      %31 = sbr.rel (%p29) target = $region8
    $region5: #{tpu_custom_call.1} parent=1 // loop_body
      %s33 = ssub.s32 %s28, 1
      %s34 = ssub.s32 %s28, 2
      %s41 = sadd.s32 1, %s36
      %p42 = scmp.ge.s32.totalorder %s41, 2
      %s43 = scalar_select %p42, 0, %s41
      %s44 = sadd.s32 1, %s35
      %s45 = scalar_select %p42, %s44, %s35
      %p46 = scmp.ge.s32.totalorder %s45, 2
      %s47 = scalar_select %p46, 0, %s45
      %s48 = ssub.s32 %s35, %s47
      %p49 = scmp.eq.s32.totalorder %s48, 0
      %s51 = sadd.s32 %s50, 1
      %s52 = scalar_select %p49, %s50, %s51
      %p55 = pneg %p49
      %p56 = scmp.eq.s32.totalorder %s28, 3
      %p57 = por %p55, %p56
      %p58 = scmp.ne.s32.totalorder %s50, %s53
      %p59 = scmp.eq.s32.totalorder %s28, 0
      %p60 = por %p58, %p59
      %p61 = scmp.ne.s32.totalorder %s50, %s53
      %p62 = scmp.eq.s32.totalorder %s33, 3
      %p63 = por %p61, %p62
      %p64 = scmp.ne.s32.totalorder %s53, %s54
      %p65 = scmp.eq.s32.totalorder %s33, 0
      %p66 = por %p64, %p65
      %p67 = scmp.ne.s32.totalorder %s53, %s54
      %p68 = scmp.eq.s32.totalorder %s34, 3
      %p69 = por %p67, %p68
      %p71 = scmp.ne.s32.totalorder %s54, %s70
      %p72 = scmp.eq.s32.totalorder %s34, 0
      %p73 = por %p71, %p72
      %s75 = sadd.s32 %s74, 1
      %p78 = scmp.eq.s32.totalorder %s28, 3
      %p79 = scmp.ne.s32.totalorder %s74, %s76
      %p80 = scmp.eq.s32.totalorder %s28, 0
      %p81 = por %p79, %p80
      %p82 = scmp.ne.s32.totalorder %s74, %s76
      %p83 = scmp.eq.s32.totalorder %s33, 3
      %p84 = por %p82, %p83
      %p85 = scmp.ne.s32.totalorder %s76, %s77
      %p86 = scmp.eq.s32.totalorder %s33, 0
      %p87 = por %p85, %p86
      %p88 = scmp.ne.s32.totalorder %s76, %s77
      %p89 = scmp.eq.s32.totalorder %s34, 3
      %p90 = por %p88, %p89
      %p92 = scmp.ne.s32.totalorder %s77, %s91
      %p93 = scmp.eq.s32.totalorder %s34, 0
      %p94 = por %p92, %p93
      %s96 = sadd.s32 %s95, 1
      %p99 = scmp.eq.s32.totalorder %s28, 3
      %p100 = scmp.ne.s32.totalorder %s95, %s97
      %p101 = scmp.eq.s32.totalorder %s28, 0
      %p102 = por %p100, %p101
      %p103 = scmp.ne.s32.totalorder %s95, %s97
      %p104 = scmp.eq.s32.totalorder %s33, 3
      %p105 = por %p103, %p104
      %p106 = scmp.ne.s32.totalorder %s97, %s98
      %p107 = scmp.eq.s32.totalorder %s33, 0
      %p108 = por %p106, %p107
      %p109 = scmp.ne.s32.totalorder %s97, %s98
      %p110 = scmp.eq.s32.totalorder %s34, 3
      %p111 = por %p109, %p110
      %p113 = scmp.ne.s32.totalorder %s98, %s112
      %p114 = scmp.eq.s32.totalorder %s34, 0
      %p115 = por %p113, %p114
      %s117 = sadd.s32 %s116, 1
      %p120 = scmp.eq.s32.totalorder %s28, 3
      %p121 = scmp.ne.s32.totalorder %s116, %s118
      %p122 = scmp.eq.s32.totalorder %s28, 0
      %p123 = por %p121, %p122
      %p124 = scmp.ne.s32.totalorder %s116, %s118
      %p125 = scmp.eq.s32.totalorder %s33, 3
      %p126 = por %p124, %p125
      %p127 = scmp.ne.s32.totalorder %s118, %s119
      %p128 = scmp.eq.s32.totalorder %s33, 0
      %p129 = por %p127, %p128
      %p130 = scmp.ne.s32.totalorder %s118, %s119
      %p131 = scmp.eq.s32.totalorder %s34, 3
      %p132 = por %p130, %p131
      %p134 = scmp.ne.s32.totalorder %s119, %s133
      %p135 = scmp.eq.s32.totalorder %s34, 0
      %p136 = por %p134, %p135
      %s138 = sadd.s32 %s137, 1
      %p141 = scmp.eq.s32.totalorder %s28, 3
      %p142 = scmp.ne.s32.totalorder %s137, %s139
      %p143 = scmp.eq.s32.totalorder %s28, 0
      %p144 = por %p142, %p143
      %p145 = scmp.ne.s32.totalorder %s137, %s139
      %p146 = scmp.eq.s32.totalorder %s33, 3
      %p147 = por %p145, %p146
      %p148 = scmp.ne.s32.totalorder %s139, %s140
      %p149 = scmp.eq.s32.totalorder %s33, 0
      %p150 = por %p148, %p149
      %p151 = scmp.ne.s32.totalorder %s139, %s140
      %p152 = scmp.eq.s32.totalorder %s34, 3
      %p153 = por %p151, %p152
      %p155 = scmp.ne.s32.totalorder %s140, %s154
      %p156 = scmp.eq.s32.totalorder %s34, 0
      %p157 = por %p155, %p156
      %s159 = sadd.s32 %s158, 1
      %p162 = scmp.eq.s32.totalorder %s28, 3
      %p163 = scmp.ne.s32.totalorder %s158, %s160
      %p164 = scmp.eq.s32.totalorder %s28, 0
      %p165 = por %p163, %p164
      %p166 = scmp.ne.s32.totalorder %s158, %s160
      %p167 = scmp.eq.s32.totalorder %s33, 3
      %p168 = por %p166, %p167
      %p169 = scmp.ne.s32.totalorder %s160, %s161
      %p170 = scmp.eq.s32.totalorder %s33, 0
      %p171 = por %p169, %p170
      %p172 = scmp.ne.s32.totalorder %s160, %s161
      %p173 = scmp.eq.s32.totalorder %s34, 3
      %p174 = por %p172, %p173
      %p176 = scmp.ne.s32.totalorder %s161, %s175
      %p177 = scmp.eq.s32.totalorder %s34, 0
      %p178 = por %p176, %p177
      %s180 = sadd.s32 %s179, 1
      %p183 = scmp.eq.s32.totalorder %s28, 3
      %p184 = scmp.ne.s32.totalorder %s179, %s181
      %p185 = scmp.eq.s32.totalorder %s28, 0
      %p186 = por %p184, %p185
      %p187 = scmp.ne.s32.totalorder %s179, %s181
      %p188 = scmp.eq.s32.totalorder %s33, 3
      %p189 = por %p187, %p188
      %p190 = scmp.ne.s32.totalorder %s181, %s182
      %p191 = scmp.eq.s32.totalorder %s33, 0
      %p192 = por %p190, %p191
      %p193 = scmp.ne.s32.totalorder %s181, %s182
      %p194 = scmp.eq.s32.totalorder %s34, 3
      %p195 = por %p193, %p194
      %p197 = scmp.ne.s32.totalorder %s182, %s196
      %p198 = scmp.eq.s32.totalorder %s34, 0
      %p199 = por %p197, %p198
      %s201 = sadd.s32 %s200, 1
      %p204 = scmp.eq.s32.totalorder %s28, 3
      %p205 = scmp.ne.s32.totalorder %s200, %s202
      %p206 = scmp.eq.s32.totalorder %s28, 0
      %p207 = por %p205, %p206
      %p208 = scmp.ne.s32.totalorder %s200, %s202
      %p209 = scmp.eq.s32.totalorder %s33, 3
      %p210 = por %p208, %p209
      %p211 = scmp.ne.s32.totalorder %s202, %s203
      %p212 = scmp.eq.s32.totalorder %s33, 0
      %p213 = por %p211, %p212
      %p214 = scmp.ne.s32.totalorder %s202, %s203
      %p215 = scmp.eq.s32.totalorder %s34, 3
      %p216 = por %p214, %p215
      %p218 = scmp.ne.s32.totalorder %s203, %s217
      %p219 = scmp.eq.s32.totalorder %s34, 0
      %p220 = por %p218, %p219
      %s222 = sadd.s32 %s221, 1
      %p225 = scmp.eq.s32.totalorder %s28, 3
      %p226 = scmp.ne.s32.totalorder %s221, %s223
      %p227 = scmp.eq.s32.totalorder %s28, 0
      %p228 = por %p226, %p227
      %p229 = scmp.ne.s32.totalorder %s221, %s223
      %p230 = scmp.eq.s32.totalorder %s33, 3
      %p231 = por %p229, %p230
      %p232 = scmp.ne.s32.totalorder %s223, %s224
      %p233 = scmp.eq.s32.totalorder %s33, 0
      %p234 = por %p232, %p233
      %p235 = scmp.ne.s32.totalorder %s223, %s224
      %p236 = scmp.eq.s32.totalorder %s34, 3
      %p237 = por %p235, %p236
      %p239 = scmp.ne.s32.totalorder %s224, %s238
      %p240 = scmp.eq.s32.totalorder %s34, 0
      %p241 = por %p239, %p240
      %s243 = sadd.s32 %s242, 1
      %p246 = scmp.eq.s32.totalorder %s28, 3
      %p247 = scmp.ne.s32.totalorder %s242, %s244
      %p248 = scmp.eq.s32.totalorder %s28, 0
      %p249 = por %p247, %p248
      %p250 = scmp.ne.s32.totalorder %s242, %s244
      %p251 = scmp.eq.s32.totalorder %s33, 3
      %p252 = por %p250, %p251
      %p253 = scmp.ne.s32.totalorder %s244, %s245
      %p254 = scmp.eq.s32.totalorder %s33, 0
      %p255 = por %p253, %p254
      %p256 = scmp.ne.s32.totalorder %s244, %s245
      %p257 = scmp.eq.s32.totalorder %s34, 3
      %p258 = por %p256, %p257
      %p260 = scmp.ne.s32.totalorder %s245, %s259
      %p261 = scmp.eq.s32.totalorder %s34, 0
      %p262 = por %p260, %p261
      %s264 = sadd.s32 %s263, 1
      %p267 = scmp.eq.s32.totalorder %s28, 3
      %p268 = scmp.ne.s32.totalorder %s263, %s265
      %p269 = scmp.eq.s32.totalorder %s28, 0
      %p270 = por %p268, %p269
      %p271 = scmp.ne.s32.totalorder %s263, %s265
      %p272 = scmp.eq.s32.totalorder %s33, 3
      %p273 = por %p271, %p272
      %p274 = scmp.ne.s32.totalorder %s265, %s266
      %p275 = scmp.eq.s32.totalorder %s33, 0
      %p276 = por %p274, %p275
      %p277 = scmp.ne.s32.totalorder %s265, %s266
      %p278 = scmp.eq.s32.totalorder %s34, 3
      %p279 = por %p277, %p278
      %p281 = scmp.ne.s32.totalorder %s266, %s280
      %p282 = scmp.eq.s32.totalorder %s34, 0
      %p283 = por %p281, %p282
      %s285 = sadd.s32 %s284, 1
      %p288 = scmp.eq.s32.totalorder %s28, 3
      %p289 = scmp.ne.s32.totalorder %s284, %s286
      %p290 = scmp.eq.s32.totalorder %s28, 0
      %p291 = por %p289, %p290
      %p292 = scmp.ne.s32.totalorder %s284, %s286
      %p293 = scmp.eq.s32.totalorder %s33, 3
      %p294 = por %p292, %p293
      %p295 = scmp.ne.s32.totalorder %s286, %s287
      %p296 = scmp.eq.s32.totalorder %s33, 0
      %p297 = por %p295, %p296
      %p298 = scmp.ne.s32.totalorder %s286, %s287
      %p299 = scmp.eq.s32.totalorder %s34, 3
      %p300 = por %p298, %p299
      %p302 = scmp.ne.s32.totalorder %s287, %s301
      %p303 = scmp.eq.s32.totalorder %s34, 0
      %p304 = por %p302, %p303
      %s306 = sadd.s32 %s305, 1
      %p309 = scmp.eq.s32.totalorder %s28, 3
      %p310 = scmp.ne.s32.totalorder %s305, %s307
      %p311 = scmp.eq.s32.totalorder %s28, 0
      %p312 = por %p310, %p311
      %p313 = scmp.ne.s32.totalorder %s305, %s307
      %p314 = scmp.eq.s32.totalorder %s33, 3
      %p315 = por %p313, %p314
      %p316 = scmp.ne.s32.totalorder %s307, %s308
      %p317 = scmp.eq.s32.totalorder %s33, 0
      %p318 = por %p316, %p317
      %p319 = scmp.ne.s32.totalorder %s307, %s308
      %p320 = scmp.eq.s32.totalorder %s34, 3
      %p321 = por %p319, %p320
      %p323 = scmp.ne.s32.totalorder %s308, %s322
      %p324 = scmp.eq.s32.totalorder %s34, 0
      %p325 = por %p323, %p324
      %s326 = ssub.s32 %s35, %s47
      %p327 = scmp.eq.s32.totalorder %s326, 0
      %s329 = sadd.s32 %s328, 1
      %s330 = scalar_select %p327, %s328, %s329
      %p333 = pneg %p327
      %p334 = scmp.eq.s32.totalorder %s28, 3
      %p335 = por %p333, %p334
      %p336 = scmp.ne.s32.totalorder %s328, %s331
      %p337 = scmp.eq.s32.totalorder %s28, 0
      %p338 = por %p336, %p337
      %p339 = scmp.ne.s32.totalorder %s328, %s331
      %p340 = scmp.eq.s32.totalorder %s33, 3
      %p341 = por %p339, %p340
      %p342 = scmp.ne.s32.totalorder %s331, %s332
      %p343 = scmp.eq.s32.totalorder %s33, 0
      %p344 = por %p342, %p343
      %p345 = scmp.ne.s32.totalorder %s331, %s332
      %p346 = scmp.eq.s32.totalorder %s34, 3
      %p347 = por %p345, %p346
      %p349 = scmp.ne.s32.totalorder %s332, %s348
      %p350 = scmp.eq.s32.totalorder %s34, 0
      %p351 = por %p349, %p350
      %p352 = scmp.le.s32.totalorder 1, %s28
      %p353 = scmp.lt.s32.totalorder %s28, 5
      %p354 = pnand %p352, %p353
      %p355 = pneg %p354
      // Predicated region
      $region9: #{tpu_custom_call.1} parent=5 // pred_check
        _
      $region10: #{tpu_custom_call.1} parent=5 // pred_check_branch
        %357 = sbr.rel (%p354) target = $region12
      $region11: #{tpu_custom_call.1} parent=5 // pred_region
        %s358 = ssub.s32 %s28, 1
        // Predicated region
        $region13: #{tpu_custom_call.1} parent=11 // pred_check
          %p359 = pneg %p87
        $region14: #{tpu_custom_call.1} parent=11 // pred_check_branch
          %361 = sbr.rel (%p359) target = $region16
        $region15: #{tpu_custom_call.1} parent=11 // pred_region
          %s363 = ssub.s32 32, 32
          %364 = vsyncadd [#allocation7], %s363
          %s365 = sshll.u32 [#allocation6], 4
          %s366 = int_to_ptr.vmem [resolvable:$true] %s365
          %371 = dma.hbm_to_vmem [thread:$0]  %s1, 32, %s366, [#allocation7], 16, 16, 1
        $region16: #{tpu_custom_call.1} parent=11 // pred_fallthru
          _
        // Predicated region
        $region17: #{tpu_custom_call.1} parent=11 // pred_check
          %p372 = pneg %p108
        $region18: #{tpu_custom_call.1} parent=11 // pred_check_branch
          %374 = sbr.rel (%p372) target = $region20
        $region19: #{tpu_custom_call.1} parent=11 // pred_region
          %s376 = ssub.s32 32, 32
          %377 = vsyncadd [#allocation7], %s376
          %s378 = sshll.u32 [#allocation8], 4
          %s379 = int_to_ptr.vmem [resolvable:$true] %s378
          %384 = dma.hbm_to_vmem [thread:$0]  %s2, 32, %s379, [#allocation7], 16, 16, 1
        $region20: #{tpu_custom_call.1} parent=11 // pred_fallthru
          _
        // Predicated region
        $region21: #{tpu_custom_call.1} parent=11 // pred_check
          %p385 = pneg %p129
        $region22: #{tpu_custom_call.1} parent=11 // pred_check_branch
          %387 = sbr.rel (%p385) target = $region24
        $region23: #{tpu_custom_call.1} parent=11 // pred_region
          %s389 = ssub.s32 6144, 6144
          %390 = vsyncadd [#allocation10], %s389
          %s391 = sshll.u32 [#allocation9], 4
          %s392 = int_to_ptr.vmem [resolvable:$true] %s391
          %397 = dma.hbm_to_vmem [thread:$0]  %s3, 6144, %s392, [#allocation10], 192, 192, 12
        $region24: #{tpu_custom_call.1} parent=11 // pred_fallthru
          _
        // Predicated region
        $region25: #{tpu_custom_call.1} parent=11 // pred_check
          %p398 = pneg %p150
        $region26: #{tpu_custom_call.1} parent=11 // pred_check_branch
          %400 = sbr.rel (%p398) target = $region28
        $region27: #{tpu_custom_call.1} parent=11 // pred_region
          _
        $region28: #{tpu_custom_call.1} parent=11 // pred_fallthru
          _
        // Predicated region
        $region29: #{tpu_custom_call.1} parent=11 // pred_check
          %p401 = pneg %p171
        $region30: #{tpu_custom_call.1} parent=11 // pred_check_branch
          %403 = sbr.rel (%p401) target = $region32
        $region31: #{tpu_custom_call.1} parent=11 // pred_region
          %s405 = ssub.s32 2048, 2048
          %406 = vsyncadd [#allocation10], %s405
          %s407 = sshll.u32 [#allocation11], 4
          %s408 = int_to_ptr.vmem [resolvable:$true] %s407
          %413 = dma.hbm_to_vmem [thread:$0]  %s5, 2048, %s408, [#allocation10], 64, 64, 4
        $region32: #{tpu_custom_call.1} parent=11 // pred_fallthru
          _
        // Predicated region
        $region33: #{tpu_custom_call.1} parent=11 // pred_check
          %p414 = pneg %p192
        $region34: #{tpu_custom_call.1} parent=11 // pred_check_branch
          %416 = sbr.rel (%p414) target = $region36
        $region35: #{tpu_custom_call.1} parent=11 // pred_region
          _
        $region36: #{tpu_custom_call.1} parent=11 // pred_fallthru
          _
        // Predicated region
        $region37: #{tpu_custom_call.1} parent=11 // pred_check
          %p417 = pneg %p213
        $region38: #{tpu_custom_call.1} parent=11 // pred_check_branch
          %419 = sbr.rel (%p417) target = $region40
        $region39: #{tpu_custom_call.1} parent=11 // pred_region
          _
        $region40: #{tpu_custom_call.1} parent=11 // pred_fallthru
          _
        // Predicated region
        $region41: #{tpu_custom_call.1} parent=11 // pred_check
          %p420 = pneg %p234
        $region42: #{tpu_custom_call.1} parent=11 // pred_check_branch
          %422 = sbr.rel (%p420) target = $region44
        $region43: #{tpu_custom_call.1} parent=11 // pred_region
          _
        $region44: #{tpu_custom_call.1} parent=11 // pred_fallthru
          _
        // Predicated region
        $region45: #{tpu_custom_call.1} parent=11 // pred_check
          %p423 = pneg %p255
        $region46: #{tpu_custom_call.1} parent=11 // pred_check_branch
          %425 = sbr.rel (%p423) target = $region48
        $region47: #{tpu_custom_call.1} parent=11 // pred_region
          %s427 = ssub.s32 8192, 8192
          %428 = vsyncadd [#allocation13], %s427
          %s429 = sshll.u32 [#allocation12], 4
          %s430 = int_to_ptr.vmem [resolvable:$true] %s429
          %435 = dma.hbm_to_vmem [thread:$0]  %s9, 8192, %s430, [#allocation13], 256, 256, 16
        $region48: #{tpu_custom_call.1} parent=11 // pred_fallthru
          _
        // Predicated region
        $region49: #{tpu_custom_call.1} parent=11 // pred_check
          %p436 = pneg %p276
        $region50: #{tpu_custom_call.1} parent=11 // pred_check_branch
          %438 = sbr.rel (%p436) target = $region52
        $region51: #{tpu_custom_call.1} parent=11 // pred_region
          _
        $region52: #{tpu_custom_call.1} parent=11 // pred_fallthru
          _
        // Predicated region
        $region53: #{tpu_custom_call.1} parent=11 // pred_check
          %p439 = pneg %p297
        $region54: #{tpu_custom_call.1} parent=11 // pred_check_branch
          %441 = sbr.rel (%p439) target = $region56
        $region55: #{tpu_custom_call.1} parent=11 // pred_region
          %s443 = ssub.s32 8192, 8192
          %444 = vsyncadd [#allocation13], %s443
          %s445 = sshll.u32 [#allocation14], 4
          %s446 = int_to_ptr.vmem [resolvable:$true] %s445
          %451 = dma.hbm_to_vmem [thread:$0]  %s11, 8192, %s446, [#allocation13], 64, 64, 4
        $region56: #{tpu_custom_call.1} parent=11 // pred_fallthru
          _
        // Predicated region
        $region57: #{tpu_custom_call.1} parent=11 // pred_check
          %p452 = pneg %p318
        $region58: #{tpu_custom_call.1} parent=11 // pred_check_branch
          %454 = sbr.rel (%p452) target = $region60
        $region59: #{tpu_custom_call.1} parent=11 // pred_region
          _
        $region60: #{tpu_custom_call.1} parent=11 // pred_fallthru
          _
      $region12: #{tpu_custom_call.1} parent=5 // pred_fallthru
        _
      %p455 = scmp.lt.s32.totalorder %s28, 4
      // Predicated region
      $region61: #{tpu_custom_call.1} parent=5 // pred_check
        %p456 = pneg %p455
      $region62: #{tpu_custom_call.1} parent=5 // pred_check_branch
        %458 = sbr.rel (%p456) target = $region64
      $region63: #{tpu_custom_call.1} parent=5 // pred_region
        // Predicated region
        $region65: #{tpu_custom_call.1} parent=63 // pred_check
          %p459 = pneg %p60
        $region66: #{tpu_custom_call.1} parent=63 // pred_check_branch
          %461 = sbr.rel (%p459) target = $region68
        $region67: #{tpu_custom_call.1} parent=63 // pred_region
          %s462 = sand.u32 %s50, 1
          %s463 = scalar_lea.sflag [#allocation4], %s462
          %s464 = sand.u32 %s50, 1
          %s465 = smul.addr %s464, 16
          %s466 = scalar_lea.vmem [#allocation3], %s465
          %s467 = smul.u32 2, %s35
          %s469 = ssub.s32 256, 256
          %470 = vsyncadd %s463, %s469
          %s471 = smul.addr %s467, 128
          %s472 = scalar_lea.hbm %s0, %s471
          %s473 = sshll.u32 %s466, 4
          %s474 = int_to_ptr.vmem [resolvable:$true] %s473
          %479 = dma.hbm_to_vmem [thread:$0]  %s472, 256, %s474, %s463, 128, 128, 8
        $region68: #{tpu_custom_call.1} parent=63 // pred_fallthru
          _
      $region64: #{tpu_custom_call.1} parent=5 // pred_fallthru
        _
      %p480 = scmp.le.s32.totalorder 1, %s28
      %p481 = scmp.lt.s32.totalorder %s28, 5
      %p482 = pnand %p480, %p481
      %p483 = pneg %p482
      // Predicated region
      $region69: #{tpu_custom_call.1} parent=5 // pred_check
        _
      $region70: #{tpu_custom_call.1} parent=5 // pred_check_branch
        %485 = sbr.rel (%p482) target = $region72
      $region71: #{tpu_custom_call.1} parent=5 // pred_region
        %s486 = ssub.s32 %s28, 1
        %s487 = sand.u32 %s53, 1
        %s488 = scalar_lea.sflag [#allocation4], %s487
        %s489 = sand.u32 %s53, 1
        %s490 = smul.addr %s489, 16
        %s491 = scalar_lea.vmem [#allocation3], %s490
        // Predicated region
        $region73: #{tpu_custom_call.1} parent=71 // pred_check
          %p492 = pneg %p66
        $region74: #{tpu_custom_call.1} parent=71 // pred_check_branch
          %494 = sbr.rel (%p492) target = $region76
        $region75: #{tpu_custom_call.1} parent=71 // pred_region
          %495 = dma.done %s488, 256
        $region76: #{tpu_custom_call.1} parent=71 // pred_fallthru
          _
        // Predicated region
        $region77: #{tpu_custom_call.1} parent=71 // pred_check
          %p496 = pneg %p87
        $region78: #{tpu_custom_call.1} parent=71 // pred_check_branch
          %498 = sbr.rel (%p496) target = $region80
        $region79: #{tpu_custom_call.1} parent=71 // pred_region
          %499 = dma.done [#allocation7], 32
        $region80: #{tpu_custom_call.1} parent=71 // pred_fallthru
          _
        // Predicated region
        $region81: #{tpu_custom_call.1} parent=71 // pred_check
          %p500 = pneg %p108
        $region82: #{tpu_custom_call.1} parent=71 // pred_check_branch
          %502 = sbr.rel (%p500) target = $region84
        $region83: #{tpu_custom_call.1} parent=71 // pred_region
          %503 = dma.done [#allocation7], 32
        $region84: #{tpu_custom_call.1} parent=71 // pred_fallthru
          _
        // Predicated region
        $region85: #{tpu_custom_call.1} parent=71 // pred_check
          %p504 = pneg %p129
        $region86: #{tpu_custom_call.1} parent=71 // pred_check_branch
          %506 = sbr.rel (%p504) target = $region88
        $region87: #{tpu_custom_call.1} parent=71 // pred_region
          %507 = dma.done [#allocation10], 6144
        $region88: #{tpu_custom_call.1} parent=71 // pred_fallthru
          _
        // Predicated region
        $region89: #{tpu_custom_call.1} parent=71 // pred_check
          %p508 = pneg %p171
        $region90: #{tpu_custom_call.1} parent=71 // pred_check_branch
          %510 = sbr.rel (%p508) target = $region92
        $region91: #{tpu_custom_call.1} parent=71 // pred_region
          %511 = dma.done [#allocation10], 2048
        $region92: #{tpu_custom_call.1} parent=71 // pred_fallthru
          _
        // Predicated region
        $region93: #{tpu_custom_call.1} parent=71 // pred_check
          %p512 = pneg %p255
        $region94: #{tpu_custom_call.1} parent=71 // pred_check_branch
          %514 = sbr.rel (%p512) target = $region96
        $region95: #{tpu_custom_call.1} parent=71 // pred_region
          %515 = dma.done [#allocation13], 8192
        $region96: #{tpu_custom_call.1} parent=71 // pred_fallthru
          _
        // Predicated region
        $region97: #{tpu_custom_call.1} parent=71 // pred_check
          %p516 = pneg %p297
        $region98: #{tpu_custom_call.1} parent=71 // pred_check_branch
          %518 = sbr.rel (%p516) target = $region100
        $region99: #{tpu_custom_call.1} parent=71 // pred_region
          %519 = dma.done [#allocation13], 8192
        $region100: #{tpu_custom_call.1} parent=71 // pred_fallthru
          _
        %s520 = sand.u32 %s53, 1
        %s521 = scalar_lea.sflag [#allocation4], %s520
        %s522 = sand.u32 %s53, 1
        %s523 = smul.addr %s522, 16
        %s524 = scalar_lea.vmem [#allocation3], %s523
        %p525 = pneg %p66
        %p526 = pneg %p63
        %p527 = pneg %p87
        %p528 = pneg %p84
        %p529 = pneg %p108
        %p530 = pneg %p105
        %p531 = pneg %p129
        %p532 = pneg %p126
        %p533 = pneg %p150
        %p534 = pneg %p147
        %p535 = pneg %p171
        %p536 = pneg %p168
        %p537 = pneg %p192
        %p538 = pneg %p189
        %p539 = pneg %p213
        %p540 = pneg %p210
        %p541 = pneg %p234
        %p542 = pneg %p231
        %p543 = pneg %p255
        %p544 = pneg %p252
        %p545 = pneg %p276
        %p546 = pneg %p273
        %p547 = pneg %p297
        %p548 = pneg %p294
        %p549 = pneg %p318
        %p550 = pneg %p315
        %p551 = pneg %p344
        %p552 = pneg %p341
        %s553 = sand.u32 %s331, 1
        %s554 = scalar_lea.sflag [#allocation5], %s553
        %s555 = sand.u32 %s331, 1
        %s556 = smul.addr %s555, 16
        %s557 = scalar_lea.vmem [#allocation15], %s556
        %s558 = smul.u32 2, %s37
        %s559 = smul.u32 2, %s37
        %p561 = scmp.eq.s32.totalorder %s38, 0
        // Predicated region
        $region101: #{tpu_custom_call.1} parent=71 // pred_check
          %p562 = pneg %p561
        $region102: #{tpu_custom_call.1} parent=71 // pred_check_branch
          %564 = sbr.rel (%p562) target = $region104
        $region103: #{tpu_custom_call.1} parent=71 // pred_region
          %v565 = vld [vmem:[%s491] sm:$0xff]
          %v566 = vld [vmem:[%s491 + $0x8] sm:$0xff]
          %567 = vst [vmem:[#allocation2] sm:$0xff] %v565
          %568 = vst [vmem:[#allocation2 + $0x8] sm:$0xff] %v566
        $region104: #{tpu_custom_call.1} parent=71 // pred_fallthru
          _
        %v569 = vld [vmem:[#allocation2] sm:$0xff]
        %v570 = vld [vmem:[#allocation2 + $0x8] sm:$0xff]
        %s571 = scalar_lea.vmem [#allocation6], %s38
        %v572 = vld [vmem:[%s571] sm:$0x1]
        %s573 = scalar_lea.vmem [#allocation8], %s38
        %v574 = vld [vmem:[%s573] sm:$0x1]
        %575 = vadd.xlane.f32.xlu0 %v569
        %v576 = vpop.xlane.xlu0 %575
        %577 = vadd.xlane.f32.xlu0 %v570
        %v578 = vpop.xlane.xlu0 %577
        %v579 = vrcp.pop 128.0
        %v580 = vmul.f32 %v576, %v579
        %v581 = vmul.f32 %v578, %v579
        %v582 = vsub.f32 %v569, %v580
        %v583 = vsub.f32 %v570, %v581
        %v584 = vmul.f32 %v582, %v582
        %v585 = vmul.f32 %v583, %v583
        %586 = vadd.xlane.f32.xlu0 %v584
        %v587 = vpop.xlane.xlu0 %586
        %588 = vadd.xlane.f32.xlu0 %v585
        %v589 = vpop.xlane.xlu0 %588
        %v590 = vmul.f32 %v587, %v579
        %v591 = vmul.f32 %v589, %v579
        %v592 = vadd.f32 %v590, 1e-07
        %v593 = vadd.f32 %v591, 1e-07
        %v594 = vrsqrt.pop %v592
        %v595 = vrsqrt.pop %v593
        %v596 = vmul.f32 %v582, %v594
        %v597 = vmul.f32 %v583, %v595
        %v599 = vlaneseq
        %v600 = vshrl.u32 %v599, 7
        %v601 = vsub.s32 0, %v600
        %v602 = vrot.slane %v572, %v601
        %v604 = vmul.f32 %v596, %v602
        %v605 = vmul.f32 %v597, %v602
        %v607 = vlaneseq
        %v608 = vshrl.u32 %v607, 7
        %v609 = vsub.s32 0, %v608
        %v610 = vrot.slane %v574, %v609
        %v612 = vadd.f32 %v604, %v610
        %v613 = vadd.f32 %v605, %v610
        %v614 = vpack.c.bf16 %v613, %v612
        %s615 = smul.u32 %s38, 48
        %s616 = smul.addr %s615, 4
        %s617 = scalar_lea.vmem [#allocation9], %s616
        %v618 = vld [vmem:[%s617] sm:$0xff]
        %v619 = vld [vmem:[%s617 + $0x8] sm:$0xf]
        %v620 = vld [vmem:[%s617 + $0xc] sm:$0xff]
        %v621 = vld [vmem:[%s617 + $0x14] sm:$0xf]
        %v622 = vld [vmem:[%s617 + $0x18] sm:$0xff]
        %v623 = vld [vmem:[%s617 + $0x20] sm:$0xf]
        %v624 = vld [vmem:[%s617 + $0x24] sm:$0xff]
        %v625 = vld [vmem:[%s617 + $0x2c] sm:$0xf]
        %v626 = vld [vmem:[%s617 + $0x30] sm:$0xff]
        %v627 = vld [vmem:[%s617 + $0x38] sm:$0xf]
        %v628 = vld [vmem:[%s617 + $0x3c] sm:$0xff]
        %v629 = vld [vmem:[%s617 + $0x44] sm:$0xf]
        %v630 = vld [vmem:[%s617 + $0x48] sm:$0xff]
        %v631 = vld [vmem:[%s617 + $0x50] sm:$0xf]
        %v632 = vld [vmem:[%s617 + $0x54] sm:$0xff]
        %v633 = vld [vmem:[%s617 + $0x5c] sm:$0xf]
        %v634 = vld [vmem:[%s617 + $0x60] sm:$0xff]
        %v635 = vld [vmem:[%s617 + $0x68] sm:$0xf]
        %v636 = vld [vmem:[%s617 + $0x6c] sm:$0xff]
        %v637 = vld [vmem:[%s617 + $0x74] sm:$0xf]
        %v638 = vld [vmem:[%s617 + $0x78] sm:$0xff]
        %v639 = vld [vmem:[%s617 + $0x80] sm:$0xf]
        %v640 = vld [vmem:[%s617 + $0x84] sm:$0xff]
        %v641 = vld [vmem:[%s617 + $0x8c] sm:$0xf]
        %v642 = vld [vmem:[%s617 + $0x90] sm:$0xff]
        %v643 = vld [vmem:[%s617 + $0x98] sm:$0xf]
        %v644 = vld [vmem:[%s617 + $0x9c] sm:$0xff]
        %v645 = vld [vmem:[%s617 + $0xa4] sm:$0xf]
        %v646 = vld [vmem:[%s617 + $0xa8] sm:$0xff]
        %v647 = vld [vmem:[%s617 + $0xb0] sm:$0xf]
        %v648 = vld [vmem:[%s617 + $0xb4] sm:$0xff]
        %v649 = vld [vmem:[%s617 + $0xbc] sm:$0xf]
        %s650 = smul.u32 %s38, 3
        %s651 = scalar_lea.vmem %s4, %s650
        %v652 = vld [vmem:[%s651] sm:$0x7]
        %v654 = vlaneseq
        %v655 = vshrl.u32 %v654, 7
        %v656 = vsub.s32 0, %v655
        %v657 = vrot.slane %v652, %v656
        %v658 = vlaneseq
        %v659 = vshrl.u32 %v658, 7
        %v660 = vsub.s32 1, %v659
        %v661 = vrot.slane %v652, %v660
        %v662 = vlaneseq
        %v663 = vshrl.u32 %v662, 7
        %v664 = vsub.s32 2, %v663
        %v665 = vrot.slane %v652, %v664
        %v701 = vunpack.c.l.b16 %v618
        %v702 = vunpack.c.h.b16 %v618
        %v703 = vunpack.c.l.b16 %v619
        %v704 = vunpack.c.l.b16 %v620
        %v705 = vunpack.c.h.b16 %v620
        %v706 = vunpack.c.l.b16 %v621
        %v707 = vunpack.c.l.b16 %v622
        %v708 = vunpack.c.h.b16 %v622
        %v709 = vunpack.c.l.b16 %v623
        %v710 = vunpack.c.l.b16 %v624
        %v711 = vunpack.c.h.b16 %v624
        %v712 = vunpack.c.l.b16 %v625
        %v713 = vunpack.c.l.b16 %v626
        %v714 = vunpack.c.h.b16 %v626
        %v715 = vunpack.c.l.b16 %v627
        %v716 = vunpack.c.l.b16 %v628
        %v717 = vunpack.c.h.b16 %v628
        %v718 = vunpack.c.l.b16 %v629
        %v719 = vunpack.c.l.b16 %v630
        %v720 = vunpack.c.h.b16 %v630
        %v721 = vunpack.c.l.b16 %v631
        %v722 = vunpack.c.l.b16 %v632
        %v723 = vunpack.c.h.b16 %v632
        %v724 = vunpack.c.l.b16 %v633
        %v725 = vunpack.c.l.b16 %v634
        %v726 = vunpack.c.h.b16 %v634
        %v727 = vunpack.c.l.b16 %v635
        %v728 = vunpack.c.l.b16 %v636
        %v729 = vunpack.c.h.b16 %v636
        %v730 = vunpack.c.l.b16 %v637
        %v731 = vunpack.c.l.b16 %v638
        %v732 = vunpack.c.h.b16 %v638
        %v733 = vunpack.c.l.b16 %v639
        %v734 = vunpack.c.l.b16 %v640
        %v735 = vunpack.c.h.b16 %v640
        %v736 = vunpack.c.l.b16 %v641
        %v737 = vunpack.c.l.b16 %v642
        %v738 = vunpack.c.h.b16 %v642
        %v739 = vunpack.c.l.b16 %v643
        %v740 = vunpack.c.l.b16 %v644
        %v741 = vunpack.c.h.b16 %v644
        %v742 = vunpack.c.l.b16 %v645
        %v743 = vunpack.c.l.b16 %v646
        %v744 = vunpack.c.h.b16 %v646
        %v745 = vunpack.c.l.b16 %v647
        %v746 = vunpack.c.l.b16 %v648
        %v747 = vunpack.c.h.b16 %v648
        %v748 = vunpack.c.l.b16 %v649
        %v749 = vpack.c.b16 %v704, %v701
        %v750 = vpack.c.b16 %v705, %v702
        %v751 = vpack.c.b16 %v706, %v703
        %v752 = vpack.c.b16 %v710, %v707
        %v753 = vpack.c.b16 %v711, %v708
        %v754 = vpack.c.b16 %v712, %v709
        %v755 = vpack.c.b16 %v716, %v713
        %v756 = vpack.c.b16 %v717, %v714
        %v757 = vpack.c.b16 %v718, %v715
        %v758 = vpack.c.b16 %v722, %v719
        %v759 = vpack.c.b16 %v723, %v720
        %v760 = vpack.c.b16 %v724, %v721
        %v761 = vpack.c.b16 %v728, %v725
        %v762 = vpack.c.b16 %v729, %v726
        %v763 = vpack.c.b16 %v730, %v727
        %v764 = vpack.c.b16 %v734, %v731
        %v765 = vpack.c.b16 %v735, %v732
        %v766 = vpack.c.b16 %v736, %v733
        %v767 = vpack.c.b16 %v740, %v737
        %v768 = vpack.c.b16 %v741, %v738
        %v769 = vpack.c.b16 %v742, %v739
        %v770 = vpack.c.b16 %v746, %v743
        %v771 = vpack.c.b16 %v747, %v744
        %v772 = vpack.c.b16 %v748, %v745
        %797 = vmatprep.subr.bf16.mxu0 %v750
        %798 = vmatpush1.bf16.msra.mxu0 %v749
        %799 = vmatprep.subr.bf16.mxu0 %v753
        %800 = vmatpush1.bf16.msra.mxu0 %v752
        %801 = vmatprep.subr.bf16.mxu0 %v756
        %802 = vmatpush1.bf16.msra.mxu0 %v755
        %803 = vmatprep.subr.bf16.mxu0 %v759
        %804 = vmatpush1.bf16.msra.mxu0 %v758
        %805 = vmatprep.subr.bf16.mxu0 %v762
        %806 = vmatpush1.bf16.msra.mxu0 %v761
        %807 = vmatprep.subr.bf16.mxu0 %v765
        %808 = vmatpush1.bf16.msra.mxu0 %v764
        %809 = vmatprep.subr.bf16.mxu0 %v768
        %810 = vmatpush1.bf16.msra.mxu0 %v767
        %811 = vmatprep.subr.bf16.mxu0 %v771
        %812 = vmatpush1.bf16.msra.mxu0 %v770
        %813 = vmatprep.subr.bf16.mxu0 0
        %814 = vmatpush1.bf16.msra.mxu0 0
        %815 = vmatprep.subr.bf16.mxu0 0
        %816 = vmatpush1.bf16.msra.mxu0 0
        %817 = vmatprep.subr.bf16.mxu0 0
        %818 = vmatpush1.bf16.msra.mxu0 0
        %819 = vmatprep.subr.bf16.mxu0 0
        %820 = vmatpush1.bf16.msra.mxu0 0
        %821 = vmatprep.subr.bf16.mxu0 0
        %822 = vmatpush1.bf16.msra.mxu0 0
        %823 = vmatprep.subr.bf16.mxu0 0
        %824 = vmatpush1.bf16.msra.mxu0 0
        %825 = vmatprep.subr.bf16.mxu0 0
        %826 = vmatpush1.bf16.msra.mxu0 0
        %827 = vmatprep.subr.bf16.mxu0 0
        %828 = vmatpush1.bf16.msra.mxu0 0
        %829 = vmatprep.mubr.bf16.mxu0 0
        %830 = vmatmul.mubr.bf16.gmra.mrb[0].mxu0 %v614
        %v831 = vpop.f32.mrb[0].mxu0
        %v832 = vadd.f32 %v657, %v831
        %v833 = vpop.f32.mrb[0].mxu0
        %v834 = vadd.f32 %v661, %v833
        %v835 = vpop.f32.mrb[0].mxu0
        %v836 = vadd.f32 %v657, %v835
        %v837 = vpop.f32.mrb[0].mxu0
        %v838 = vadd.f32 %v661, %v837
        %839 = vdwg.mxu0
        %840 = vmatprep.subr.bf16.mxu0 0
        %841 = vmatpush1.bf16.msra.mxu0 %v751
        %842 = vmatprep.subr.bf16.mxu0 0
        %843 = vmatpush1.bf16.msra.mxu0 %v754
        %844 = vmatprep.subr.bf16.mxu0 0
        %845 = vmatpush1.bf16.msra.mxu0 %v757
        %846 = vmatprep.subr.bf16.mxu0 0
        %847 = vmatpush1.bf16.msra.mxu0 %v760
        %848 = vmatprep.subr.bf16.mxu0 0
        %849 = vmatpush1.bf16.msra.mxu0 %v763
        %850 = vmatprep.subr.bf16.mxu0 0
        %851 = vmatpush1.bf16.msra.mxu0 %v766
        %852 = vmatprep.subr.bf16.mxu0 0
        %853 = vmatpush1.bf16.msra.mxu0 %v769
        %854 = vmatprep.subr.bf16.mxu0 0
        %855 = vmatpush1.bf16.msra.mxu0 %v772
        %856 = vmatprep.subr.bf16.mxu0 0
        %857 = vmatpush1.bf16.msra.mxu0 0
        %858 = vmatprep.subr.bf16.mxu0 0
        %859 = vmatpush1.bf16.msra.mxu0 0
        %860 = vmatprep.subr.bf16.mxu0 0
        %861 = vmatpush1.bf16.msra.mxu0 0
        %862 = vmatprep.subr.bf16.mxu0 0
        %863 = vmatpush1.bf16.msra.mxu0 0
        %864 = vmatprep.subr.bf16.mxu0 0
        %865 = vmatpush1.bf16.msra.mxu0 0
        %866 = vmatprep.subr.bf16.mxu0 0
        %867 = vmatpush1.bf16.msra.mxu0 0
        %868 = vmatprep.subr.bf16.mxu0 0
        %869 = vmatpush1.bf16.msra.mxu0 0
        %870 = vmatprep.subr.bf16.mxu0 0
        %871 = vmatpush1.bf16.msra.mxu0 0
        %872 = vmatprep.mubr.bf16.mxu0 0
        %873 = vmatmul.mubr.bf16.gmra.mrb[0].mxu0 %v614
        %v874 = vpop.f32.mrb[0].mxu0
        %v875 = vadd.f32 %v665, %v874
        %v876 = vpop.f32.mrb[0].mxu0
        %v877 = vpop.f32.mrb[0].mxu0
        %v878 = vadd.f32 %v665, %v877
        %v879 = vpop.f32.mrb[0].mxu0
        %880 = vdwg.mxu0
        %v881 = vpack.c.bf16 %v832, %v832
        %v882 = vpack.c.bf16 %v834, %v834
        %v883 = vpack.c.bf16 %v875, %v875
        %v884 = vpack.c.bf16 %v836, %v836
        %v885 = vpack.c.bf16 %v838, %v838
        %v886 = vpack.c.bf16 %v878, %v878
        %vm887 = vcmask 261120
        %v889 = vsel %vm887, %v881, 0
        %v892 = vsel %vm887, %v882, 0
        %894 = vmatprep.subr.bf16.mxu0 0
        %895 = vmatpush1.bf16.xpose.msra.mxu0 %v892
        %896 = vmatprep.subr.bf16.mxu0 0
        %897 = vmatpush1.bf16.xpose.msra.mxu0 0
        %898 = vmatprep.subr.bf16.mxu0 0
        %899 = vmatpush1.bf16.xpose.msra.mxu0 0
        %900 = vmatprep.subr.bf16.mxu0 0
        %901 = vmatpush1.bf16.xpose.msra.mxu0 0
        %902 = vmatprep.subr.bf16.mxu0 0
        %903 = vmatpush1.bf16.xpose.msra.mxu0 0
        %904 = vmatprep.subr.bf16.mxu0 0
        %905 = vmatpush1.bf16.xpose.msra.mxu0 0
        %906 = vmatprep.subr.bf16.mxu0 0
        %907 = vmatpush1.bf16.xpose.msra.mxu0 0
        %908 = vmatprep.subr.bf16.mxu0 0
        %909 = vmatpush1.bf16.xpose.msra.mxu0 0
        %910 = vmatprep.subr.bf16.mxu0 0
        %911 = vmatpush1.bf16.xpose.msra.mxu0 0
        %912 = vmatprep.subr.bf16.mxu0 0
        %913 = vmatpush1.bf16.xpose.msra.mxu0 0
        %914 = vmatprep.subr.bf16.mxu0 0
        %915 = vmatpush1.bf16.xpose.msra.mxu0 0
        %916 = vmatprep.subr.bf16.mxu0 0
        %917 = vmatpush1.bf16.xpose.msra.mxu0 0
        %918 = vmatprep.subr.bf16.mxu0 0
        %919 = vmatpush1.bf16.xpose.msra.mxu0 0
        %920 = vmatprep.subr.bf16.mxu0 0
        %921 = vmatpush1.bf16.xpose.msra.mxu0 0
        %922 = vmatprep.subr.bf16.mxu0 0
        %923 = vmatpush1.bf16.xpose.msra.mxu0 0
        %924 = vmatprep.subr.bf16.mxu0 0
        %925 = vmatpush1.bf16.xpose.msra.mxu0 0
        %926 = vmatprep.mubr.bf16.mxu0 0
        %927 = vmatmul.mubr.bf16.gmra.mrb[0].mxu0 %v889
        %v928 = vpop.f32.mrb[0].mxu0
        %v929 = vadd.f32 0.0, %v928
        %v930 = vpop.f32.mrb[0].mxu0
        %v931 = vpop.f32.mrb[0].mxu0
        %v932 = vpop.f32.mrb[0].mxu0
        %933 = vdwg.mxu0
        %v935 = vsel %vm887, %v884, 0
        %v938 = vsel %vm887, %v885, 0
        %940 = vmatprep.subr.bf16.mxu0 0
        %941 = vmatpush1.bf16.xpose.msra.mxu0 %v938
        %942 = vmatprep.subr.bf16.mxu0 0
        %943 = vmatpush1.bf16.xpose.msra.mxu0 0
        %944 = vmatprep.subr.bf16.mxu0 0
        %945 = vmatpush1.bf16.xpose.msra.mxu0 0
        %946 = vmatprep.subr.bf16.mxu0 0
        %947 = vmatpush1.bf16.xpose.msra.mxu0 0
        %948 = vmatprep.subr.bf16.mxu0 0
        %949 = vmatpush1.bf16.xpose.msra.mxu0 0
        %950 = vmatprep.subr.bf16.mxu0 0
        %951 = vmatpush1.bf16.xpose.msra.mxu0 0
        %952 = vmatprep.subr.bf16.mxu0 0
        %953 = vmatpush1.bf16.xpose.msra.mxu0 0
        %954 = vmatprep.subr.bf16.mxu0 0
        %955 = vmatpush1.bf16.xpose.msra.mxu0 0
        %956 = vmatprep.subr.bf16.mxu0 0
        %957 = vmatpush1.bf16.xpose.msra.mxu0 0
        %958 = vmatprep.subr.bf16.mxu0 0
        %959 = vmatpush1.bf16.xpose.msra.mxu0 0
        %960 = vmatprep.subr.bf16.mxu0 0
        %961 = vmatpush1.bf16.xpose.msra.mxu0 0
        %962 = vmatprep.subr.bf16.mxu0 0
        %963 = vmatpush1.bf16.xpose.msra.mxu0 0
        %964 = vmatprep.subr.bf16.mxu0 0
        %965 = vmatpush1.bf16.xpose.msra.mxu0 0
        %966 = vmatprep.subr.bf16.mxu0 0
        %967 = vmatpush1.bf16.xpose.msra.mxu0 0
        %968 = vmatprep.subr.bf16.mxu0 0
        %969 = vmatpush1.bf16.xpose.msra.mxu0 0
        %970 = vmatprep.subr.bf16.mxu0 0
        %971 = vmatpush1.bf16.xpose.msra.mxu0 0
        %972 = vmatprep.mubr.bf16.mxu0 0
        %973 = vmatmul.mubr.bf16.gmra.mrb[0].mxu0 %v935
        %v974 = vpop.f32.mrb[0].mxu0
        %v975 = vadd.f32 0.0, %v974
        %v976 = vpop.f32.mrb[0].mxu0
        %v977 = vpop.f32.mrb[0].mxu0
        %v978 = vpop.f32.mrb[0].mxu0
        %979 = vdwg.mxu0
        %v980 = vmul.f32 %v929, 0.17677669
        %v981 = vmul.f32 %v975, 0.17677669
        %vm982 = vcmask 64512
        %v983 = vsel %vm982, %v980, -inf
        %984 = vmax.xlane.f32.xlu0 %v983
        %v985 = vpop.xlane.xlu0 %984
        %v986 = vsel %vm982, %v981, -inf
        %987 = vmax.xlane.f32.xlu0 %v986
        %v988 = vpop.xlane.xlu0 %987
        %v989 = vsub.f32 %v980, %v985
        %v990 = vsub.f32 %v981, %v988
        %v991 = vmul.f32 %v989, 1.442695
        %v992 = vpow.pop %v991
        %v993 = vmul.f32 %v990, 1.442695
        %v994 = vpow.pop %v993
        %v995 = vsel %vm982, %v992, 0.0
        %996 = vadd.xlane.f32.xlu0 %v995
        %v997 = vpop.xlane.xlu0 %996
        %v998 = vsel %vm982, %v994, 0.0
        %999 = vadd.xlane.f32.xlu0 %v998
        %v1000 = vpop.xlane.xlu0 %999
        %v1001 = vrcp.pop %v997
        %v1002 = vrcp.pop %v1000
        %v1003 = vmul.f32 %v992, %v1001
        %v1004 = vmul.f32 %v994, %v1002
        %v1005 = vpack.c.bf16 %v1003, %v1003
        %v1006 = vpack.c.bf16 %v1004, %v1004
        %v1008 = vsel %vm982, %v1005, 0
        %vm1010 = vcmask 1043456
        %v1012 = vsel %vm1010, %v883, 0
        %1014 = vmatprep.subr.bf16.mxu0 0
        %1015 = vmatpush1.bf16.msra.mxu0 %v1012
        %1016 = vmatprep.subr.bf16.mxu0 0
        %1017 = vmatpush1.bf16.msra.mxu0 0
        %1018 = vmatprep.subr.bf16.mxu0 0
        %1019 = vmatpush1.bf16.msra.mxu0 0
        %1020 = vmatprep.subr.bf16.mxu0 0
        %1021 = vmatpush1.bf16.msra.mxu0 0
        %1022 = vmatprep.subr.bf16.mxu0 0
        %1023 = vmatpush1.bf16.msra.mxu0 0
        %1024 = vmatprep.subr.bf16.mxu0 0
        %1025 = vmatpush1.bf16.msra.mxu0 0
        %1026 = vmatprep.subr.bf16.mxu0 0
        %1027 = vmatpush1.bf16.msra.mxu0 0
        %1028 = vmatprep.subr.bf16.mxu0 0
        %1029 = vmatpush1.bf16.msra.mxu0 0
        %1030 = vmatprep.subr.bf16.mxu0 0
        %1031 = vmatpush1.bf16.msra.mxu0 0
        %1032 = vmatprep.subr.bf16.mxu0 0
        %1033 = vmatpush1.bf16.msra.mxu0 0
        %1034 = vmatprep.subr.bf16.mxu0 0
        %1035 = vmatpush1.bf16.msra.mxu0 0
        %1036 = vmatprep.subr.bf16.mxu0 0
        %1037 = vmatpush1.bf16.msra.mxu0 0
        %1038 = vmatprep.subr.bf16.mxu0 0
        %1039 = vmatpush1.bf16.msra.mxu0 0
        %1040 = vmatprep.subr.bf16.mxu0 0
        %1041 = vmatpush1.bf16.msra.mxu0 0
        %1042 = vmatprep.subr.bf16.mxu0 0
        %1043 = vmatpush1.bf16.msra.mxu0 0
        %1044 = vmatprep.subr.bf16.mxu0 0
        %1045 = vmatpush1.bf16.msra.mxu0 0
        %1046 = vmatprep.mubr.bf16.mxu0 0
        %1047 = vmatmul.mubr.bf16.gmra.mrb[0].mxu0 %v1008
        %v1048 = vpop.f32.mrb[0].mxu0
        %v1049 = vadd.f32 0.0, %v1048
        %v1050 = vpop.f32.mrb[0].mxu0
        %v1051 = vpop.f32.mrb[0].mxu0
        %v1052 = vpop.f32.mrb[0].mxu0
        %1053 = vdwg.mxu0
        %v1055 = vsel %vm982, %v1006, 0
        %v1058 = vsel %vm1010, %v886, 0
        %1060 = vmatprep.subr.bf16.mxu0 0
        %1061 = vmatpush1.bf16.msra.mxu0 %v1058
        %1062 = vmatprep.subr.bf16.mxu0 0
        %1063 = vmatpush1.bf16.msra.mxu0 0
        %1064 = vmatprep.subr.bf16.mxu0 0
        %1065 = vmatpush1.bf16.msra.mxu0 0
        %1066 = vmatprep.subr.bf16.mxu0 0
        %1067 = vmatpush1.bf16.msra.mxu0 0
        %1068 = vmatprep.subr.bf16.mxu0 0
        %1069 = vmatpush1.bf16.msra.mxu0 0
        %1070 = vmatprep.subr.bf16.mxu0 0
        %1071 = vmatpush1.bf16.msra.mxu0 0
        %1072 = vmatprep.subr.bf16.mxu0 0
        %1073 = vmatpush1.bf16.msra.mxu0 0
        %1074 = vmatprep.subr.bf16.mxu0 0
        %1075 = vmatpush1.bf16.msra.mxu0 0
        %1076 = vmatprep.subr.bf16.mxu0 0
        %1077 = vmatpush1.bf16.msra.mxu0 0
        %1078 = vmatprep.subr.bf16.mxu0 0
        %1079 = vmatpush1.bf16.msra.mxu0 0
        %1080 = vmatprep.subr.bf16.mxu0 0
        %1081 = vmatpush1.bf16.msra.mxu0 0
        %1082 = vmatprep.subr.bf16.mxu0 0
        %1083 = vmatpush1.bf16.msra.mxu0 0
        %1084 = vmatprep.subr.bf16.mxu0 0
        %1085 = vmatpush1.bf16.msra.mxu0 0
        %1086 = vmatprep.subr.bf16.mxu0 0
        %1087 = vmatpush1.bf16.msra.mxu0 0
        %1088 = vmatprep.subr.bf16.mxu0 0
        %1089 = vmatpush1.bf16.msra.mxu0 0
        %1090 = vmatprep.subr.bf16.mxu0 0
        %1091 = vmatpush1.bf16.msra.mxu0 0
        %1092 = vmatprep.mubr.bf16.mxu0 0
        %1093 = vmatmul.mubr.bf16.gmra.mrb[0].mxu0 %v1055
        %v1094 = vpop.f32.mrb[0].mxu0
        %v1095 = vadd.f32 0.0, %v1094
        %v1096 = vpop.f32.mrb[0].mxu0
        %v1097 = vpop.f32.mrb[0].mxu0
        %v1098 = vpop.f32.mrb[0].mxu0
        %1099 = vdwg.mxu0
        %v1100 = vpack.c.bf16 %v1095, %v1049
        %s1101 = smul.u32 %s38, 16
        %s1102 = smul.addr %s1101, 4
        %s1103 = scalar_lea.vmem [#allocation11], %s1102
        %v1104 = vld [vmem:[%s1103] sm:$0xf]
        %v1105 = vld [vmem:[%s1103 + $0x4] sm:$0xf]
        %v1106 = vld [vmem:[%s1103 + $0x8] sm:$0xf]
        %v1107 = vld [vmem:[%s1103 + $0xc] sm:$0xf]
        %1109 = vrot.lane.b32.xlu0 %v881, 96
        %v1110 = vpop.permute.xlu0 %1109
        %1112 = vrot.lane.b32.xlu0 %v882, 96
        %v1113 = vpop.permute.xlu0 %1112
        %v1115 = vsel %vm887, %v1110, 0
        %v1118 = vsel %vm887, %v1113, 0
        %1120 = vmatprep.subr.bf16.mxu0 0
        %1121 = vmatpush1.bf16.xpose.msra.mxu0 %v1118
        %1122 = vmatprep.subr.bf16.mxu0 0
        %1123 = vmatpush1.bf16.xpose.msra.mxu0 0
        %1124 = vmatprep.subr.bf16.mxu0 0
        %1125 = vmatpush1.bf16.xpose.msra.mxu0 0
        %1126 = vmatprep.subr.bf16.mxu0 0
        %1127 = vmatpush1.bf16.xpose.msra.mxu0 0
        %1128 = vmatprep.subr.bf16.mxu0 0
        %1129 = vmatpush1.bf16.xpose.msra.mxu0 0
        %1130 = vmatprep.subr.bf16.mxu0 0
        %1131 = vmatpush1.bf16.xpose.msra.mxu0 0
        %1132 = vmatprep.subr.bf16.mxu0 0
        %1133 = vmatpush1.bf16.xpose.msra.mxu0 0
        %1134 = vmatprep.subr.bf16.mxu0 0
        %1135 = vmatpush1.bf16.xpose.msra.mxu0 0
        %1136 = vmatprep.subr.bf16.mxu0 0
        %1137 = vmatpush1.bf16.xpose.msra.mxu0 0
        %1138 = vmatprep.subr.bf16.mxu0 0
        %1139 = vmatpush1.bf16.xpose.msra.mxu0 0
        %1140 = vmatprep.subr.bf16.mxu0 0
        %1141 = vmatpush1.bf16.xpose.msra.mxu0 0
        %1142 = vmatprep.subr.bf16.mxu0 0
        %1143 = vmatpush1.bf16.xpose.msra.mxu0 0
        %1144 = vmatprep.subr.bf16.mxu0 0
        %1145 = vmatpush1.bf16.xpose.msra.mxu0 0
        %1146 = vmatprep.subr.bf16.mxu0 0
        %1147 = vmatpush1.bf16.xpose.msra.mxu0 0
        %1148 = vmatprep.subr.bf16.mxu0 0
        %1149 = vmatpush1.bf16.xpose.msra.mxu0 0
        %1150 = vmatprep.subr.bf16.mxu0 0
        %1151 = vmatpush1.bf16.xpose.msra.mxu0 0
        %1152 = vmatprep.mubr.bf16.mxu0 0
        %1153 = vmatmul.mubr.bf16.gmra.mrb[0].mxu0 %v1115
        %v1154 = vpop.f32.mrb[0].mxu0
        %v1155 = vadd.f32 0.0, %v1154
        %v1156 = vpop.f32.mrb[0].mxu0
        %v1157 = vpop.f32.mrb[0].mxu0
        %v1158 = vpop.f32.mrb[0].mxu0
        %1159 = vdwg.mxu0
        %1161 = vrot.lane.b32.xlu0 %v884, 96
        %v1162 = vpop.permute.xlu0 %1161
        %1164 = vrot.lane.b32.xlu0 %v885, 96
        %v1165 = vpop.permute.xlu0 %1164
        %v1167 = vsel %vm887, %v1162, 0
        %v1170 = vsel %vm887, %v1165, 0
        %1172 = vmatprep.subr.bf16.mxu0 0
        %1173 = vmatpush1.bf16.xpose.msra.mxu0 %v1170
        %1174 = vmatprep.subr.bf16.mxu0 0
        %1175 = vmatpush1.bf16.xpose.msra.mxu0 0
        %1176 = vmatprep.subr.bf16.mxu0 0
        %1177 = vmatpush1.bf16.xpose.msra.mxu0 0
        %1178 = vmatprep.subr.bf16.mxu0 0
        %1179 = vmatpush1.bf16.xpose.msra.mxu0 0
        %1180 = vmatprep.subr.bf16.mxu0 0
        %1181 = vmatpush1.bf16.xpose.msra.mxu0 0
        %1182 = vmatprep.subr.bf16.mxu0 0
        %1183 = vmatpush1.bf16.xpose.msra.mxu0 0
        %1184 = vmatprep.subr.bf16.mxu0 0
        %1185 = vmatpush1.bf16.xpose.msra.mxu0 0
        %1186 = vmatprep.subr.bf16.mxu0 0
        %1187 = vmatpush1.bf16.xpose.msra.mxu0 0
        %1188 = vmatprep.subr.bf16.mxu0 0
        %1189 = vmatpush1.bf16.xpose.msra.mxu0 0
        %1190 = vmatprep.subr.bf16.mxu0 0
        %1191 = vmatpush1.bf16.xpose.msra.mxu0 0
        %1192 = vmatprep.subr.bf16.mxu0 0
        %1193 = vmatpush1.bf16.xpose.msra.mxu0 0
        %1194 = vmatprep.subr.bf16.mxu0 0
        %1195 = vmatpush1.bf16.xpose.msra.mxu0 0
        %1196 = vmatprep.subr.bf16.mxu0 0
        %1197 = vmatpush1.bf16.xpose.msra.mxu0 0
        %1198 = vmatprep.subr.bf16.mxu0 0
        %1199 = vmatpush1.bf16.xpose.msra.mxu0 0
        %1200 = vmatprep.subr.bf16.mxu0 0
        %1201 = vmatpush1.bf16.xpose.msra.mxu0 0
        %1202 = vmatprep.subr.bf16.mxu0 0
        %1203 = vmatpush1.bf16.xpose.msra.mxu0 0
        %1204 = vmatprep.mubr.bf16.mxu0 0
        %1205 = vmatmul.mubr.bf16.gmra.mrb[0].mxu0 %v1167
        %v1206 = vpop.f32.mrb[0].mxu0
        %v1207 = vadd.f32 0.0, %v1206
        %v1208 = vpop.f32.mrb[0].mxu0
        %v1209 = vpop.f32.mrb[0].mxu0
        %v1210 = vpop.f32.mrb[0].mxu0
        %1211 = vdwg.mxu0
        %v1212 = vmul.f32 %v1155, 0.17677669
        %v1213 = vmul.f32 %v1207, 0.17677669
        %v1214 = vsel %vm982, %v1212, -inf
        %1215 = vmax.xlane.f32.xlu0 %v1214
        %v1216 = vpop.xlane.xlu0 %1215
        %v1217 = vsel %vm982, %v1213, -inf
        %1218 = vmax.xlane.f32.xlu0 %v1217
        %v1219 = vpop.xlane.xlu0 %1218
        %v1220 = vsub.f32 %v1212, %v1216
        %v1221 = vsub.f32 %v1213, %v1219
        %v1222 = vmul.f32 %v1220, 1.442695
        %v1223 = vpow.pop %v1222
        %v1224 = vmul.f32 %v1221, 1.442695
        %v1225 = vpow.pop %v1224
        %v1226 = vsel %vm982, %v1223, 0.0
        %1227 = vadd.xlane.f32.xlu0 %v1226
        %v1228 = vpop.xlane.xlu0 %1227
        %v1229 = vsel %vm982, %v1225, 0.0
        %1230 = vadd.xlane.f32.xlu0 %v1229
        %v1231 = vpop.xlane.xlu0 %1230
        %v1232 = vrcp.pop %v1228
        %v1233 = vrcp.pop %v1231
        %v1234 = vmul.f32 %v1223, %v1232
        %v1235 = vmul.f32 %v1225, %v1233
        %v1236 = vpack.c.bf16 %v1234, %v1234
        %v1237 = vpack.c.bf16 %v1235, %v1235
        %1239 = vrot.lane.b32.xlu0 %v883, 96
        %v1240 = vpop.permute.xlu0 %1239
        %v1242 = vsel %vm982, %v1236, 0
        %v1245 = vsel %vm1010, %v1240, 0
        %1247 = vmatprep.subr.bf16.mxu0 0
        %1248 = vmatpush1.bf16.msra.mxu0 %v1245
        %1249 = vmatprep.subr.bf16.mxu0 0
        %1250 = vmatpush1.bf16.msra.mxu0 0
        %1251 = vmatprep.subr.bf16.mxu0 0
        %1252 = vmatpush1.bf16.msra.mxu0 0
        %1253 = vmatprep.subr.bf16.mxu0 0
        %1254 = vmatpush1.bf16.msra.mxu0 0
        %1255 = vmatprep.subr.bf16.mxu0 0
        %1256 = vmatpush1.bf16.msra.mxu0 0
        %1257 = vmatprep.subr.bf16.mxu0 0
        %1258 = vmatpush1.bf16.msra.mxu0 0
        %1259 = vmatprep.subr.bf16.mxu0 0
        %1260 = vmatpush1.bf16.msra.mxu0 0
        %1261 = vmatprep.subr.bf16.mxu0 0
        %1262 = vmatpush1.bf16.msra.mxu0 0
        %1263 = vmatprep.subr.bf16.mxu0 0
        %1264 = vmatpush1.bf16.msra.mxu0 0
        %1265 = vmatprep.subr.bf16.mxu0 0
        %1266 = vmatpush1.bf16.msra.mxu0 0
        %1267 = vmatprep.subr.bf16.mxu0 0
        %1268 = vmatpush1.bf16.msra.mxu0 0
        %1269 = vmatprep.subr.bf16.mxu0 0
        %1270 = vmatpush1.bf16.msra.mxu0 0
        %1271 = vmatprep.subr.bf16.mxu0 0
        %1272 = vmatpush1.bf16.msra.mxu0 0
        %1273 = vmatprep.subr.bf16.mxu0 0
        %1274 = vmatpush1.bf16.msra.mxu0 0
        %1275 = vmatprep.subr.bf16.mxu0 0
        %1276 = vmatpush1.bf16.msra.mxu0 0
        %1277 = vmatprep.subr.bf16.mxu0 0
        %1278 = vmatpush1.bf16.msra.mxu0 0
        %1279 = vmatprep.mubr.bf16.mxu0 0
        %1280 = vmatmul.mubr.bf16.gmra.mrb[0].mxu0 %v1242
        %v1281 = vpop.f32.mrb[0].mxu0
        %v1282 = vadd.f32 0.0, %v1281
        %v1283 = vpop.f32.mrb[0].mxu0
        %v1284 = vpop.f32.mrb[0].mxu0
        %v1285 = vpop.f32.mrb[0].mxu0
        %1286 = vdwg.mxu0
        %1288 = vrot.lane.b32.xlu0 %v886, 96
        %v1289 = vpop.permute.xlu0 %1288
        %v1291 = vsel %vm982, %v1237, 0
        %v1294 = vsel %vm1010, %v1289, 0
        %1296 = vmatprep.subr.bf16.mxu0 0
        %1297 = vmatpush1.bf16.msra.mxu0 %v1294
        %1298 = vmatprep.subr.bf16.mxu0 0
        %1299 = vmatpush1.bf16.msra.mxu0 0
        %1300 = vmatprep.subr.bf16.mxu0 0
        %1301 = vmatpush1.bf16.msra.mxu0 0
        %1302 = vmatprep.subr.bf16.mxu0 0
        %1303 = vmatpush1.bf16.msra.mxu0 0
        %1304 = vmatprep.subr.bf16.mxu0 0
        %1305 = vmatpush1.bf16.msra.mxu0 0
        %1306 = vmatprep.subr.bf16.mxu0 0
        %1307 = vmatpush1.bf16.msra.mxu0 0
        %1308 = vmatprep.subr.bf16.mxu0 0
        %1309 = vmatpush1.bf16.msra.mxu0 0
        %1310 = vmatprep.subr.bf16.mxu0 0
        %1311 = vmatpush1.bf16.msra.mxu0 0
        %1312 = vmatprep.subr.bf16.mxu0 0
        %1313 = vmatpush1.bf16.msra.mxu0 0
        %1314 = vmatprep.subr.bf16.mxu0 0
        %1315 = vmatpush1.bf16.msra.mxu0 0
        %1316 = vmatprep.subr.bf16.mxu0 0
        %1317 = vmatpush1.bf16.msra.mxu0 0
        %1318 = vmatprep.subr.bf16.mxu0 0
        %1319 = vmatpush1.bf16.msra.mxu0 0
        %1320 = vmatprep.subr.bf16.mxu0 0
        %1321 = vmatpush1.bf16.msra.mxu0 0
        %1322 = vmatprep.subr.bf16.mxu0 0
        %1323 = vmatpush1.bf16.msra.mxu0 0
        %1324 = vmatprep.subr.bf16.mxu0 0
        %1325 = vmatpush1.bf16.msra.mxu0 0
        %1326 = vmatprep.subr.bf16.mxu0 0
        %1327 = vmatpush1.bf16.msra.mxu0 0
        %1328 = vmatprep.mubr.bf16.mxu0 0
        %1329 = vmatmul.mubr.bf16.gmra.mrb[0].mxu0 %v1291
        %v1330 = vpop.f32.mrb[0].mxu0
        %v1331 = vadd.f32 0.0, %v1330
        %v1332 = vpop.f32.mrb[0].mxu0
        %v1333 = vpop.f32.mrb[0].mxu0
        %v1334 = vpop.f32.mrb[0].mxu0
        %1335 = vdwg.mxu0
        %v1336 = vpack.c.bf16 %v1331, %v1282
        %s1337 = sadd.s32 4, %s1101
        %s1338 = smul.addr %s1337, 4
        %s1339 = scalar_lea.vmem [#allocation11], %s1338
        %v1340 = vld [vmem:[%s1339] sm:$0xf]
        %v1341 = vld [vmem:[%s1339 + $0x4] sm:$0xf]
        %v1342 = vld [vmem:[%s1339 + $0x8] sm:$0xf]
        %v1343 = vld [vmem:[%s1339 + $0xc] sm:$0xf]
        %v1348 = vunpack.c.l.b16 %v1340
        %v1349 = vunpack.c.l.b16 %v1341
        %v1350 = vunpack.c.l.b16 %v1342
        %v1351 = vunpack.c.l.b16 %v1343
        %v1352 = vpack.c.b16 %v1349, %v1348
        %v1353 = vpack.c.b16 %v1351, %v1350
        %v1357 = vsel %vm887, %v1336, 0
        %1359 = vmatprep.subr.bf16.mxu0 0
        %1360 = vmatpush1.bf16.msra.mxu0 %v1352
        %1361 = vmatprep.subr.bf16.mxu0 0
        %1362 = vmatpush1.bf16.msra.mxu0 %v1353
        %1363 = vmatprep.subr.bf16.mxu0 0
        %1364 = vmatpush1.bf16.msra.mxu0 0
        %1365 = vmatprep.subr.bf16.mxu0 0
        %1366 = vmatpush1.bf16.msra.mxu0 0
        %1367 = vmatprep.subr.bf16.mxu0 0
        %1368 = vmatpush1.bf16.msra.mxu0 0
        %1369 = vmatprep.subr.bf16.mxu0 0
        %1370 = vmatpush1.bf16.msra.mxu0 0
        %1371 = vmatprep.subr.bf16.mxu0 0
        %1372 = vmatpush1.bf16.msra.mxu0 0
        %1373 = vmatprep.subr.bf16.mxu0 0
        %1374 = vmatpush1.bf16.msra.mxu0 0
        %1375 = vmatprep.subr.bf16.mxu0 0
        %1376 = vmatpush1.bf16.msra.mxu0 0
        %1377 = vmatprep.subr.bf16.mxu0 0
        %1378 = vmatpush1.bf16.msra.mxu0 0
        %1379 = vmatprep.subr.bf16.mxu0 0
        %1380 = vmatpush1.bf16.msra.mxu0 0
        %1381 = vmatprep.subr.bf16.mxu0 0
        %1382 = vmatpush1.bf16.msra.mxu0 0
        %1383 = vmatprep.subr.bf16.mxu0 0
        %1384 = vmatpush1.bf16.msra.mxu0 0
        %1385 = vmatprep.subr.bf16.mxu0 0
        %1386 = vmatpush1.bf16.msra.mxu0 0
        %1387 = vmatprep.subr.bf16.mxu0 0
        %1388 = vmatpush1.bf16.msra.mxu0 0
        %1389 = vmatprep.subr.bf16.mxu0 0
        %1390 = vmatpush1.bf16.msra.mxu0 0
        %1391 = vmatprep.mubr.bf16.mxu0 0
        %1392 = vmatmul.mubr.bf16.gmra.mrb[0].mxu0 %v1357
        %v1393 = vpop.f32.mrb[0].mxu0
        %v1394 = vadd.f32 0.0, %v1393
        %v1395 = vpop.f32.mrb[0].mxu0
        %v1396 = vpop.f32.mrb[0].mxu0
        %v1397 = vadd.f32 0.0, %v1396
        %v1398 = vpop.f32.mrb[0].mxu0
        %1399 = vdwg.mxu0
        %v1404 = vunpack.c.l.b16 %v1104
        %v1405 = vunpack.c.l.b16 %v1105
        %v1406 = vunpack.c.l.b16 %v1106
        %v1407 = vunpack.c.l.b16 %v1107
        %v1408 = vpack.c.b16 %v1405, %v1404
        %v1409 = vpack.c.b16 %v1407, %v1406
        %v1413 = vsel %vm887, %v1100, 0
        %1415 = vmatprep.subr.bf16.mxu0 0
        %1416 = vmatpush1.bf16.msra.mxu0 %v1408
        %1417 = vmatprep.subr.bf16.mxu0 0
        %1418 = vmatpush1.bf16.msra.mxu0 %v1409
        %1419 = vmatprep.subr.bf16.mxu0 0
        %1420 = vmatpush1.bf16.msra.mxu0 0
        %1421 = vmatprep.subr.bf16.mxu0 0
        %1422 = vmatpush1.bf16.msra.mxu0 0
        %1423 = vmatprep.subr.bf16.mxu0 0
        %1424 = vmatpush1.bf16.msra.mxu0 0
        %1425 = vmatprep.subr.bf16.mxu0 0
        %1426 = vmatpush1.bf16.msra.mxu0 0
        %1427 = vmatprep.subr.bf16.mxu0 0
        %1428 = vmatpush1.bf16.msra.mxu0 0
        %1429 = vmatprep.subr.bf16.mxu0 0
        %1430 = vmatpush1.bf16.msra.mxu0 0
        %1431 = vmatprep.subr.bf16.mxu0 0
        %1432 = vmatpush1.bf16.msra.mxu0 0
        %1433 = vmatprep.subr.bf16.mxu0 0
        %1434 = vmatpush1.bf16.msra.mxu0 0
        %1435 = vmatprep.subr.bf16.mxu0 0
        %1436 = vmatpush1.bf16.msra.mxu0 0
        %1437 = vmatprep.subr.bf16.mxu0 0
        %1438 = vmatpush1.bf16.msra.mxu0 0
        %1439 = vmatprep.subr.bf16.mxu0 0
        %1440 = vmatpush1.bf16.msra.mxu0 0
        %1441 = vmatprep.subr.bf16.mxu0 0
        %1442 = vmatpush1.bf16.msra.mxu0 0
        %1443 = vmatprep.subr.bf16.mxu0 0
        %1444 = vmatpush1.bf16.msra.mxu0 0
        %1445 = vmatprep.subr.bf16.mxu0 0
        %1446 = vmatpush1.bf16.msra.mxu0 0
        %1447 = vmatprep.mubr.bf16.mxu0 0
        %1448 = vmatmul.mubr.bf16.gmra.mrb[0].mxu0 %v1413
        %v1449 = vpop.f32.mrb[0].mxu0
        %v1450 = vadd.f32 %v1394, %v1449
        %v1451 = vpop.f32.mrb[0].mxu0
        %v1452 = vpop.f32.mrb[0].mxu0
        %v1453 = vadd.f32 %v1397, %v1452
        %v1454 = vpop.f32.mrb[0].mxu0
        %1455 = vdwg.mxu0
        %1456 = vrot.lane.b32.xlu0 %v881, 64
        %v1457 = vpop.permute.xlu0 %1456
        %1458 = vrot.lane.b32.xlu0 %v882, 64
        %v1459 = vpop.permute.xlu0 %1458
        %v1461 = vsel %vm887, %v1457, 0
        %v1464 = vsel %vm887, %v1459, 0
        %1466 = vmatprep.subr.bf16.mxu0 0
        %1467 = vmatpush1.bf16.xpose.msra.mxu0 %v1464
        %1468 = vmatprep.subr.bf16.mxu0 0
        %1469 = vmatpush1.bf16.xpose.msra.mxu0 0
        %1470 = vmatprep.subr.bf16.mxu0 0
        %1471 = vmatpush1.bf16.xpose.msra.mxu0 0
        %1472 = vmatprep.subr.bf16.mxu0 0
        %1473 = vmatpush1.bf16.xpose.msra.mxu0 0
        %1474 = vmatprep.subr.bf16.mxu0 0
        %1475 = vmatpush1.bf16.xpose.msra.mxu0 0
        %1476 = vmatprep.subr.bf16.mxu0 0
        %1477 = vmatpush1.bf16.xpose.msra.mxu0 0
        %1478 = vmatprep.subr.bf16.mxu0 0
        %1479 = vmatpush1.bf16.xpose.msra.mxu0 0
        %1480 = vmatprep.subr.bf16.mxu0 0
        %1481 = vmatpush1.bf16.xpose.msra.mxu0 0
        %1482 = vmatprep.subr.bf16.mxu0 0
        %1483 = vmatpush1.bf16.xpose.msra.mxu0 0
        %1484 = vmatprep.subr.bf16.mxu0 0
        %1485 = vmatpush1.bf16.xpose.msra.mxu0 0
        %1486 = vmatprep.subr.bf16.mxu0 0
        %1487 = vmatpush1.bf16.xpose.msra.mxu0 0
        %1488 = vmatprep.subr.bf16.mxu0 0
        %1489 = vmatpush1.bf16.xpose.msra.mxu0 0
        %1490 = vmatprep.subr.bf16.mxu0 0
        %1491 = vmatpush1.bf16.xpose.msra.mxu0 0
        %1492 = vmatprep.subr.bf16.mxu0 0
        %1493 = vmatpush1.bf16.xpose.msra.mxu0 0
        %1494 = vmatprep.subr.bf16.mxu0 0
        %1495 = vmatpush1.bf16.xpose.msra.mxu0 0
        %1496 = vmatprep.subr.bf16.mxu0 0
        %1497 = vmatpush1.bf16.xpose.msra.mxu0 0
        %1498 = vmatprep.mubr.bf16.mxu0 0
        %1499 = vmatmul.mubr.bf16.gmra.mrb[0].mxu0 %v1461
        %v1500 = vpop.f32.mrb[0].mxu0
        %v1501 = vadd.f32 0.0, %v1500
        %v1502 = vpop.f32.mrb[0].mxu0
        %v1503 = vpop.f32.mrb[0].mxu0
        %v1504 = vpop.f32.mrb[0].mxu0
        %1505 = vdwg.mxu0
        %1506 = vrot.lane.b32.xlu0 %v884, 64
        %v1507 = vpop.permute.xlu0 %1506
        %1508 = vrot.lane.b32.xlu0 %v885, 64
        %v1509 = vpop.permute.xlu0 %1508
        %v1511 = vsel %vm887, %v1507, 0
        %v1514 = vsel %vm887, %v1509, 0
        %1516 = vmatprep.subr.bf16.mxu0 0
        %1517 = vmatpush1.bf16.xpose.msra.mxu0 %v1514
        %1518 = vmatprep.subr.bf16.mxu0 0
        %1519 = vmatpush1.bf16.xpose.msra.mxu0 0
        %1520 = vmatprep.subr.bf16.mxu0 0
        %1521 = vmatpush1.bf16.xpose.msra.mxu0 0
        %1522 = vmatprep.subr.bf16.mxu0 0
        %1523 = vmatpush1.bf16.xpose.msra.mxu0 0
        %1524 = vmatprep.subr.bf16.mxu0 0
        %1525 = vmatpush1.bf16.xpose.msra.mxu0 0
        %1526 = vmatprep.subr.bf16.mxu0 0
        %1527 = vmatpush1.bf16.xpose.msra.mxu0 0
        %1528 = vmatprep.subr.bf16.mxu0 0
        %1529 = vmatpush1.bf16.xpose.msra.mxu0 0
        %1530 = vmatprep.subr.bf16.mxu0 0
        %1531 = vmatpush1.bf16.xpose.msra.mxu0 0
        %1532 = vmatprep.subr.bf16.mxu0 0
        %1533 = vmatpush1.bf16.xpose.msra.mxu0 0
        %1534 = vmatprep.subr.bf16.mxu0 0
        %1535 = vmatpush1.bf16.xpose.msra.mxu0 0
        %1536 = vmatprep.subr.bf16.mxu0 0
        %1537 = vmatpush1.bf16.xpose.msra.mxu0 0
        %1538 = vmatprep.subr.bf16.mxu0 0
        %1539 = vmatpush1.bf16.xpose.msra.mxu0 0
        %1540 = vmatprep.subr.bf16.mxu0 0
        %1541 = vmatpush1.bf16.xpose.msra.mxu0 0
        %1542 = vmatprep.subr.bf16.mxu0 0
        %1543 = vmatpush1.bf16.xpose.msra.mxu0 0
        %1544 = vmatprep.subr.bf16.mxu0 0
        %1545 = vmatpush1.bf16.xpose.msra.mxu0 0
        %1546 = vmatprep.subr.bf16.mxu0 0
        %1547 = vmatpush1.bf16.xpose.msra.mxu0 0
        %1548 = vmatprep.mubr.bf16.mxu0 0
        %1549 = vmatmul.mubr.bf16.gmra.mrb[0].mxu0 %v1511
        %v1550 = vpop.f32.mrb[0].mxu0
        %v1551 = vadd.f32 0.0, %v1550
        %v1552 = vpop.f32.mrb[0].mxu0
        %v1553 = vpop.f32.mrb[0].mxu0
        %v1554 = vpop.f32.mrb[0].mxu0
        %1555 = vdwg.mxu0
        %v1556 = vmul.f32 %v1501, 0.17677669
        %v1557 = vmul.f32 %v1551, 0.17677669
        %v1558 = vsel %vm982, %v1556, -inf
        %1559 = vmax.xlane.f32.xlu0 %v1558
        %v1560 = vpop.xlane.xlu0 %1559
        %v1561 = vsel %vm982, %v1557, -inf
        %1562 = vmax.xlane.f32.xlu0 %v1561
        %v1563 = vpop.xlane.xlu0 %1562
        %v1564 = vsub.f32 %v1556, %v1560
        %v1565 = vsub.f32 %v1557, %v1563
        %v1566 = vmul.f32 %v1564, 1.442695
        %v1567 = vpow.pop %v1566
        %v1568 = vmul.f32 %v1565, 1.442695
        %v1569 = vpow.pop %v1568
        %v1570 = vsel %vm982, %v1567, 0.0
        %1571 = vadd.xlane.f32.xlu0 %v1570
        %v1572 = vpop.xlane.xlu0 %1571
        %v1573 = vsel %vm982, %v1569, 0.0
        %1574 = vadd.xlane.f32.xlu0 %v1573
        %v1575 = vpop.xlane.xlu0 %1574
        %v1576 = vrcp.pop %v1572
        %v1577 = vrcp.pop %v1575
        %v1578 = vmul.f32 %v1567, %v1576
        %v1579 = vmul.f32 %v1569, %v1577
        %v1580 = vpack.c.bf16 %v1578, %v1578
        %v1581 = vpack.c.bf16 %v1579, %v1579
        %1582 = vrot.lane.b32.xlu0 %v883, 64
        %v1583 = vpop.permute.xlu0 %1582
        %v1585 = vsel %vm982, %v1580, 0
        %v1588 = vsel %vm1010, %v1583, 0
        %1590 = vmatprep.subr.bf16.mxu0 0
        %1591 = vmatpush1.bf16.msra.mxu0 %v1588
        %1592 = vmatprep.subr.bf16.mxu0 0
        %1593 = vmatpush1.bf16.msra.mxu0 0
        %1594 = vmatprep.subr.bf16.mxu0 0
        %1595 = vmatpush1.bf16.msra.mxu0 0
        %1596 = vmatprep.subr.bf16.mxu0 0
        %1597 = vmatpush1.bf16.msra.mxu0 0
        %1598 = vmatprep.subr.bf16.mxu0 0
        %1599 = vmatpush1.bf16.msra.mxu0 0
        %1600 = vmatprep.subr.bf16.mxu0 0
        %1601 = vmatpush1.bf16.msra.mxu0 0
        %1602 = vmatprep.subr.bf16.mxu0 0
        %1603 = vmatpush1.bf16.msra.mxu0 0
        %1604 = vmatprep.subr.bf16.mxu0 0
        %1605 = vmatpush1.bf16.msra.mxu0 0
        %1606 = vmatprep.subr.bf16.mxu0 0
        %1607 = vmatpush1.bf16.msra.mxu0 0
        %1608 = vmatprep.subr.bf16.mxu0 0
        %1609 = vmatpush1.bf16.msra.mxu0 0
        %1610 = vmatprep.subr.bf16.mxu0 0
        %1611 = vmatpush1.bf16.msra.mxu0 0
        %1612 = vmatprep.subr.bf16.mxu0 0
        %1613 = vmatpush1.bf16.msra.mxu0 0
        %1614 = vmatprep.subr.bf16.mxu0 0
        %1615 = vmatpush1.bf16.msra.mxu0 0
        %1616 = vmatprep.subr.bf16.mxu0 0
        %1617 = vmatpush1.bf16.msra.mxu0 0
        %1618 = vmatprep.subr.bf16.mxu0 0
        %1619 = vmatpush1.bf16.msra.mxu0 0
        %1620 = vmatprep.subr.bf16.mxu0 0
        %1621 = vmatpush1.bf16.msra.mxu0 0
        %1622 = vmatprep.mubr.bf16.mxu0 0
        %1623 = vmatmul.mubr.bf16.gmra.mrb[0].mxu0 %v1585
        %v1624 = vpop.f32.mrb[0].mxu0
        %v1625 = vadd.f32 0.0, %v1624
        %v1626 = vpop.f32.mrb[0].mxu0
        %v1627 = vpop.f32.mrb[0].mxu0
        %v1628 = vpop.f32.mrb[0].mxu0
        %1629 = vdwg.mxu0
        %1630 = vrot.lane.b32.xlu0 %v886, 64
        %v1631 = vpop.permute.xlu0 %1630
        %v1633 = vsel %vm982, %v1581, 0
        %v1636 = vsel %vm1010, %v1631, 0
        %1638 = vmatprep.subr.bf16.mxu0 0
        %1639 = vmatpush1.bf16.msra.mxu0 %v1636
        %1640 = vmatprep.subr.bf16.mxu0 0
        %1641 = vmatpush1.bf16.msra.mxu0 0
        %1642 = vmatprep.subr.bf16.mxu0 0
        %1643 = vmatpush1.bf16.msra.mxu0 0
        %1644 = vmatprep.subr.bf16.mxu0 0
        %1645 = vmatpush1.bf16.msra.mxu0 0
        %1646 = vmatprep.subr.bf16.mxu0 0
        %1647 = vmatpush1.bf16.msra.mxu0 0
        %1648 = vmatprep.subr.bf16.mxu0 0
        %1649 = vmatpush1.bf16.msra.mxu0 0
        %1650 = vmatprep.subr.bf16.mxu0 0
        %1651 = vmatpush1.bf16.msra.mxu0 0
        %1652 = vmatprep.subr.bf16.mxu0 0
        %1653 = vmatpush1.bf16.msra.mxu0 0
        %1654 = vmatprep.subr.bf16.mxu0 0
        %1655 = vmatpush1.bf16.msra.mxu0 0
        %1656 = vmatprep.subr.bf16.mxu0 0
        %1657 = vmatpush1.bf16.msra.mxu0 0
        %1658 = vmatprep.subr.bf16.mxu0 0
        %1659 = vmatpush1.bf16.msra.mxu0 0
        %1660 = vmatprep.subr.bf16.mxu0 0
        %1661 = vmatpush1.bf16.msra.mxu0 0
        %1662 = vmatprep.subr.bf16.mxu0 0
        %1663 = vmatpush1.bf16.msra.mxu0 0
        %1664 = vmatprep.subr.bf16.mxu0 0
        %1665 = vmatpush1.bf16.msra.mxu0 0
        %1666 = vmatprep.subr.bf16.mxu0 0
        %1667 = vmatpush1.bf16.msra.mxu0 0
        %1668 = vmatprep.subr.bf16.mxu0 0
        %1669 = vmatpush1.bf16.msra.mxu0 0
        %1670 = vmatprep.mubr.bf16.mxu0 0
        %1671 = vmatmul.mubr.bf16.gmra.mrb[0].mxu0 %v1633
        %v1672 = vpop.f32.mrb[0].mxu0
        %v1673 = vadd.f32 0.0, %v1672
        %v1674 = vpop.f32.mrb[0].mxu0
        %v1675 = vpop.f32.mrb[0].mxu0
        %v1676 = vpop.f32.mrb[0].mxu0
        %1677 = vdwg.mxu0
        %v1678 = vpack.c.bf16 %v1673, %v1625
        %s1679 = sadd.s32 8, %s1101
        %s1680 = smul.addr %s1679, 4
        %s1681 = scalar_lea.vmem [#allocation11], %s1680
        %v1682 = vld [vmem:[%s1681] sm:$0xf]
        %v1683 = vld [vmem:[%s1681 + $0x4] sm:$0xf]
        %v1684 = vld [vmem:[%s1681 + $0x8] sm:$0xf]
        %v1685 = vld [vmem:[%s1681 + $0xc] sm:$0xf]
        %v1690 = vunpack.c.l.b16 %v1682
        %v1691 = vunpack.c.l.b16 %v1683
        %v1692 = vunpack.c.l.b16 %v1684
        %v1693 = vunpack.c.l.b16 %v1685
        %v1694 = vpack.c.b16 %v1691, %v1690
        %v1695 = vpack.c.b16 %v1693, %v1692
        %v1699 = vsel %vm887, %v1678, 0
        %1701 = vmatprep.subr.bf16.mxu0 0
        %1702 = vmatpush1.bf16.msra.mxu0 %v1694
        %1703 = vmatprep.subr.bf16.mxu0 0
        %1704 = vmatpush1.bf16.msra.mxu0 %v1695
        %1705 = vmatprep.subr.bf16.mxu0 0
        %1706 = vmatpush1.bf16.msra.mxu0 0
        %1707 = vmatprep.subr.bf16.mxu0 0
        %1708 = vmatpush1.bf16.msra.mxu0 0
        %1709 = vmatprep.subr.bf16.mxu0 0
        %1710 = vmatpush1.bf16.msra.mxu0 0
        %1711 = vmatprep.subr.bf16.mxu0 0
        %1712 = vmatpush1.bf16.msra.mxu0 0
        %1713 = vmatprep.subr.bf16.mxu0 0
        %1714 = vmatpush1.bf16.msra.mxu0 0
        %1715 = vmatprep.subr.bf16.mxu0 0
        %1716 = vmatpush1.bf16.msra.mxu0 0
        %1717 = vmatprep.subr.bf16.mxu0 0
        %1718 = vmatpush1.bf16.msra.mxu0 0
        %1719 = vmatprep.subr.bf16.mxu0 0
        %1720 = vmatpush1.bf16.msra.mxu0 0
        %1721 = vmatprep.subr.bf16.mxu0 0
        %1722 = vmatpush1.bf16.msra.mxu0 0
        %1723 = vmatprep.subr.bf16.mxu0 0
        %1724 = vmatpush1.bf16.msra.mxu0 0
        %1725 = vmatprep.subr.bf16.mxu0 0
        %1726 = vmatpush1.bf16.msra.mxu0 0
        %1727 = vmatprep.subr.bf16.mxu0 0
        %1728 = vmatpush1.bf16.msra.mxu0 0
        %1729 = vmatprep.subr.bf16.mxu0 0
        %1730 = vmatpush1.bf16.msra.mxu0 0
        %1731 = vmatprep.subr.bf16.mxu0 0
        %1732 = vmatpush1.bf16.msra.mxu0 0
        %1733 = vmatprep.mubr.bf16.mxu0 0
        %1734 = vmatmul.mubr.bf16.gmra.mrb[0].mxu0 %v1699
        %v1735 = vpop.f32.mrb[0].mxu0
        %v1736 = vadd.f32 0.0, %v1735
        %v1737 = vpop.f32.mrb[0].mxu0
        %v1738 = vpop.f32.mrb[0].mxu0
        %v1739 = vadd.f32 0.0, %v1738
        %v1740 = vpop.f32.mrb[0].mxu0
        %1741 = vdwg.mxu0
        %v1742 = vadd.f32 %v1450, %v1736
        %v1743 = vadd.f32 %v1453, %v1739
        %1744 = vrot.lane.b32.xlu0 %v881, 32
        %v1745 = vpop.permute.xlu0 %1744
        %1746 = vrot.lane.b32.xlu0 %v882, 32
        %v1747 = vpop.permute.xlu0 %1746
        %v1749 = vsel %vm887, %v1745, 0
        %v1752 = vsel %vm887, %v1747, 0
        %1754 = vmatprep.subr.bf16.mxu0 0
        %1755 = vmatpush1.bf16.xpose.msra.mxu0 %v1752
        %1756 = vmatprep.subr.bf16.mxu0 0
        %1757 = vmatpush1.bf16.xpose.msra.mxu0 0
        %1758 = vmatprep.subr.bf16.mxu0 0
        %1759 = vmatpush1.bf16.xpose.msra.mxu0 0
        %1760 = vmatprep.subr.bf16.mxu0 0
        %1761 = vmatpush1.bf16.xpose.msra.mxu0 0
        %1762 = vmatprep.subr.bf16.mxu0 0
        %1763 = vmatpush1.bf16.xpose.msra.mxu0 0
        %1764 = vmatprep.subr.bf16.mxu0 0
        %1765 = vmatpush1.bf16.xpose.msra.mxu0 0
        %1766 = vmatprep.subr.bf16.mxu0 0
        %1767 = vmatpush1.bf16.xpose.msra.mxu0 0
        %1768 = vmatprep.subr.bf16.mxu0 0
        %1769 = vmatpush1.bf16.xpose.msra.mxu0 0
        %1770 = vmatprep.subr.bf16.mxu0 0
        %1771 = vmatpush1.bf16.xpose.msra.mxu0 0
        %1772 = vmatprep.subr.bf16.mxu0 0
        %1773 = vmatpush1.bf16.xpose.msra.mxu0 0
        %1774 = vmatprep.subr.bf16.mxu0 0
        %1775 = vmatpush1.bf16.xpose.msra.mxu0 0
        %1776 = vmatprep.subr.bf16.mxu0 0
        %1777 = vmatpush1.bf16.xpose.msra.mxu0 0
        %1778 = vmatprep.subr.bf16.mxu0 0
        %1779 = vmatpush1.bf16.xpose.msra.mxu0 0
        %1780 = vmatprep.subr.bf16.mxu0 0
        %1781 = vmatpush1.bf16.xpose.msra.mxu0 0
        %1782 = vmatprep.subr.bf16.mxu0 0
        %1783 = vmatpush1.bf16.xpose.msra.mxu0 0
        %1784 = vmatprep.subr.bf16.mxu0 0
        %1785 = vmatpush1.bf16.xpose.msra.mxu0 0
        %1786 = vmatprep.mubr.bf16.mxu0 0
        %1787 = vmatmul.mubr.bf16.gmra.mrb[0].mxu0 %v1749
        %v1788 = vpop.f32.mrb[0].mxu0
        %v1789 = vadd.f32 0.0, %v1788
        %v1790 = vpop.f32.mrb[0].mxu0
        %v1791 = vpop.f32.mrb[0].mxu0
        %v1792 = vpop.f32.mrb[0].mxu0
        %1793 = vdwg.mxu0
        %1794 = vrot.lane.b32.xlu0 %v884, 32
        %v1795 = vpop.permute.xlu0 %1794
        %1796 = vrot.lane.b32.xlu0 %v885, 32
        %v1797 = vpop.permute.xlu0 %1796
        %v1799 = vsel %vm887, %v1795, 0
        %v1802 = vsel %vm887, %v1797, 0
        %1804 = vmatprep.subr.bf16.mxu0 0
        %1805 = vmatpush1.bf16.xpose.msra.mxu0 %v1802
        %1806 = vmatprep.subr.bf16.mxu0 0
        %1807 = vmatpush1.bf16.xpose.msra.mxu0 0
        %1808 = vmatprep.subr.bf16.mxu0 0
        %1809 = vmatpush1.bf16.xpose.msra.mxu0 0
        %1810 = vmatprep.subr.bf16.mxu0 0
        %1811 = vmatpush1.bf16.xpose.msra.mxu0 0
        %1812 = vmatprep.subr.bf16.mxu0 0
        %1813 = vmatpush1.bf16.xpose.msra.mxu0 0
        %1814 = vmatprep.subr.bf16.mxu0 0
        %1815 = vmatpush1.bf16.xpose.msra.mxu0 0
        %1816 = vmatprep.subr.bf16.mxu0 0
        %1817 = vmatpush1.bf16.xpose.msra.mxu0 0
        %1818 = vmatprep.subr.bf16.mxu0 0
        %1819 = vmatpush1.bf16.xpose.msra.mxu0 0
        %1820 = vmatprep.subr.bf16.mxu0 0
        %1821 = vmatpush1.bf16.xpose.msra.mxu0 0
        %1822 = vmatprep.subr.bf16.mxu0 0
        %1823 = vmatpush1.bf16.xpose.msra.mxu0 0
        %1824 = vmatprep.subr.bf16.mxu0 0
        %1825 = vmatpush1.bf16.xpose.msra.mxu0 0
        %1826 = vmatprep.subr.bf16.mxu0 0
        %1827 = vmatpush1.bf16.xpose.msra.mxu0 0
        %1828 = vmatprep.subr.bf16.mxu0 0
        %1829 = vmatpush1.bf16.xpose.msra.mxu0 0
        %1830 = vmatprep.subr.bf16.mxu0 0
        %1831 = vmatpush1.bf16.xpose.msra.mxu0 0
        %1832 = vmatprep.subr.bf16.mxu0 0
        %1833 = vmatpush1.bf16.xpose.msra.mxu0 0
        %1834 = vmatprep.subr.bf16.mxu0 0
        %1835 = vmatpush1.bf16.xpose.msra.mxu0 0
        %1836 = vmatprep.mubr.bf16.mxu0 0
        %1837 = vmatmul.mubr.bf16.gmra.mrb[0].mxu0 %v1799
        %v1838 = vpop.f32.mrb[0].mxu0
        %v1839 = vadd.f32 0.0, %v1838
        %v1840 = vpop.f32.mrb[0].mxu0
        %v1841 = vpop.f32.mrb[0].mxu0
        %v1842 = vpop.f32.mrb[0].mxu0
        %1843 = vdwg.mxu0
        %v1844 = vmul.f32 %v1789, 0.17677669
        %v1845 = vmul.f32 %v1839, 0.17677669
        %v1846 = vsel %vm982, %v1844, -inf
        %1847 = vmax.xlane.f32.xlu0 %v1846
        %v1848 = vpop.xlane.xlu0 %1847
        %v1849 = vsel %vm982, %v1845, -inf
        %1850 = vmax.xlane.f32.xlu0 %v1849
        %v1851 = vpop.xlane.xlu0 %1850
        %v1852 = vsub.f32 %v1844, %v1848
        %v1853 = vsub.f32 %v1845, %v1851
        %v1854 = vmul.f32 %v1852, 1.442695
        %v1855 = vpow.pop %v1854
        %v1856 = vmul.f32 %v1853, 1.442695
        %v1857 = vpow.pop %v1856
        %v1858 = vsel %vm982, %v1855, 0.0
        %1859 = vadd.xlane.f32.xlu0 %v1858
        %v1860 = vpop.xlane.xlu0 %1859
        %v1861 = vsel %vm982, %v1857, 0.0
        %1862 = vadd.xlane.f32.xlu0 %v1861
        %v1863 = vpop.xlane.xlu0 %1862
        %v1864 = vrcp.pop %v1860
        %v1865 = vrcp.pop %v1863
        %v1866 = vmul.f32 %v1855, %v1864
        %v1867 = vmul.f32 %v1857, %v1865
        %v1868 = vpack.c.bf16 %v1866, %v1866
        %v1869 = vpack.c.bf16 %v1867, %v1867
        %1870 = vrot.lane.b32.xlu0 %v883, 32
        %v1871 = vpop.permute.xlu0 %1870
        %v1873 = vsel %vm982, %v1868, 0
        %v1876 = vsel %vm1010, %v1871, 0
        %1878 = vmatprep.subr.bf16.mxu0 0
        %1879 = vmatpush1.bf16.msra.mxu0 %v1876
        %1880 = vmatprep.subr.bf16.mxu0 0
        %1881 = vmatpush1.bf16.msra.mxu0 0
        %1882 = vmatprep.subr.bf16.mxu0 0
        %1883 = vmatpush1.bf16.msra.mxu0 0
        %1884 = vmatprep.subr.bf16.mxu0 0
        %1885 = vmatpush1.bf16.msra.mxu0 0
        %1886 = vmatprep.subr.bf16.mxu0 0
        %1887 = vmatpush1.bf16.msra.mxu0 0
        %1888 = vmatprep.subr.bf16.mxu0 0
        %1889 = vmatpush1.bf16.msra.mxu0 0
        %1890 = vmatprep.subr.bf16.mxu0 0
        %1891 = vmatpush1.bf16.msra.mxu0 0
        %1892 = vmatprep.subr.bf16.mxu0 0
        %1893 = vmatpush1.bf16.msra.mxu0 0
        %1894 = vmatprep.subr.bf16.mxu0 0
        %1895 = vmatpush1.bf16.msra.mxu0 0
        %1896 = vmatprep.subr.bf16.mxu0 0
        %1897 = vmatpush1.bf16.msra.mxu0 0
        %1898 = vmatprep.subr.bf16.mxu0 0
        %1899 = vmatpush1.bf16.msra.mxu0 0
        %1900 = vmatprep.subr.bf16.mxu0 0
        %1901 = vmatpush1.bf16.msra.mxu0 0
        %1902 = vmatprep.subr.bf16.mxu0 0
        %1903 = vmatpush1.bf16.msra.mxu0 0
        %1904 = vmatprep.subr.bf16.mxu0 0
        %1905 = vmatpush1.bf16.msra.mxu0 0
        %1906 = vmatprep.subr.bf16.mxu0 0
        %1907 = vmatpush1.bf16.msra.mxu0 0
        %1908 = vmatprep.subr.bf16.mxu0 0
        %1909 = vmatpush1.bf16.msra.mxu0 0
        %1910 = vmatprep.mubr.bf16.mxu0 0
        %1911 = vmatmul.mubr.bf16.gmra.mrb[0].mxu0 %v1873
        %v1912 = vpop.f32.mrb[0].mxu0
        %v1913 = vadd.f32 0.0, %v1912
        %v1914 = vpop.f32.mrb[0].mxu0
        %v1915 = vpop.f32.mrb[0].mxu0
        %v1916 = vpop.f32.mrb[0].mxu0
        %1917 = vdwg.mxu0
        %1918 = vrot.lane.b32.xlu0 %v886, 32
        %v1919 = vpop.permute.xlu0 %1918
        %v1921 = vsel %vm982, %v1869, 0
        %v1924 = vsel %vm1010, %v1919, 0
        %1926 = vmatprep.subr.bf16.mxu0 0
        %1927 = vmatpush1.bf16.msra.mxu0 %v1924
        %1928 = vmatprep.subr.bf16.mxu0 0
        %1929 = vmatpush1.bf16.msra.mxu0 0
        %1930 = vmatprep.subr.bf16.mxu0 0
        %1931 = vmatpush1.bf16.msra.mxu0 0
        %1932 = vmatprep.subr.bf16.mxu0 0
        %1933 = vmatpush1.bf16.msra.mxu0 0
        %1934 = vmatprep.subr.bf16.mxu0 0
        %1935 = vmatpush1.bf16.msra.mxu0 0
        %1936 = vmatprep.subr.bf16.mxu0 0
        %1937 = vmatpush1.bf16.msra.mxu0 0
        %1938 = vmatprep.subr.bf16.mxu0 0
        %1939 = vmatpush1.bf16.msra.mxu0 0
        %1940 = vmatprep.subr.bf16.mxu0 0
        %1941 = vmatpush1.bf16.msra.mxu0 0
        %1942 = vmatprep.subr.bf16.mxu0 0
        %1943 = vmatpush1.bf16.msra.mxu0 0
        %1944 = vmatprep.subr.bf16.mxu0 0
        %1945 = vmatpush1.bf16.msra.mxu0 0
        %1946 = vmatprep.subr.bf16.mxu0 0
        %1947 = vmatpush1.bf16.msra.mxu0 0
        %1948 = vmatprep.subr.bf16.mxu0 0
        %1949 = vmatpush1.bf16.msra.mxu0 0
        %1950 = vmatprep.subr.bf16.mxu0 0
        %1951 = vmatpush1.bf16.msra.mxu0 0
        %1952 = vmatprep.subr.bf16.mxu0 0
        %1953 = vmatpush1.bf16.msra.mxu0 0
        %1954 = vmatprep.subr.bf16.mxu0 0
        %1955 = vmatpush1.bf16.msra.mxu0 0
        %1956 = vmatprep.subr.bf16.mxu0 0
        %1957 = vmatpush1.bf16.msra.mxu0 0
        %1958 = vmatprep.mubr.bf16.mxu0 0
        %1959 = vmatmul.mubr.bf16.gmra.mrb[0].mxu0 %v1921
        %v1960 = vpop.f32.mrb[0].mxu0
        %v1961 = vadd.f32 0.0, %v1960
        %v1962 = vpop.f32.mrb[0].mxu0
        %v1963 = vpop.f32.mrb[0].mxu0
        %v1964 = vpop.f32.mrb[0].mxu0
        %1965 = vdwg.mxu0
        %v1966 = vpack.c.bf16 %v1961, %v1913
        %s1967 = sadd.s32 12, %s1101
        %s1968 = smul.addr %s1967, 4
        %s1969 = scalar_lea.vmem [#allocation11], %s1968
        %v1970 = vld [vmem:[%s1969] sm:$0xf]
        %v1971 = vld [vmem:[%s1969 + $0x4] sm:$0xf]
        %v1972 = vld [vmem:[%s1969 + $0x8] sm:$0xf]
        %v1973 = vld [vmem:[%s1969 + $0xc] sm:$0xf]
        %v1978 = vunpack.c.l.b16 %v1970
        %v1979 = vunpack.c.l.b16 %v1971
        %v1980 = vunpack.c.l.b16 %v1972
        %v1981 = vunpack.c.l.b16 %v1973
        %v1982 = vpack.c.b16 %v1979, %v1978
        %v1983 = vpack.c.b16 %v1981, %v1980
        %v1987 = vsel %vm887, %v1966, 0
        %1989 = vmatprep.subr.bf16.mxu0 0
        %1990 = vmatpush1.bf16.msra.mxu0 %v1982
        %1991 = vmatprep.subr.bf16.mxu0 0
        %1992 = vmatpush1.bf16.msra.mxu0 %v1983
        %1993 = vmatprep.subr.bf16.mxu0 0
        %1994 = vmatpush1.bf16.msra.mxu0 0
        %1995 = vmatprep.subr.bf16.mxu0 0
        %1996 = vmatpush1.bf16.msra.mxu0 0
        %1997 = vmatprep.subr.bf16.mxu0 0
        %1998 = vmatpush1.bf16.msra.mxu0 0
        %1999 = vmatprep.subr.bf16.mxu0 0
        %2000 = vmatpush1.bf16.msra.mxu0 0
        %2001 = vmatprep.subr.bf16.mxu0 0
        %2002 = vmatpush1.bf16.msra.mxu0 0
        %2003 = vmatprep.subr.bf16.mxu0 0
        %2004 = vmatpush1.bf16.msra.mxu0 0
        %2005 = vmatprep.subr.bf16.mxu0 0
        %2006 = vmatpush1.bf16.msra.mxu0 0
        %2007 = vmatprep.subr.bf16.mxu0 0
        %2008 = vmatpush1.bf16.msra.mxu0 0
        %2009 = vmatprep.subr.bf16.mxu0 0
        %2010 = vmatpush1.bf16.msra.mxu0 0
        %2011 = vmatprep.subr.bf16.mxu0 0
        %2012 = vmatpush1.bf16.msra.mxu0 0
        %2013 = vmatprep.subr.bf16.mxu0 0
        %2014 = vmatpush1.bf16.msra.mxu0 0
        %2015 = vmatprep.subr.bf16.mxu0 0
        %2016 = vmatpush1.bf16.msra.mxu0 0
        %2017 = vmatprep.subr.bf16.mxu0 0
        %2018 = vmatpush1.bf16.msra.mxu0 0
        %2019 = vmatprep.subr.bf16.mxu0 0
        %2020 = vmatpush1.bf16.msra.mxu0 0
        %2021 = vmatprep.mubr.bf16.mxu0 0
        %2022 = vmatmul.mubr.bf16.gmra.mrb[0].mxu0 %v1987
        %v2023 = vpop.f32.mrb[0].mxu0
        %v2024 = vadd.f32 0.0, %v2023
        %v2025 = vpop.f32.mrb[0].mxu0
        %v2026 = vpop.f32.mrb[0].mxu0
        %v2027 = vadd.f32 0.0, %v2026
        %v2028 = vpop.f32.mrb[0].mxu0
        %2029 = vdwg.mxu0
        %v2030 = vadd.f32 %v1742, %v2024
        %v2031 = vadd.f32 %v1743, %v2027
        %s2032 = scalar_lea.vmem %s6, %s38
        %v2033 = vld [vmem:[%s2032] sm:$0x1]
        %v2035 = vlaneseq
        %v2036 = vshrl.u32 %v2035, 7
        %v2037 = vsub.s32 0, %v2036
        %v2038 = vrot.slane %v2033, %v2037
        %v2040 = vadd.f32 %v2030, %v2038
        %v2041 = vadd.f32 %v2031, %v2038
        %v2042 = vadd.f32 %v569, %v2040
        %v2043 = vadd.f32 %v570, %v2041
        %s2044 = scalar_lea.vmem %s7, %s38
        %v2045 = vld [vmem:[%s2044] sm:$0x1]
        %s2046 = scalar_lea.vmem %s8, %s38
        %v2047 = vld [vmem:[%s2046] sm:$0x1]
        %2048 = vadd.xlane.f32.xlu0 %v2042
        %v2049 = vpop.xlane.xlu0 %2048
        %2050 = vadd.xlane.f32.xlu0 %v2043
        %v2051 = vpop.xlane.xlu0 %2050
        %v2052 = vmul.f32 %v2049, %v579
        %v2053 = vmul.f32 %v2051, %v579
        %v2054 = vsub.f32 %v2042, %v2052
        %v2055 = vsub.f32 %v2043, %v2053
        %v2056 = vmul.f32 %v2054, %v2054
        %v2057 = vmul.f32 %v2055, %v2055
        %2058 = vadd.xlane.f32.xlu0 %v2056
        %v2059 = vpop.xlane.xlu0 %2058
        %2060 = vadd.xlane.f32.xlu0 %v2057
        %v2061 = vpop.xlane.xlu0 %2060
        %v2062 = vmul.f32 %v2059, %v579
        %v2063 = vmul.f32 %v2061, %v579
        %v2064 = vadd.f32 %v2062, 1e-07
        %v2065 = vadd.f32 %v2063, 1e-07
        %v2066 = vrsqrt.pop %v2064
        %v2067 = vrsqrt.pop %v2065
        %v2068 = vmul.f32 %v2054, %v2066
        %v2069 = vmul.f32 %v2055, %v2067
        %v2071 = vlaneseq
        %v2072 = vshrl.u32 %v2071, 7
        %v2073 = vsub.s32 0, %v2072
        %v2074 = vrot.slane %v2045, %v2073
        %v2076 = vmul.f32 %v2068, %v2074
        %v2077 = vmul.f32 %v2069, %v2074
        %v2079 = vlaneseq
        %v2080 = vshrl.u32 %v2079, 7
        %v2081 = vsub.s32 0, %v2080
        %v2082 = vrot.slane %v2047, %v2081
        %v2084 = vadd.f32 %v2076, %v2082
        %v2085 = vadd.f32 %v2077, %v2082
        %v2086 = vpack.c.bf16 %v2085, %v2084
        %s2087 = smul.u32 %s38, 64
        %s2088 = smul.addr %s2087, 4
        %s2089 = scalar_lea.vmem [#allocation12], %s2088
        %v2090 = vld [vmem:[%s2089] sm:$0xff]
        %v2091 = vld [vmem:[%s2089 + $0x8] sm:$0xff]
        %v2092 = vld [vmem:[%s2089 + $0x10] sm:$0xff]
        %v2093 = vld [vmem:[%s2089 + $0x18] sm:$0xff]
        %v2094 = vld [vmem:[%s2089 + $0x20] sm:$0xff]
        %v2095 = vld [vmem:[%s2089 + $0x28] sm:$0xff]
        %v2096 = vld [vmem:[%s2089 + $0x30] sm:$0xff]
        %v2097 = vld [vmem:[%s2089 + $0x38] sm:$0xff]
        %v2098 = vld [vmem:[%s2089 + $0x40] sm:$0xff]
        %v2099 = vld [vmem:[%s2089 + $0x48] sm:$0xff]
        %v2100 = vld [vmem:[%s2089 + $0x50] sm:$0xff]
        %v2101 = vld [vmem:[%s2089 + $0x58] sm:$0xff]
        %v2102 = vld [vmem:[%s2089 + $0x60] sm:$0xff]
        %v2103 = vld [vmem:[%s2089 + $0x68] sm:$0xff]
        %v2104 = vld [vmem:[%s2089 + $0x70] sm:$0xff]
        %v2105 = vld [vmem:[%s2089 + $0x78] sm:$0xff]
        %v2106 = vld [vmem:[%s2089 + $0x80] sm:$0xff]
        %v2107 = vld [vmem:[%s2089 + $0x88] sm:$0xff]
        %v2108 = vld [vmem:[%s2089 + $0x90] sm:$0xff]
        %v2109 = vld [vmem:[%s2089 + $0x98] sm:$0xff]
        %v2110 = vld [vmem:[%s2089 + $0xa0] sm:$0xff]
        %v2111 = vld [vmem:[%s2089 + $0xa8] sm:$0xff]
        %v2112 = vld [vmem:[%s2089 + $0xb0] sm:$0xff]
        %v2113 = vld [vmem:[%s2089 + $0xb8] sm:$0xff]
        %v2114 = vld [vmem:[%s2089 + $0xc0] sm:$0xff]
        %v2115 = vld [vmem:[%s2089 + $0xc8] sm:$0xff]
        %v2116 = vld [vmem:[%s2089 + $0xd0] sm:$0xff]
        %v2117 = vld [vmem:[%s2089 + $0xd8] sm:$0xff]
        %v2118 = vld [vmem:[%s2089 + $0xe0] sm:$0xff]
        %v2119 = vld [vmem:[%s2089 + $0xe8] sm:$0xff]
        %v2120 = vld [vmem:[%s2089 + $0xf0] sm:$0xff]
        %v2121 = vld [vmem:[%s2089 + $0xf8] sm:$0xff]
        %s2122 = smul.u32 %s38, 4
        %s2123 = scalar_lea.vmem %s10, %s2122
        %v2124 = vld [vmem:[%s2123] sm:$0xf]
        %v2126 = vlaneseq
        %v2127 = vshrl.u32 %v2126, 7
        %v2128 = vsub.s32 0, %v2127
        %v2129 = vrot.slane %v2124, %v2128
        %v2130 = vlaneseq
        %v2131 = vshrl.u32 %v2130, 7
        %v2132 = vsub.s32 1, %v2131
        %v2133 = vrot.slane %v2124, %v2132
        %v2134 = vlaneseq
        %v2135 = vshrl.u32 %v2134, 7
        %v2136 = vsub.s32 2, %v2135
        %v2137 = vrot.slane %v2124, %v2136
        %v2138 = vlaneseq
        %v2139 = vshrl.u32 %v2138, 7
        %v2140 = vsub.s32 3, %v2139
        %v2141 = vrot.slane %v2124, %v2140
        %v2178 = vunpack.c.l.b16 %v2090
        %v2179 = vunpack.c.h.b16 %v2090
        %v2180 = vunpack.c.l.b16 %v2091
        %v2181 = vunpack.c.h.b16 %v2091
        %v2182 = vunpack.c.l.b16 %v2092
        %v2183 = vunpack.c.h.b16 %v2092
        %v2184 = vunpack.c.l.b16 %v2093
        %v2185 = vunpack.c.h.b16 %v2093
        %v2186 = vunpack.c.l.b16 %v2094
        %v2187 = vunpack.c.h.b16 %v2094
        %v2188 = vunpack.c.l.b16 %v2095
        %v2189 = vunpack.c.h.b16 %v2095
        %v2190 = vunpack.c.l.b16 %v2096
        %v2191 = vunpack.c.h.b16 %v2096
        %v2192 = vunpack.c.l.b16 %v2097
        %v2193 = vunpack.c.h.b16 %v2097
        %v2194 = vunpack.c.l.b16 %v2098
        %v2195 = vunpack.c.h.b16 %v2098
        %v2196 = vunpack.c.l.b16 %v2099
        %v2197 = vunpack.c.h.b16 %v2099
        %v2198 = vunpack.c.l.b16 %v2100
        %v2199 = vunpack.c.h.b16 %v2100
        %v2200 = vunpack.c.l.b16 %v2101
        %v2201 = vunpack.c.h.b16 %v2101
        %v2202 = vunpack.c.l.b16 %v2102
        %v2203 = vunpack.c.h.b16 %v2102
        %v2204 = vunpack.c.l.b16 %v2103
        %v2205 = vunpack.c.h.b16 %v2103
        %v2206 = vunpack.c.l.b16 %v2104
        %v2207 = vunpack.c.h.b16 %v2104
        %v2208 = vunpack.c.l.b16 %v2105
        %v2209 = vunpack.c.h.b16 %v2105
        %v2210 = vunpack.c.l.b16 %v2106
        %v2211 = vunpack.c.h.b16 %v2106
        %v2212 = vunpack.c.l.b16 %v2107
        %v2213 = vunpack.c.h.b16 %v2107
        %v2214 = vunpack.c.l.b16 %v2108
        %v2215 = vunpack.c.h.b16 %v2108
        %v2216 = vunpack.c.l.b16 %v2109
        %v2217 = vunpack.c.h.b16 %v2109
        %v2218 = vunpack.c.l.b16 %v2110
        %v2219 = vunpack.c.h.b16 %v2110
        %v2220 = vunpack.c.l.b16 %v2111
        %v2221 = vunpack.c.h.b16 %v2111
        %v2222 = vunpack.c.l.b16 %v2112
        %v2223 = vunpack.c.h.b16 %v2112
        %v2224 = vunpack.c.l.b16 %v2113
        %v2225 = vunpack.c.h.b16 %v2113
        %v2226 = vunpack.c.l.b16 %v2114
        %v2227 = vunpack.c.h.b16 %v2114
        %v2228 = vunpack.c.l.b16 %v2115
        %v2229 = vunpack.c.h.b16 %v2115
        %v2230 = vunpack.c.l.b16 %v2116
        %v2231 = vunpack.c.h.b16 %v2116
        %v2232 = vunpack.c.l.b16 %v2117
        %v2233 = vunpack.c.h.b16 %v2117
        %v2234 = vunpack.c.l.b16 %v2118
        %v2235 = vunpack.c.h.b16 %v2118
        %v2236 = vunpack.c.l.b16 %v2119
        %v2237 = vunpack.c.h.b16 %v2119
        %v2238 = vunpack.c.l.b16 %v2120
        %v2239 = vunpack.c.h.b16 %v2120
        %v2240 = vunpack.c.l.b16 %v2121
        %v2241 = vunpack.c.h.b16 %v2121
        %v2242 = vpack.c.b16 %v2182, %v2178
        %v2243 = vpack.c.b16 %v2183, %v2179
        %v2244 = vpack.c.b16 %v2184, %v2180
        %v2245 = vpack.c.b16 %v2185, %v2181
        %v2246 = vpack.c.b16 %v2190, %v2186
        %v2247 = vpack.c.b16 %v2191, %v2187
        %v2248 = vpack.c.b16 %v2192, %v2188
        %v2249 = vpack.c.b16 %v2193, %v2189
        %v2250 = vpack.c.b16 %v2198, %v2194
        %v2251 = vpack.c.b16 %v2199, %v2195
        %v2252 = vpack.c.b16 %v2200, %v2196
        %v2253 = vpack.c.b16 %v2201, %v2197
        %v2254 = vpack.c.b16 %v2206, %v2202
        %v2255 = vpack.c.b16 %v2207, %v2203
        %v2256 = vpack.c.b16 %v2208, %v2204
        %v2257 = vpack.c.b16 %v2209, %v2205
        %v2258 = vpack.c.b16 %v2214, %v2210
        %v2259 = vpack.c.b16 %v2215, %v2211
        %v2260 = vpack.c.b16 %v2216, %v2212
        %v2261 = vpack.c.b16 %v2217, %v2213
        %v2262 = vpack.c.b16 %v2222, %v2218
        %v2263 = vpack.c.b16 %v2223, %v2219
        %v2264 = vpack.c.b16 %v2224, %v2220
        %v2265 = vpack.c.b16 %v2225, %v2221
        %v2266 = vpack.c.b16 %v2230, %v2226
        %v2267 = vpack.c.b16 %v2231, %v2227
        %v2268 = vpack.c.b16 %v2232, %v2228
        %v2269 = vpack.c.b16 %v2233, %v2229
        %v2270 = vpack.c.b16 %v2238, %v2234
        %v2271 = vpack.c.b16 %v2239, %v2235
        %v2272 = vpack.c.b16 %v2240, %v2236
        %v2273 = vpack.c.b16 %v2241, %v2237
        %2306 = vmatprep.subr.bf16.mxu0 %v2243
        %2307 = vmatpush1.bf16.msra.mxu0 %v2242
        %2308 = vmatprep.subr.bf16.mxu0 %v2247
        %2309 = vmatpush1.bf16.msra.mxu0 %v2246
        %2310 = vmatprep.subr.bf16.mxu0 %v2251
        %2311 = vmatpush1.bf16.msra.mxu0 %v2250
        %2312 = vmatprep.subr.bf16.mxu0 %v2255
        %2313 = vmatpush1.bf16.msra.mxu0 %v2254
        %2314 = vmatprep.subr.bf16.mxu0 %v2259
        %2315 = vmatpush1.bf16.msra.mxu0 %v2258
        %2316 = vmatprep.subr.bf16.mxu0 %v2263
        %2317 = vmatpush1.bf16.msra.mxu0 %v2262
        %2318 = vmatprep.subr.bf16.mxu0 %v2267
        %2319 = vmatpush1.bf16.msra.mxu0 %v2266
        %2320 = vmatprep.subr.bf16.mxu0 %v2271
        %2321 = vmatpush1.bf16.msra.mxu0 %v2270
        %2322 = vmatprep.subr.bf16.mxu0 0
        %2323 = vmatpush1.bf16.msra.mxu0 0
        %2324 = vmatprep.subr.bf16.mxu0 0
        %2325 = vmatpush1.bf16.msra.mxu0 0
        %2326 = vmatprep.subr.bf16.mxu0 0
        %2327 = vmatpush1.bf16.msra.mxu0 0
        %2328 = vmatprep.subr.bf16.mxu0 0
        %2329 = vmatpush1.bf16.msra.mxu0 0
        %2330 = vmatprep.subr.bf16.mxu0 0
        %2331 = vmatpush1.bf16.msra.mxu0 0
        %2332 = vmatprep.subr.bf16.mxu0 0
        %2333 = vmatpush1.bf16.msra.mxu0 0
        %2334 = vmatprep.subr.bf16.mxu0 0
        %2335 = vmatpush1.bf16.msra.mxu0 0
        %2336 = vmatprep.subr.bf16.mxu0 0
        %2337 = vmatpush1.bf16.msra.mxu0 0
        %2338 = vmatprep.mubr.bf16.mxu0 0
        %2339 = vmatmul.mubr.bf16.gmra.mrb[0].mxu0 %v2086
        %v2340 = vpop.f32.mrb[0].mxu0
        %v2341 = vadd.f32 %v2129, %v2340
        %v2342 = vpop.f32.mrb[0].mxu0
        %v2343 = vadd.f32 %v2133, %v2342
        %v2344 = vpop.f32.mrb[0].mxu0
        %v2345 = vadd.f32 %v2129, %v2344
        %v2346 = vpop.f32.mrb[0].mxu0
        %v2347 = vadd.f32 %v2133, %v2346
        %2348 = vdwg.mxu0
        %2349 = vmatprep.subr.bf16.mxu0 %v2245
        %2350 = vmatpush1.bf16.msra.mxu0 %v2244
        %2351 = vmatprep.subr.bf16.mxu0 %v2249
        %2352 = vmatpush1.bf16.msra.mxu0 %v2248
        %2353 = vmatprep.subr.bf16.mxu0 %v2253
        %2354 = vmatpush1.bf16.msra.mxu0 %v2252
        %2355 = vmatprep.subr.bf16.mxu0 %v2257
        %2356 = vmatpush1.bf16.msra.mxu0 %v2256
        %2357 = vmatprep.subr.bf16.mxu0 %v2261
        %2358 = vmatpush1.bf16.msra.mxu0 %v2260
        %2359 = vmatprep.subr.bf16.mxu0 %v2265
        %2360 = vmatpush1.bf16.msra.mxu0 %v2264
        %2361 = vmatprep.subr.bf16.mxu0 %v2269
        %2362 = vmatpush1.bf16.msra.mxu0 %v2268
        %2363 = vmatprep.subr.bf16.mxu0 %v2273
        %2364 = vmatpush1.bf16.msra.mxu0 %v2272
        %2365 = vmatprep.subr.bf16.mxu0 0
        %2366 = vmatpush1.bf16.msra.mxu0 0
        %2367 = vmatprep.subr.bf16.mxu0 0
        %2368 = vmatpush1.bf16.msra.mxu0 0
        %2369 = vmatprep.subr.bf16.mxu0 0
        %2370 = vmatpush1.bf16.msra.mxu0 0
        %2371 = vmatprep.subr.bf16.mxu0 0
        %2372 = vmatpush1.bf16.msra.mxu0 0
        %2373 = vmatprep.subr.bf16.mxu0 0
        %2374 = vmatpush1.bf16.msra.mxu0 0
        %2375 = vmatprep.subr.bf16.mxu0 0
        %2376 = vmatpush1.bf16.msra.mxu0 0
        %2377 = vmatprep.subr.bf16.mxu0 0
        %2378 = vmatpush1.bf16.msra.mxu0 0
        %2379 = vmatprep.subr.bf16.mxu0 0
        %2380 = vmatpush1.bf16.msra.mxu0 0
        %2381 = vmatprep.mubr.bf16.mxu0 0
        %2382 = vmatmul.mubr.bf16.gmra.mrb[0].mxu0 %v2086
        %v2383 = vpop.f32.mrb[0].mxu0
        %v2384 = vadd.f32 %v2137, %v2383
        %v2385 = vpop.f32.mrb[0].mxu0
        %v2386 = vadd.f32 %v2141, %v2385
        %v2387 = vpop.f32.mrb[0].mxu0
        %v2388 = vadd.f32 %v2137, %v2387
        %v2389 = vpop.f32.mrb[0].mxu0
        %v2390 = vadd.f32 %v2141, %v2389
        %2391 = vdwg.mxu0
        %v2392 = vmul.f32 %v2341, 1.702
        %v2393 = vmul.f32 %v2343, 1.702
        %v2394 = vmul.f32 %v2384, 1.702
        %v2395 = vmul.f32 %v2386, 1.702
        %v2396 = vmul.f32 %v2345, 1.702
        %v2397 = vmul.f32 %v2347, 1.702
        %v2398 = vmul.f32 %v2388, 1.702
        %v2399 = vmul.f32 %v2390, 1.702
        %v2400 = vxor.u32 %v2392, 2147483648
        %v2401 = vxor.u32 %v2393, 2147483648
        %v2402 = vxor.u32 %v2394, 2147483648
        %v2403 = vxor.u32 %v2395, 2147483648
        %v2404 = vxor.u32 %v2396, 2147483648
        %v2405 = vxor.u32 %v2397, 2147483648
        %v2406 = vxor.u32 %v2398, 2147483648
        %v2407 = vxor.u32 %v2399, 2147483648
        %v2408 = vmul.f32 %v2400, 1.442695
        %v2409 = vpow.pop %v2408
        %v2410 = vmul.f32 %v2401, 1.442695
        %v2411 = vpow.pop %v2410
        %v2412 = vmul.f32 %v2402, 1.442695
        %v2413 = vpow.pop %v2412
        %v2414 = vmul.f32 %v2403, 1.442695
        %v2415 = vpow.pop %v2414
        %v2416 = vmul.f32 %v2404, 1.442695
        %v2417 = vpow.pop %v2416
        %v2418 = vmul.f32 %v2405, 1.442695
        %v2419 = vpow.pop %v2418
        %v2420 = vmul.f32 %v2406, 1.442695
        %v2421 = vpow.pop %v2420
        %v2422 = vmul.f32 %v2407, 1.442695
        %v2423 = vpow.pop %v2422
        %v2424 = vadd.f32 %v2409, 1.0
        %v2425 = vadd.f32 %v2411, 1.0
        %v2426 = vadd.f32 %v2413, 1.0
        %v2427 = vadd.f32 %v2415, 1.0
        %v2428 = vadd.f32 %v2417, 1.0
        %v2429 = vadd.f32 %v2419, 1.0
        %v2430 = vadd.f32 %v2421, 1.0
        %v2431 = vadd.f32 %v2423, 1.0
        %v2432 = vrcp.pop %v2424
        %v2433 = vmul.f32 1.0, %v2432
        %v2434 = vrcp.pop %v2425
        %v2435 = vmul.f32 1.0, %v2434
        %v2436 = vrcp.pop %v2426
        %v2437 = vmul.f32 1.0, %v2436
        %v2438 = vrcp.pop %v2427
        %v2439 = vmul.f32 1.0, %v2438
        %v2440 = vrcp.pop %v2428
        %v2441 = vmul.f32 1.0, %v2440
        %v2442 = vrcp.pop %v2429
        %v2443 = vmul.f32 1.0, %v2442
        %v2444 = vrcp.pop %v2430
        %v2445 = vmul.f32 1.0, %v2444
        %v2446 = vrcp.pop %v2431
        %v2447 = vmul.f32 1.0, %v2446
        %v2448 = vmul.f32 %v2341, %v2433
        %v2449 = vmul.f32 %v2343, %v2435
        %v2450 = vmul.f32 %v2384, %v2437
        %v2451 = vmul.f32 %v2386, %v2439
        %v2452 = vmul.f32 %v2345, %v2441
        %v2453 = vmul.f32 %v2347, %v2443
        %v2454 = vmul.f32 %v2388, %v2445
        %v2455 = vmul.f32 %v2390, %v2447
        %v2456 = vpack.c.bf16 %v2452, %v2448
        %v2457 = vpack.c.bf16 %v2453, %v2449
        %v2458 = vpack.c.bf16 %v2454, %v2450
        %v2459 = vpack.c.bf16 %v2455, %v2451
        %s2460 = smul.addr %s2087, 4
        %s2461 = scalar_lea.vmem [#allocation14], %s2460
        %v2462 = vld [vmem:[%s2461] sm:$0xf]
        %v2463 = vld [vmem:[%s2461 + $0x4] sm:$0xf]
        %v2464 = vld [vmem:[%s2461 + $0x8] sm:$0xf]
        %v2465 = vld [vmem:[%s2461 + $0xc] sm:$0xf]
        %v2466 = vld [vmem:[%s2461 + $0x10] sm:$0xf]
        %v2467 = vld [vmem:[%s2461 + $0x14] sm:$0xf]
        %v2468 = vld [vmem:[%s2461 + $0x18] sm:$0xf]
        %v2469 = vld [vmem:[%s2461 + $0x1c] sm:$0xf]
        %v2470 = vld [vmem:[%s2461 + $0x20] sm:$0xf]
        %v2471 = vld [vmem:[%s2461 + $0x24] sm:$0xf]
        %v2472 = vld [vmem:[%s2461 + $0x28] sm:$0xf]
        %v2473 = vld [vmem:[%s2461 + $0x2c] sm:$0xf]
        %v2474 = vld [vmem:[%s2461 + $0x30] sm:$0xf]
        %v2475 = vld [vmem:[%s2461 + $0x34] sm:$0xf]
        %v2476 = vld [vmem:[%s2461 + $0x38] sm:$0xf]
        %v2477 = vld [vmem:[%s2461 + $0x3c] sm:$0xf]
        %v2478 = vld [vmem:[%s2461 + $0x40] sm:$0xf]
        %v2479 = vld [vmem:[%s2461 + $0x44] sm:$0xf]
        %v2480 = vld [vmem:[%s2461 + $0x48] sm:$0xf]
        %v2481 = vld [vmem:[%s2461 + $0x4c] sm:$0xf]
        %v2482 = vld [vmem:[%s2461 + $0x50] sm:$0xf]
        %v2483 = vld [vmem:[%s2461 + $0x54] sm:$0xf]
        %v2484 = vld [vmem:[%s2461 + $0x58] sm:$0xf]
        %v2485 = vld [vmem:[%s2461 + $0x5c] sm:$0xf]
        %v2486 = vld [vmem:[%s2461 + $0x60] sm:$0xf]
        %v2487 = vld [vmem:[%s2461 + $0x64] sm:$0xf]
        %v2488 = vld [vmem:[%s2461 + $0x68] sm:$0xf]
        %v2489 = vld [vmem:[%s2461 + $0x6c] sm:$0xf]
        %v2490 = vld [vmem:[%s2461 + $0x70] sm:$0xf]
        %v2491 = vld [vmem:[%s2461 + $0x74] sm:$0xf]
        %v2492 = vld [vmem:[%s2461 + $0x78] sm:$0xf]
        %v2493 = vld [vmem:[%s2461 + $0x7c] sm:$0xf]
        %v2494 = vld [vmem:[%s2461 + $0x80] sm:$0xf]
        %v2495 = vld [vmem:[%s2461 + $0x84] sm:$0xf]
        %v2496 = vld [vmem:[%s2461 + $0x88] sm:$0xf]
        %v2497 = vld [vmem:[%s2461 + $0x8c] sm:$0xf]
        %v2498 = vld [vmem:[%s2461 + $0x90] sm:$0xf]
        %v2499 = vld [vmem:[%s2461 + $0x94] sm:$0xf]
        %v2500 = vld [vmem:[%s2461 + $0x98] sm:$0xf]
        %v2501 = vld [vmem:[%s2461 + $0x9c] sm:$0xf]
        %v2502 = vld [vmem:[%s2461 + $0xa0] sm:$0xf]
        %v2503 = vld [vmem:[%s2461 + $0xa4] sm:$0xf]
        %v2504 = vld [vmem:[%s2461 + $0xa8] sm:$0xf]
        %v2505 = vld [vmem:[%s2461 + $0xac] sm:$0xf]
        %v2506 = vld [vmem:[%s2461 + $0xb0] sm:$0xf]
        %v2507 = vld [vmem:[%s2461 + $0xb4] sm:$0xf]
        %v2508 = vld [vmem:[%s2461 + $0xb8] sm:$0xf]
        %v2509 = vld [vmem:[%s2461 + $0xbc] sm:$0xf]
        %v2510 = vld [vmem:[%s2461 + $0xc0] sm:$0xf]
        %v2511 = vld [vmem:[%s2461 + $0xc4] sm:$0xf]
        %v2512 = vld [vmem:[%s2461 + $0xc8] sm:$0xf]
        %v2513 = vld [vmem:[%s2461 + $0xcc] sm:$0xf]
        %v2514 = vld [vmem:[%s2461 + $0xd0] sm:$0xf]
        %v2515 = vld [vmem:[%s2461 + $0xd4] sm:$0xf]
        %v2516 = vld [vmem:[%s2461 + $0xd8] sm:$0xf]
        %v2517 = vld [vmem:[%s2461 + $0xdc] sm:$0xf]
        %v2518 = vld [vmem:[%s2461 + $0xe0] sm:$0xf]
        %v2519 = vld [vmem:[%s2461 + $0xe4] sm:$0xf]
        %v2520 = vld [vmem:[%s2461 + $0xe8] sm:$0xf]
        %v2521 = vld [vmem:[%s2461 + $0xec] sm:$0xf]
        %v2522 = vld [vmem:[%s2461 + $0xf0] sm:$0xf]
        %v2523 = vld [vmem:[%s2461 + $0xf4] sm:$0xf]
        %v2524 = vld [vmem:[%s2461 + $0xf8] sm:$0xf]
        %v2525 = vld [vmem:[%s2461 + $0xfc] sm:$0xf]
        %s2526 = scalar_lea.vmem %s12, %s38
        %v2527 = vld [vmem:[%s2526] sm:$0x1]
        %v2529 = vlaneseq
        %v2530 = vshrl.u32 %v2529, 7
        %v2531 = vsub.s32 0, %v2530
        %v2532 = vrot.slane %v2527, %v2531
        %v2598 = vunpack.c.l.b16 %v2462
        %v2599 = vunpack.c.l.b16 %v2463
        %v2600 = vunpack.c.l.b16 %v2464
        %v2601 = vunpack.c.l.b16 %v2465
        %v2602 = vunpack.c.l.b16 %v2466
        %v2603 = vunpack.c.l.b16 %v2467
        %v2604 = vunpack.c.l.b16 %v2468
        %v2605 = vunpack.c.l.b16 %v2469
        %v2606 = vunpack.c.l.b16 %v2470
        %v2607 = vunpack.c.l.b16 %v2471
        %v2608 = vunpack.c.l.b16 %v2472
        %v2609 = vunpack.c.l.b16 %v2473
        %v2610 = vunpack.c.l.b16 %v2474
        %v2611 = vunpack.c.l.b16 %v2475
        %v2612 = vunpack.c.l.b16 %v2476
        %v2613 = vunpack.c.l.b16 %v2477
        %v2614 = vunpack.c.l.b16 %v2478
        %v2615 = vunpack.c.l.b16 %v2479
        %v2616 = vunpack.c.l.b16 %v2480
        %v2617 = vunpack.c.l.b16 %v2481
        %v2618 = vunpack.c.l.b16 %v2482
        %v2619 = vunpack.c.l.b16 %v2483
        %v2620 = vunpack.c.l.b16 %v2484
        %v2621 = vunpack.c.l.b16 %v2485
        %v2622 = vunpack.c.l.b16 %v2486
        %v2623 = vunpack.c.l.b16 %v2487
        %v2624 = vunpack.c.l.b16 %v2488
        %v2625 = vunpack.c.l.b16 %v2489
        %v2626 = vunpack.c.l.b16 %v2490
        %v2627 = vunpack.c.l.b16 %v2491
        %v2628 = vunpack.c.l.b16 %v2492
        %v2629 = vunpack.c.l.b16 %v2493
        %v2630 = vunpack.c.l.b16 %v2494
        %v2631 = vunpack.c.l.b16 %v2495
        %v2632 = vunpack.c.l.b16 %v2496
        %v2633 = vunpack.c.l.b16 %v2497
        %v2634 = vunpack.c.l.b16 %v2498
        %v2635 = vunpack.c.l.b16 %v2499
        %v2636 = vunpack.c.l.b16 %v2500
        %v2637 = vunpack.c.l.b16 %v2501
        %v2638 = vunpack.c.l.b16 %v2502
        %v2639 = vunpack.c.l.b16 %v2503
        %v2640 = vunpack.c.l.b16 %v2504
        %v2641 = vunpack.c.l.b16 %v2505
        %v2642 = vunpack.c.l.b16 %v2506
        %v2643 = vunpack.c.l.b16 %v2507
        %v2644 = vunpack.c.l.b16 %v2508
        %v2645 = vunpack.c.l.b16 %v2509
        %v2646 = vunpack.c.l.b16 %v2510
        %v2647 = vunpack.c.l.b16 %v2511
        %v2648 = vunpack.c.l.b16 %v2512
        %v2649 = vunpack.c.l.b16 %v2513
        %v2650 = vunpack.c.l.b16 %v2514
        %v2651 = vunpack.c.l.b16 %v2515
        %v2652 = vunpack.c.l.b16 %v2516
        %v2653 = vunpack.c.l.b16 %v2517
        %v2654 = vunpack.c.l.b16 %v2518
        %v2655 = vunpack.c.l.b16 %v2519
        %v2656 = vunpack.c.l.b16 %v2520
        %v2657 = vunpack.c.l.b16 %v2521
        %v2658 = vunpack.c.l.b16 %v2522
        %v2659 = vunpack.c.l.b16 %v2523
        %v2660 = vunpack.c.l.b16 %v2524
        %v2661 = vunpack.c.l.b16 %v2525
        %v2662 = vpack.c.b16 %v2599, %v2598
        %v2663 = vpack.c.b16 %v2601, %v2600
        %v2664 = vpack.c.b16 %v2603, %v2602
        %v2665 = vpack.c.b16 %v2605, %v2604
        %v2666 = vpack.c.b16 %v2607, %v2606
        %v2667 = vpack.c.b16 %v2609, %v2608
        %v2668 = vpack.c.b16 %v2611, %v2610
        %v2669 = vpack.c.b16 %v2613, %v2612
        %v2670 = vpack.c.b16 %v2615, %v2614
        %v2671 = vpack.c.b16 %v2617, %v2616
        %v2672 = vpack.c.b16 %v2619, %v2618
        %v2673 = vpack.c.b16 %v2621, %v2620
        %v2674 = vpack.c.b16 %v2623, %v2622
        %v2675 = vpack.c.b16 %v2625, %v2624
        %v2676 = vpack.c.b16 %v2627, %v2626
        %v2677 = vpack.c.b16 %v2629, %v2628
        %v2678 = vpack.c.b16 %v2631, %v2630
        %v2679 = vpack.c.b16 %v2633, %v2632
        %v2680 = vpack.c.b16 %v2635, %v2634
        %v2681 = vpack.c.b16 %v2637, %v2636
        %v2682 = vpack.c.b16 %v2639, %v2638
        %v2683 = vpack.c.b16 %v2641, %v2640
        %v2684 = vpack.c.b16 %v2643, %v2642
        %v2685 = vpack.c.b16 %v2645, %v2644
        %v2686 = vpack.c.b16 %v2647, %v2646
        %v2687 = vpack.c.b16 %v2649, %v2648
        %v2688 = vpack.c.b16 %v2651, %v2650
        %v2689 = vpack.c.b16 %v2653, %v2652
        %v2690 = vpack.c.b16 %v2655, %v2654
        %v2691 = vpack.c.b16 %v2657, %v2656
        %v2692 = vpack.c.b16 %v2659, %v2658
        %v2693 = vpack.c.b16 %v2661, %v2660
        %2726 = vmatprep.subr.bf16.mxu0 0
        %2727 = vmatpush1.bf16.msra.mxu0 %v2662
        %2728 = vmatprep.subr.bf16.mxu0 0
        %2729 = vmatpush1.bf16.msra.mxu0 %v2663
        %2730 = vmatprep.subr.bf16.mxu0 0
        %2731 = vmatpush1.bf16.msra.mxu0 %v2664
        %2732 = vmatprep.subr.bf16.mxu0 0
        %2733 = vmatpush1.bf16.msra.mxu0 %v2665
        %2734 = vmatprep.subr.bf16.mxu0 0
        %2735 = vmatpush1.bf16.msra.mxu0 %v2666
        %2736 = vmatprep.subr.bf16.mxu0 0
        %2737 = vmatpush1.bf16.msra.mxu0 %v2667
        %2738 = vmatprep.subr.bf16.mxu0 0
        %2739 = vmatpush1.bf16.msra.mxu0 %v2668
        %2740 = vmatprep.subr.bf16.mxu0 0
        %2741 = vmatpush1.bf16.msra.mxu0 %v2669
        %2742 = vmatprep.subr.bf16.mxu0 0
        %2743 = vmatpush1.bf16.msra.mxu0 %v2670
        %2744 = vmatprep.subr.bf16.mxu0 0
        %2745 = vmatpush1.bf16.msra.mxu0 %v2671
        %2746 = vmatprep.subr.bf16.mxu0 0
        %2747 = vmatpush1.bf16.msra.mxu0 %v2672
        %2748 = vmatprep.subr.bf16.mxu0 0
        %2749 = vmatpush1.bf16.msra.mxu0 %v2673
        %2750 = vmatprep.subr.bf16.mxu0 0
        %2751 = vmatpush1.bf16.msra.mxu0 %v2674
        %2752 = vmatprep.subr.bf16.mxu0 0
        %2753 = vmatpush1.bf16.msra.mxu0 %v2675
        %2754 = vmatprep.subr.bf16.mxu0 0
        %2755 = vmatpush1.bf16.msra.mxu0 %v2676
        %2756 = vmatprep.subr.bf16.mxu0 0
        %2757 = vmatpush1.bf16.msra.mxu0 %v2677
        %2758 = vmatprep.mubr.bf16.mxu0 %v2457
        %2759 = vmatmul.mubr.bf16.gmra.mrb[0].mxu0 %v2456
        %v2760 = vpop.f32.mrb[0].mxu0
        %v2761 = vadd.f32 %v2532, %v2760
        %v2762 = vpop.f32.mrb[0].mxu0
        %v2763 = vpop.f32.mrb[0].mxu0
        %v2764 = vadd.f32 %v2532, %v2763
        %v2765 = vpop.f32.mrb[0].mxu0
        %2766 = vdwg.mxu0
        %2767 = vmatprep.subr.bf16.mxu0 0
        %2768 = vmatpush1.bf16.msra.mxu0 %v2678
        %2769 = vmatprep.subr.bf16.mxu0 0
        %2770 = vmatpush1.bf16.msra.mxu0 %v2679
        %2771 = vmatprep.subr.bf16.mxu0 0
        %2772 = vmatpush1.bf16.msra.mxu0 %v2680
        %2773 = vmatprep.subr.bf16.mxu0 0
        %2774 = vmatpush1.bf16.msra.mxu0 %v2681
        %2775 = vmatprep.subr.bf16.mxu0 0
        %2776 = vmatpush1.bf16.msra.mxu0 %v2682
        %2777 = vmatprep.subr.bf16.mxu0 0
        %2778 = vmatpush1.bf16.msra.mxu0 %v2683
        %2779 = vmatprep.subr.bf16.mxu0 0
        %2780 = vmatpush1.bf16.msra.mxu0 %v2684
        %2781 = vmatprep.subr.bf16.mxu0 0
        %2782 = vmatpush1.bf16.msra.mxu0 %v2685
        %2783 = vmatprep.subr.bf16.mxu0 0
        %2784 = vmatpush1.bf16.msra.mxu0 %v2686
        %2785 = vmatprep.subr.bf16.mxu0 0
        %2786 = vmatpush1.bf16.msra.mxu0 %v2687
        %2787 = vmatprep.subr.bf16.mxu0 0
        %2788 = vmatpush1.bf16.msra.mxu0 %v2688
        %2789 = vmatprep.subr.bf16.mxu0 0
        %2790 = vmatpush1.bf16.msra.mxu0 %v2689
        %2791 = vmatprep.subr.bf16.mxu0 0
        %2792 = vmatpush1.bf16.msra.mxu0 %v2690
        %2793 = vmatprep.subr.bf16.mxu0 0
        %2794 = vmatpush1.bf16.msra.mxu0 %v2691
        %2795 = vmatprep.subr.bf16.mxu0 0
        %2796 = vmatpush1.bf16.msra.mxu0 %v2692
        %2797 = vmatprep.subr.bf16.mxu0 0
        %2798 = vmatpush1.bf16.msra.mxu0 %v2693
        %2799 = vmatprep.mubr.bf16.mxu0 %v2459
        %2800 = vmatmul.mubr.bf16.gmra.mrb[0].mxu0 %v2458
        %v2801 = vpop.f32.mrb[0].mxu0
        %v2802 = vadd.f32 %v2761, %v2801
        %v2803 = vpop.f32.mrb[0].mxu0
        %v2804 = vpop.f32.mrb[0].mxu0
        %v2805 = vadd.f32 %v2764, %v2804
        %v2806 = vpop.f32.mrb[0].mxu0
        %2807 = vdwg.mxu0
        %v2808 = vadd.f32 %v2042, %v2802
        %v2809 = vadd.f32 %v2043, %v2805
        %2810 = vst [vmem:[#allocation2] sm:$0xff] %v2808
        %2811 = vst [vmem:[#allocation2 + $0x8] sm:$0xff] %v2809
        %p2812 = scmp.eq.s32.totalorder %s38, 1
        // Predicated region
        $region105: #{tpu_custom_call.1} parent=71 // pred_check
          %p2813 = pneg %p2812
        $region106: #{tpu_custom_call.1} parent=71 // pred_check_branch
          %2815 = sbr.rel (%p2813) target = $region108
        $region107: #{tpu_custom_call.1} parent=71 // pred_region
          %2816 = vst [vmem:[%s557] sm:$0xff] %v2808
          %2817 = vst [vmem:[%s557 + $0x8] sm:$0xff] %v2809
        $region108: #{tpu_custom_call.1} parent=71 // pred_fallthru
          _
        %s2818 = sand.u32 %s331, 1
        %s2819 = scalar_lea.sflag [#allocation5], %s2818
        %s2820 = sand.u32 %s331, 1
        %s2821 = smul.addr %s2820, 16
        %s2822 = scalar_lea.vmem [#allocation15], %s2821
        // Predicated region
        $region109: #{tpu_custom_call.1} parent=71 // pred_check
          %p2823 = pneg %p341
        $region110: #{tpu_custom_call.1} parent=71 // pred_check_branch
          %2825 = sbr.rel (%p2823) target = $region112
        $region111: #{tpu_custom_call.1} parent=71 // pred_region
          %s2826 = smul.u32 2, %s37
          %s2828 = ssub.s32 256, 256
          %2829 = vsyncadd %s2819, %s2828
          %s2830 = smul.addr %s2826, 128
          %s2831 = scalar_lea.hbm %s13, %s2830
          %s2832 = sshll.u32 %s2822, 4
          %s2833 = int_to_ptr.vmem [resolvable:$true] %s2832
          %2838 = dma.vmem_to_hbm [thread:$0]  %s2833, 256, %s2831, %s2819, 128, 128, 8
        $region112: #{tpu_custom_call.1} parent=71 // pred_fallthru
          _
      $region72: #{tpu_custom_call.1} parent=5 // pred_fallthru
        _
      %p2839 = scmp.le.s32.totalorder 2, %s28
      // Predicated region
      $region113: #{tpu_custom_call.1} parent=5 // pred_check
        %p2840 = pneg %p2839
      $region114: #{tpu_custom_call.1} parent=5 // pred_check_branch
        %2842 = sbr.rel (%p2840) target = $region116
      $region115: #{tpu_custom_call.1} parent=5 // pred_region
        %s2843 = ssub.s32 %s28, 2
        // Predicated region
        $region117: #{tpu_custom_call.1} parent=115 // pred_check
          %p2844 = pneg %p347
        $region118: #{tpu_custom_call.1} parent=115 // pred_check_branch
          %2846 = sbr.rel (%p2844) target = $region120
        $region119: #{tpu_custom_call.1} parent=115 // pred_region
          %s2847 = sand.u32 %s332, 1
          %s2848 = scalar_lea.sflag [#allocation5], %s2847
          %s2849 = sand.u32 %s332, 1
          %s2850 = smul.addr %s2849, 16
          %s2851 = scalar_lea.vmem [#allocation15], %s2850
          %2852 = dma.done %s2848, 256
        $region120: #{tpu_custom_call.1} parent=115 // pred_fallthru
          _
      $region116: #{tpu_custom_call.1} parent=5 // pred_fallthru
        _
    $region6: #{tpu_custom_call.1} parent=1 // loop_footer
      %s32 = sadd.s32 1, %s28
    $region7: #{tpu_custom_call.1} parent=1 // loop_footer_branch
      %27 = sbr.rel target = $region3
    $region8: #{tpu_custom_call.1} parent=1 // loop_exit
      _
    %2853 = vsyncpa [#allocation4], 1
    %s2854 = scalar_lea.sflag [#allocation4], 1
    %2855 = vsyncpa %s2854, 1
    %2856 = vsyncpa [#allocation7], 1
    %2857 = vsyncpa [#allocation10], 1
    %2858 = vsyncpa [#allocation13], 1
    %2859 = vsyncpa [#allocation5], 1
    %s2860 = scalar_lea.sflag [#allocation5], 1
    %2861 = vsyncpa %s2860, 1

</llo_original>
